<compile_context>
chip_gen: v6e
topology: v6e:2x2x1
jax: 0.10.0
libtpu: 0.0.40
codegen_flags: <defaults>
</compile_context>

<pallas_src>
import functools

import jax
import jax.numpy as jnp
from jax.experimental import pallas as pl
from jax.experimental.pallas import tpu as pltpu

LANE = 128      # per-gate padded width
SUBLANE = 8     # batch padding target


def lstm_ae_kernel(x_ref, wih_e_ref, whh_e_ref, b_e_ref,
                   wih_d_ref, whh_d_ref, b_d_ref, out_ref,
                   *, seq_len, batch, feat):
    """Full forward pass of the LSTM autoencoder.

    x_ref      : (T*Bp, D)   input, time-major, batch padded to Bp=8
    wih_e_ref  : (D,  4G)    encoder input->hidden, gates [i,f,o,g], each padded to G=128
    whh_e_ref  : (G,  4G)    encoder hidden->hidden (rows padded H->G)
    b_e_ref    : (1,  4G)    encoder combined bias (b_ih + b_hh)
    wih_d_ref  : (G,  4G)    decoder input->hidden (rows padded H->G)
    whh_d_ref  : (G,  4G)    decoder hidden->hidden (rows padded D->G)
    b_d_ref    : (1,  4G)    decoder combined bias
    out_ref    : (B, T*D)    decoded sequence, batch-first (reshaped outside)
    """
    G = whh_e_ref.shape[1] // 4          # padded per-gate width (128)
    Bp = x_ref.shape[0] // seq_len       # padded batch (8)

    # ---- hoisted (loop-invariant) weight / bias loads ----------------------
    wih_e = wih_e_ref[...]
    whh_e = whh_e_ref[...]
    b_e = b_e_ref[...]
    wih_d = wih_d_ref[...]
    whh_d = whh_d_ref[...]
    b_d = b_d_ref[...]

    def cell(pre, c):
        """Fused-gate LSTM cell.  pre: (Bp, 4G) packed [i, f, o, g]; c: (Bp, G)."""
        sig = jax.nn.sigmoid(pre[:, :3 * G])   # one pass over i, f, o (contiguous)
        g = jnp.tanh(pre[:, 3 * G:])           # one pass over g
        i = sig[:, 0 * G:1 * G]                # 128-aligned slices: free views
        f = sig[:, 1 * G:2 * G]
        o = sig[:, 2 * G:3 * G]
        c_new = f * c + i * g
        h_new = o * jnp.tanh(c_new)
        return h_new, c_new

    # ---- encoder input projection for ALL timesteps in one matmul ----------
    # (T*Bp, D) @ (D, 4G) + (1, 4G) -> (T*Bp, 4G); only h @ Whh stays serial.
    x_proj = jnp.dot(x_ref[...], wih_e,
                     preferred_element_type=jnp.float32) + b_e

    # ---- encoder recurrence (fully unrolled, state in values) --------------
    h = jnp.zeros((Bp, G), jnp.float32)
    c = jnp.zeros((Bp, G), jnp.float32)
    for t in range(seq_len):
        pre = x_proj[t * Bp:(t + 1) * Bp, :] + jnp.dot(       # 8-row aligned slice
            h, whh_e, preferred_element_type=jnp.float32)
        h, c = cell(pre, c)
    h_enc = h                                                  # (Bp, G), real in [:, :H]

    # ---- decoder: input (h_enc repeated T times) is loop-invariant ---------
    dec_in = jnp.dot(h_enc, wih_d,
                     preferred_element_type=jnp.float32) + b_d  # (Bp, 4G)

    h_d = jnp.zeros((Bp, G), jnp.float32)
    c_d = jnp.zeros((Bp, G), jnp.float32)
    for t in range(seq_len):
        pre = dec_in + jnp.dot(h_d, whh_d,
                               preferred_element_type=jnp.float32)
        h_d, c_d = cell(pre, c_d)
        # Batch-first write; static lane window.  TODO(synk): at larger D this
        # should become a single lane-dense store after the loop.
        out_ref[:, t * feat:(t + 1) * feat] = h_d[:batch, :feat]


# ---------------------------------------------------------------------------
# One-time weight packing: reorder PyTorch gate order [i,f,g,o] -> [i,f,o,g]
# and pad each gate to LANE columns (+ pad hidden-input rows to LANE).
# Done ONCE outside the jitted forward so it never sits on the hot path.
# ---------------------------------------------------------------------------
def _reorder_pad_gates(a, n, gate_pad=LANE):
    """a: (K, 4n), fused [i,f,g,o] along last axis -> (K, 4*gate_pad), [i,f,o,g]."""
    i, f, g, o = (a[:, k * n:(k + 1) * n] for k in range(4))
    pad = lambda p: jnp.pad(p, ((0, 0), (0, gate_pad - n)))
    return jnp.concatenate([pad(i), pad(f), pad(o), pad(g)], axis=1)


def _pad_rows(a, rows):
    return jnp.pad(a, ((0, rows - a.shape[0]), (0, 0)))


def prepare_params(wih_e, whh_e, b_e, wih_d, whh_d, b_d, gate_pad=LANE):
    """Pack [i,f,g,o]-fused weights into the kernel's padded [i,f,o,g] layout."""
    D = wih_e.shape[0]          # input size (= decoder hidden size)
    H = whh_e.shape[0]          # encoder hidden size (= decoder input size)
    wih_e_p = _reorder_pad_gates(wih_e, H, gate_pad)                     # (D, 4G)
    whh_e_p = _pad_rows(_reorder_pad_gates(whh_e, H, gate_pad), gate_pad)  # (G, 4G)
    b_e_p = _reorder_pad_gates(b_e, H, gate_pad)                         # (1, 4G)
    wih_d_p = _pad_rows(_reorder_pad_gates(wih_d, D, gate_pad), gate_pad)  # (G, 4G)
    whh_d_p = _pad_rows(_reorder_pad_gates(whh_d, D, gate_pad), gate_pad)  # (G, 4G)
    b_d_p = _reorder_pad_gates(b_d, D, gate_pad)                         # (1, 4G)
    return wih_e_p, whh_e_p, b_e_p, wih_d_p, whh_d_p, b_d_p


@jax.jit
def lstm_autoencoder(x, wih_e_p, whh_e_p, b_e_p, wih_d_p, whh_d_p, b_d_p):
    """x: (B, T, D) float32 -> decoded (B, T, D) float32 (weights pre-packed)."""
    B, T, D = x.shape
    Bp = ((B + SUBLANE - 1) // SUBLANE) * SUBLANE
    # Time-major + batch pad + flatten so the kernel slices aligned 8-row blocks
    # per timestep and does the whole encoder input projection in one matmul.
    x_tm = jnp.transpose(x, (1, 0, 2))                     # (T, B, D)
    if Bp != B:
        x_tm = jnp.pad(x_tm, ((0, 0), (0, Bp - B), (0, 0)))
    x_flat = x_tm.reshape(T * Bp, D)                       # (T*Bp, D)

    kernel = functools.partial(lstm_ae_kernel, seq_len=T, batch=B, feat=D)
    vmem = pl.BlockSpec(memory_space=pltpu.MemorySpace.VMEM)
    # No grid: the whole problem (<1 MiB) is VMEM-resident on every TPU generation.
    out_flat = pl.pallas_call(
        kernel,
        out_shape=jax.ShapeDtypeStruct((B, T * D), jnp.float32),
        in_specs=[vmem] * 7,
        out_specs=vmem,
        compiler_params=pltpu.CompilerParams(
            allow_input_fusion=[True] * 7),
    )(x_flat, wih_e_p, whh_e_p, b_e_p, wih_d_p, whh_d_p, b_d_p)
    # Row-major (B, T*D) -> (B, T, D) is a bitcast reshape: no copy kernel.
    return out_flat.reshape(B, T, D)


# ---------------------------------------------------------------------------
# Init + pure-JAX reference (PyTorch-style fused [i,f,g,o] layout) for checking.
# ---------------------------------------------------------------------------
def init_lstm_params(key, in_dim, hid_dim):
    """Mimics nn.LSTM init: U(-1/sqrt(H), 1/sqrt(H)); fused-gate [i,f,g,o] layout."""
    k1, k2, k3, k4 = jax.random.split(key, 4)
    bound = float(hid_dim) ** -0.5
    wih = jax.random.uniform(k1, (in_dim, 4 * hid_dim), jnp.float32, -bound, bound)
    whh = jax.random.uniform(k2, (hid_dim, 4 * hid_dim), jnp.float32, -bound, bound)
    b_ih = jax.random.uniform(k3, (1, 4 * hid_dim), jnp.float32, -bound, bound)
    b_hh = jax.random.uniform(k4, (1, 4 * hid_dim), jnp.float32, -bound, bound)
    return wih, whh, b_ih + b_hh


def _lstm_ref(x, wih, whh, b):
    B, T, _ = x.shape
    H = whh.shape[0]
    h = jnp.zeros((B, H), jnp.float32)
    c = jnp.zeros((B, H), jnp.float32)
    outs = []
    for t in range(T):
        pre = x[:, t, :] @ wih + h @ whh + b
        i = jax.nn.sigmoid(pre[:, 0 * H:1 * H])
        f = jax.nn.sigmoid(pre[:, 1 * H:2 * H])
        g = jnp.tanh(pre[:, 2 * H:3 * H])
        o = jax.nn.sigmoid(pre[:, 3 * H:4 * H])
        c = f * c + i * g
        h = o * jnp.tanh(c)
        outs.append(h)
    return jnp.stack(outs, axis=1), h


def _autoencoder_ref(x, wih_e, whh_e, b_e, wih_d, whh_d, b_d):
    _, h_n = _lstm_ref(x, wih_e, whh_e, b_e)
    B, T, _ = x.shape
    rep = jnp.broadcast_to(h_n[:, None, :], (B, T, h_n.shape[-1]))
    decoded, _ = _lstm_ref(rep, wih_d, whh_d, b_d)
    return decoded


if __name__ == "__main__":
    # Shapes consistent with LSTMAutoencoder(input_size=6, hidden_size=64).
    B, T, D, H = 2, 8, 6, 64

    key = jax.random.PRNGKey(0)
    kx, ke, kd = jax.random.split(key, 3)

    x = jax.random.normal(kx, (B, T, D), jnp.float32)
    wih_e, whh_e, b_e = init_lstm_params(ke, D, H)     # encoder: D -> H
    wih_d, whh_d, b_d = init_lstm_params(kd, H, D)     # decoder: H -> D (no Linear, as in the spec)

    # One-time packing (gate permutation + 128-lane padding) off the hot path.
    packed = prepare_params(wih_e, whh_e, b_e, wih_d, whh_d, b_d)

    decoded = lstm_autoencoder(x, *packed)
    decoded = jax.block_until_ready(decoded)

    ref = _autoencoder_ref(x, wih_e, whh_e, b_e, wih_d, whh_d, b_d)
    assert decoded.shape == (B, T, D)
    assert jnp.allclose(decoded, ref, rtol=1e-4, atol=1e-4), "mismatch vs reference"

    print("KERNEL_OK")
</pallas_src>

<mosaic_0001>
module attributes {stable_mosaic.version = 11 : i64} {
  func.func @lstm_ae_kernel(%arg0: memref<64x6xf32, #tpu.memory_space<vmem>>, %arg1: memref<6x512xf32, #tpu.memory_space<vmem>>, %arg2: memref<128x512xf32, #tpu.memory_space<vmem>>, %arg3: memref<1x512xf32, #tpu.memory_space<vmem>>, %arg4: memref<128x512xf32, #tpu.memory_space<vmem>>, %arg5: memref<128x512xf32, #tpu.memory_space<vmem>>, %arg6: memref<1x512xf32, #tpu.memory_space<vmem>>, %arg7: memref<2x48xf32, #tpu.memory_space<vmem>>) attributes {dimension_semantics = [], scalar_prefetch = 0 : i64, scratch_operands = 0 : i64, tpu.core_type = #tpu.core_type<tc>} {
    %c0 = arith.constant 0 : index
    %c0_0 = arith.constant 0 : index
    %0 = vector.load %arg1[%c0, %c0_0] : memref<6x512xf32, #tpu.memory_space<vmem>>, vector<6x512xf32>
    %c0_1 = arith.constant 0 : index
    %c0_2 = arith.constant 0 : index
    %1 = vector.load %arg2[%c0_1, %c0_2] : memref<128x512xf32, #tpu.memory_space<vmem>>, vector<128x512xf32>
    %c0_3 = arith.constant 0 : index
    %c0_4 = arith.constant 0 : index
    %2 = vector.load %arg3[%c0_3, %c0_4] : memref<1x512xf32, #tpu.memory_space<vmem>>, vector<1x512xf32>
    %c0_5 = arith.constant 0 : index
    %c0_6 = arith.constant 0 : index
    %3 = vector.load %arg4[%c0_5, %c0_6] : memref<128x512xf32, #tpu.memory_space<vmem>>, vector<128x512xf32>
    %c0_7 = arith.constant 0 : index
    %c0_8 = arith.constant 0 : index
    %4 = vector.load %arg5[%c0_7, %c0_8] : memref<128x512xf32, #tpu.memory_space<vmem>>, vector<128x512xf32>
    %c0_9 = arith.constant 0 : index
    %c0_10 = arith.constant 0 : index
    %5 = vector.load %arg6[%c0_9, %c0_10] : memref<1x512xf32, #tpu.memory_space<vmem>>, vector<1x512xf32>
    %c0_11 = arith.constant 0 : index
    %c0_12 = arith.constant 0 : index
    %6 = vector.load %arg0[%c0_11, %c0_12] : memref<64x6xf32, #tpu.memory_space<vmem>>, vector<64x6xf32>
    %cst = arith.constant dense<0.000000e+00> : vector<64x512xf32>
    %7 = tpu.matmul %6, %0, %cst {dimension_numbers = #tpu.dot_dimension_numbers<[1], [0], [0], [1], [0, 0, 1, 1], [], []>} : vector<64x6xf32>, vector<6x512xf32>, vector<64x512xf32> -> vector<64x512xf32>
    %8 = vector.broadcast %2 : vector<1x512xf32> to vector<64x512xf32>
    %9 = arith.addf %7, %8 : vector<64x512xf32>
    %cst_13 = arith.constant 0.000000e+00 : f32
    %10 = vector.broadcast %cst_13 : f32 to vector<8x128xf32>
    %cst_14 = arith.constant 0.000000e+00 : f32
    %11 = vector.broadcast %cst_14 : f32 to vector<8x128xf32>
    %12 = vector.extract_strided_slice %9 {offsets = [0, 0], sizes = [8, 512], strides = [1, 1]} : vector<64x512xf32> to vector<8x512xf32>
    %cst_15 = arith.constant dense<0.000000e+00> : vector<8x512xf32>
    %13 = tpu.matmul %10, %1, %cst_15 {dimension_numbers = #tpu.dot_dimension_numbers<[1], [0], [0], [1], [0, 0, 1, 1], [], []>} : vector<8x128xf32>, vector<128x512xf32>, vector<8x512xf32> -> vector<8x512xf32>
    %14 = arith.addf %12, %13 : vector<8x512xf32>
    %15 = vector.extract_strided_slice %14 {offsets = [0, 0], sizes = [8, 384], strides = [1, 1]} : vector<8x512xf32> to vector<8x384xf32>
    %16 = arith.negf %15 : vector<8x384xf32>
    %17 = math.exp %16 : vector<8x384xf32>
    %cst_16 = arith.constant 1.000000e+00 : f32
    %18 = vector.broadcast %cst_16 : f32 to vector<8x384xf32>
    %19 = arith.addf %18, %17 : vector<8x384xf32>
    %20 = arith.divf %18, %19 : vector<8x384xf32>
    %21 = vector.extract_strided_slice %14 {offsets = [0, 384], sizes = [8, 128], strides = [1, 1]} : vector<8x512xf32> to vector<8x128xf32>
    %22 = math.tanh %21 : vector<8x128xf32>
    %23 = vector.extract_strided_slice %20 {offsets = [0, 0], sizes = [8, 128], strides = [1, 1]} : vector<8x384xf32> to vector<8x128xf32>
    %24 = vector.extract_strided_slice %20 {offsets = [0, 128], sizes = [8, 128], strides = [1, 1]} : vector<8x384xf32> to vector<8x128xf32>
    %25 = vector.extract_strided_slice %20 {offsets = [0, 256], sizes = [8, 128], strides = [1, 1]} : vector<8x384xf32> to vector<8x128xf32>
    %26 = arith.mulf %24, %11 : vector<8x128xf32>
    %27 = arith.mulf %23, %22 : vector<8x128xf32>
    %28 = arith.addf %26, %27 : vector<8x128xf32>
    %29 = math.tanh %28 : vector<8x128xf32>
    %30 = arith.mulf %25, %29 : vector<8x128xf32>
    %31 = vector.extract_strided_slice %9 {offsets = [8, 0], sizes = [8, 512], strides = [1, 1]} : vector<64x512xf32> to vector<8x512xf32>
    %cst_17 = arith.constant dense<0.000000e+00> : vector<8x512xf32>
    %32 = tpu.matmul %30, %1, %cst_17 {dimension_numbers = #tpu.dot_dimension_numbers<[1], [0], [0], [1], [0, 0, 1, 1], [], []>} : vector<8x128xf32>, vector<128x512xf32>, vector<8x512xf32> -> vector<8x512xf32>
    %33 = arith.addf %31, %32 : vector<8x512xf32>
    %34 = vector.extract_strided_slice %33 {offsets = [0, 0], sizes = [8, 384], strides = [1, 1]} : vector<8x512xf32> to vector<8x384xf32>
    %35 = arith.negf %34 : vector<8x384xf32>
    %36 = math.exp %35 : vector<8x384xf32>
    %cst_18 = arith.constant 1.000000e+00 : f32
    %37 = vector.broadcast %cst_18 : f32 to vector<8x384xf32>
    %38 = arith.addf %37, %36 : vector<8x384xf32>
    %39 = arith.divf %37, %38 : vector<8x384xf32>
    %40 = vector.extract_strided_slice %33 {offsets = [0, 384], sizes = [8, 128], strides = [1, 1]} : vector<8x512xf32> to vector<8x128xf32>
    %41 = math.tanh %40 : vector<8x128xf32>
    %42 = vector.extract_strided_slice %39 {offsets = [0, 0], sizes = [8, 128], strides = [1, 1]} : vector<8x384xf32> to vector<8x128xf32>
    %43 = vector.extract_strided_slice %39 {offsets = [0, 128], sizes = [8, 128], strides = [1, 1]} : vector<8x384xf32> to vector<8x128xf32>
    %44 = vector.extract_strided_slice %39 {offsets = [0, 256], sizes = [8, 128], strides = [1, 1]} : vector<8x384xf32> to vector<8x128xf32>
    %45 = arith.mulf %43, %28 : vector<8x128xf32>
    %46 = arith.mulf %42, %41 : vector<8x128xf32>
    %47 = arith.addf %45, %46 : vector<8x128xf32>
    %48 = math.tanh %47 : vector<8x128xf32>
    %49 = arith.mulf %44, %48 : vector<8x128xf32>
    %50 = vector.extract_strided_slice %9 {offsets = [16, 0], sizes = [8, 512], strides = [1, 1]} : vector<64x512xf32> to vector<8x512xf32>
    %cst_19 = arith.constant dense<0.000000e+00> : vector<8x512xf32>
    %51 = tpu.matmul %49, %1, %cst_19 {dimension_numbers = #tpu.dot_dimension_numbers<[1], [0], [0], [1], [0, 0, 1, 1], [], []>} : vector<8x128xf32>, vector<128x512xf32>, vector<8x512xf32> -> vector<8x512xf32>
    %52 = arith.addf %50, %51 : vector<8x512xf32>
    %53 = vector.extract_strided_slice %52 {offsets = [0, 0], sizes = [8, 384], strides = [1, 1]} : vector<8x512xf32> to vector<8x384xf32>
    %54 = arith.negf %53 : vector<8x384xf32>
    %55 = math.exp %54 : vector<8x384xf32>
    %cst_20 = arith.constant 1.000000e+00 : f32
    %56 = vector.broadcast %cst_20 : f32 to vector<8x384xf32>
    %57 = arith.addf %56, %55 : vector<8x384xf32>
    %58 = arith.divf %56, %57 : vector<8x384xf32>
    %59 = vector.extract_strided_slice %52 {offsets = [0, 384], sizes = [8, 128], strides = [1, 1]} : vector<8x512xf32> to vector<8x128xf32>
    %60 = math.tanh %59 : vector<8x128xf32>
    %61 = vector.extract_strided_slice %58 {offsets = [0, 0], sizes = [8, 128], strides = [1, 1]} : vector<8x384xf32> to vector<8x128xf32>
    %62 = vector.extract_strided_slice %58 {offsets = [0, 128], sizes = [8, 128], strides = [1, 1]} : vector<8x384xf32> to vector<8x128xf32>
    %63 = vector.extract_strided_slice %58 {offsets = [0, 256], sizes = [8, 128], strides = [1, 1]} : vector<8x384xf32> to vector<8x128xf32>
    %64 = arith.mulf %62, %47 : vector<8x128xf32>
    %65 = arith.mulf %61, %60 : vector<8x128xf32>
    %66 = arith.addf %64, %65 : vector<8x128xf32>
    %67 = math.tanh %66 : vector<8x128xf32>
    %68 = arith.mulf %63, %67 : vector<8x128xf32>
    %69 = vector.extract_strided_slice %9 {offsets = [24, 0], sizes = [8, 512], strides = [1, 1]} : vector<64x512xf32> to vector<8x512xf32>
    %cst_21 = arith.constant dense<0.000000e+00> : vector<8x512xf32>
    %70 = tpu.matmul %68, %1, %cst_21 {dimension_numbers = #tpu.dot_dimension_numbers<[1], [0], [0], [1], [0, 0, 1, 1], [], []>} : vector<8x128xf32>, vector<128x512xf32>, vector<8x512xf32> -> vector<8x512xf32>
    %71 = arith.addf %69, %70 : vector<8x512xf32>
    %72 = vector.extract_strided_slice %71 {offsets = [0, 0], sizes = [8, 384], strides = [1, 1]} : vector<8x512xf32> to vector<8x384xf32>
    %73 = arith.negf %72 : vector<8x384xf32>
    %74 = math.exp %73 : vector<8x384xf32>
    %cst_22 = arith.constant 1.000000e+00 : f32
    %75 = vector.broadcast %cst_22 : f32 to vector<8x384xf32>
    %76 = arith.addf %75, %74 : vector<8x384xf32>
    %77 = arith.divf %75, %76 : vector<8x384xf32>
    %78 = vector.extract_strided_slice %71 {offsets = [0, 384], sizes = [8, 128], strides = [1, 1]} : vector<8x512xf32> to vector<8x128xf32>
    %79 = math.tanh %78 : vector<8x128xf32>
    %80 = vector.extract_strided_slice %77 {offsets = [0, 0], sizes = [8, 128], strides = [1, 1]} : vector<8x384xf32> to vector<8x128xf32>
    %81 = vector.extract_strided_slice %77 {offsets = [0, 128], sizes = [8, 128], strides = [1, 1]} : vector<8x384xf32> to vector<8x128xf32>
    %82 = vector.extract_strided_slice %77 {offsets = [0, 256], sizes = [8, 128], strides = [1, 1]} : vector<8x384xf32> to vector<8x128xf32>
    %83 = arith.mulf %81, %66 : vector<8x128xf32>
    %84 = arith.mulf %80, %79 : vector<8x128xf32>
    %85 = arith.addf %83, %84 : vector<8x128xf32>
    %86 = math.tanh %85 : vector<8x128xf32>
    %87 = arith.mulf %82, %86 : vector<8x128xf32>
    %88 = vector.extract_strided_slice %9 {offsets = [32, 0], sizes = [8, 512], strides = [1, 1]} : vector<64x512xf32> to vector<8x512xf32>
    %cst_23 = arith.constant dense<0.000000e+00> : vector<8x512xf32>
    %89 = tpu.matmul %87, %1, %cst_23 {dimension_numbers = #tpu.dot_dimension_numbers<[1], [0], [0], [1], [0, 0, 1, 1], [], []>} : vector<8x128xf32>, vector<128x512xf32>, vector<8x512xf32> -> vector<8x512xf32>
    %90 = arith.addf %88, %89 : vector<8x512xf32>
    %91 = vector.extract_strided_slice %90 {offsets = [0, 0], sizes = [8, 384], strides = [1, 1]} : vector<8x512xf32> to vector<8x384xf32>
    %92 = arith.negf %91 : vector<8x384xf32>
    %93 = math.exp %92 : vector<8x384xf32>
    %cst_24 = arith.constant 1.000000e+00 : f32
    %94 = vector.broadcast %cst_24 : f32 to vector<8x384xf32>
    %95 = arith.addf %94, %93 : vector<8x384xf32>
    %96 = arith.divf %94, %95 : vector<8x384xf32>
    %97 = vector.extract_strided_slice %90 {offsets = [0, 384], sizes = [8, 128], strides = [1, 1]} : vector<8x512xf32> to vector<8x128xf32>
    %98 = math.tanh %97 : vector<8x128xf32>
    %99 = vector.extract_strided_slice %96 {offsets = [0, 0], sizes = [8, 128], strides = [1, 1]} : vector<8x384xf32> to vector<8x128xf32>
    %100 = vector.extract_strided_slice %96 {offsets = [0, 128], sizes = [8, 128], strides = [1, 1]} : vector<8x384xf32> to vector<8x128xf32>
    %101 = vector.extract_strided_slice %96 {offsets = [0, 256], sizes = [8, 128], strides = [1, 1]} : vector<8x384xf32> to vector<8x128xf32>
    %102 = arith.mulf %100, %85 : vector<8x128xf32>
    %103 = arith.mulf %99, %98 : vector<8x128xf32>
    %104 = arith.addf %102, %103 : vector<8x128xf32>
    %105 = math.tanh %104 : vector<8x128xf32>
    %106 = arith.mulf %101, %105 : vector<8x128xf32>
    %107 = vector.extract_strided_slice %9 {offsets = [40, 0], sizes = [8, 512], strides = [1, 1]} : vector<64x512xf32> to vector<8x512xf32>
    %cst_25 = arith.constant dense<0.000000e+00> : vector<8x512xf32>
    %108 = tpu.matmul %106, %1, %cst_25 {dimension_numbers = #tpu.dot_dimension_numbers<[1], [0], [0], [1], [0, 0, 1, 1], [], []>} : vector<8x128xf32>, vector<128x512xf32>, vector<8x512xf32> -> vector<8x512xf32>
    %109 = arith.addf %107, %108 : vector<8x512xf32>
    %110 = vector.extract_strided_slice %109 {offsets = [0, 0], sizes = [8, 384], strides = [1, 1]} : vector<8x512xf32> to vector<8x384xf32>
    %111 = arith.negf %110 : vector<8x384xf32>
    %112 = math.exp %111 : vector<8x384xf32>
    %cst_26 = arith.constant 1.000000e+00 : f32
    %113 = vector.broadcast %cst_26 : f32 to vector<8x384xf32>
    %114 = arith.addf %113, %112 : vector<8x384xf32>
    %115 = arith.divf %113, %114 : vector<8x384xf32>
    %116 = vector.extract_strided_slice %109 {offsets = [0, 384], sizes = [8, 128], strides = [1, 1]} : vector<8x512xf32> to vector<8x128xf32>
    %117 = math.tanh %116 : vector<8x128xf32>
    %118 = vector.extract_strided_slice %115 {offsets = [0, 0], sizes = [8, 128], strides = [1, 1]} : vector<8x384xf32> to vector<8x128xf32>
    %119 = vector.extract_strided_slice %115 {offsets = [0, 128], sizes = [8, 128], strides = [1, 1]} : vector<8x384xf32> to vector<8x128xf32>
    %120 = vector.extract_strided_slice %115 {offsets = [0, 256], sizes = [8, 128], strides = [1, 1]} : vector<8x384xf32> to vector<8x128xf32>
    %121 = arith.mulf %119, %104 : vector<8x128xf32>
    %122 = arith.mulf %118, %117 : vector<8x128xf32>
    %123 = arith.addf %121, %122 : vector<8x128xf32>
    %124 = math.tanh %123 : vector<8x128xf32>
    %125 = arith.mulf %120, %124 : vector<8x128xf32>
    %126 = vector.extract_strided_slice %9 {offsets = [48, 0], sizes = [8, 512], strides = [1, 1]} : vector<64x512xf32> to vector<8x512xf32>
    %cst_27 = arith.constant dense<0.000000e+00> : vector<8x512xf32>
    %127 = tpu.matmul %125, %1, %cst_27 {dimension_numbers = #tpu.dot_dimension_numbers<[1], [0], [0], [1], [0, 0, 1, 1], [], []>} : vector<8x128xf32>, vector<128x512xf32>, vector<8x512xf32> -> vector<8x512xf32>
    %128 = arith.addf %126, %127 : vector<8x512xf32>
    %129 = vector.extract_strided_slice %128 {offsets = [0, 0], sizes = [8, 384], strides = [1, 1]} : vector<8x512xf32> to vector<8x384xf32>
    %130 = arith.negf %129 : vector<8x384xf32>
    %131 = math.exp %130 : vector<8x384xf32>
    %cst_28 = arith.constant 1.000000e+00 : f32
    %132 = vector.broadcast %cst_28 : f32 to vector<8x384xf32>
    %133 = arith.addf %132, %131 : vector<8x384xf32>
    %134 = arith.divf %132, %133 : vector<8x384xf32>
    %135 = vector.extract_strided_slice %128 {offsets = [0, 384], sizes = [8, 128], strides = [1, 1]} : vector<8x512xf32> to vector<8x128xf32>
    %136 = math.tanh %135 : vector<8x128xf32>
    %137 = vector.extract_strided_slice %134 {offsets = [0, 0], sizes = [8, 128], strides = [1, 1]} : vector<8x384xf32> to vector<8x128xf32>
    %138 = vector.extract_strided_slice %134 {offsets = [0, 128], sizes = [8, 128], strides = [1, 1]} : vector<8x384xf32> to vector<8x128xf32>
    %139 = vector.extract_strided_slice %134 {offsets = [0, 256], sizes = [8, 128], strides = [1, 1]} : vector<8x384xf32> to vector<8x128xf32>
    %140 = arith.mulf %138, %123 : vector<8x128xf32>
    %141 = arith.mulf %137, %136 : vector<8x128xf32>
    %142 = arith.addf %140, %141 : vector<8x128xf32>
    %143 = math.tanh %142 : vector<8x128xf32>
    %144 = arith.mulf %139, %143 : vector<8x128xf32>
    %145 = vector.extract_strided_slice %9 {offsets = [56, 0], sizes = [8, 512], strides = [1, 1]} : vector<64x512xf32> to vector<8x512xf32>
    %cst_29 = arith.constant dense<0.000000e+00> : vector<8x512xf32>
    %146 = tpu.matmul %144, %1, %cst_29 {dimension_numbers = #tpu.dot_dimension_numbers<[1], [0], [0], [1], [0, 0, 1, 1], [], []>} : vector<8x128xf32>, vector<128x512xf32>, vector<8x512xf32> -> vector<8x512xf32>
    %147 = arith.addf %145, %146 : vector<8x512xf32>
    %148 = vector.extract_strided_slice %147 {offsets = [0, 0], sizes = [8, 384], strides = [1, 1]} : vector<8x512xf32> to vector<8x384xf32>
    %149 = arith.negf %148 : vector<8x384xf32>
    %150 = math.exp %149 : vector<8x384xf32>
    %cst_30 = arith.constant 1.000000e+00 : f32
    %151 = vector.broadcast %cst_30 : f32 to vector<8x384xf32>
    %152 = arith.addf %151, %150 : vector<8x384xf32>
    %153 = arith.divf %151, %152 : vector<8x384xf32>
    %154 = vector.extract_strided_slice %147 {offsets = [0, 384], sizes = [8, 128], strides = [1, 1]} : vector<8x512xf32> to vector<8x128xf32>
    %155 = math.tanh %154 : vector<8x128xf32>
    %156 = vector.extract_strided_slice %153 {offsets = [0, 0], sizes = [8, 128], strides = [1, 1]} : vector<8x384xf32> to vector<8x128xf32>
    %157 = vector.extract_strided_slice %153 {offsets = [0, 128], sizes = [8, 128], strides = [1, 1]} : vector<8x384xf32> to vector<8x128xf32>
    %158 = vector.extract_strided_slice %153 {offsets = [0, 256], sizes = [8, 128], strides = [1, 1]} : vector<8x384xf32> to vector<8x128xf32>
    %159 = arith.mulf %157, %142 : vector<8x128xf32>
    %160 = arith.mulf %156, %155 : vector<8x128xf32>
    %161 = arith.addf %159, %160 : vector<8x128xf32>
    %162 = math.tanh %161 : vector<8x128xf32>
    %163 = arith.mulf %158, %162 : vector<8x128xf32>
    %cst_31 = arith.constant dense<0.000000e+00> : vector<8x512xf32>
    %164 = tpu.matmul %163, %3, %cst_31 {dimension_numbers = #tpu.dot_dimension_numbers<[1], [0], [0], [1], [0, 0, 1, 1], [], []>} : vector<8x128xf32>, vector<128x512xf32>, vector<8x512xf32> -> vector<8x512xf32>
    %165 = vector.broadcast %5 : vector<1x512xf32> to vector<8x512xf32>
    %166 = arith.addf %164, %165 : vector<8x512xf32>
    %cst_32 = arith.constant 0.000000e+00 : f32
    %167 = vector.broadcast %cst_32 : f32 to vector<8x128xf32>
    %cst_33 = arith.constant 0.000000e+00 : f32
    %168 = vector.broadcast %cst_33 : f32 to vector<8x128xf32>
    %cst_34 = arith.constant dense<0.000000e+00> : vector<8x512xf32>
    %169 = tpu.matmul %167, %4, %cst_34 {dimension_numbers = #tpu.dot_dimension_numbers<[1], [0], [0], [1], [0, 0, 1, 1], [], []>} : vector<8x128xf32>, vector<128x512xf32>, vector<8x512xf32> -> vector<8x512xf32>
    %170 = arith.addf %166, %169 : vector<8x512xf32>
    %171 = vector.extract_strided_slice %170 {offsets = [0, 0], sizes = [8, 384], strides = [1, 1]} : vector<8x512xf32> to vector<8x384xf32>
    %172 = arith.negf %171 : vector<8x384xf32>
    %173 = math.exp %172 : vector<8x384xf32>
    %cst_35 = arith.constant 1.000000e+00 : f32
    %174 = vector.broadcast %cst_35 : f32 to vector<8x384xf32>
    %175 = arith.addf %174, %173 : vector<8x384xf32>
    %176 = arith.divf %174, %175 : vector<8x384xf32>
    %177 = vector.extract_strided_slice %170 {offsets = [0, 384], sizes = [8, 128], strides = [1, 1]} : vector<8x512xf32> to vector<8x128xf32>
    %178 = math.tanh %177 : vector<8x128xf32>
    %179 = vector.extract_strided_slice %176 {offsets = [0, 0], sizes = [8, 128], strides = [1, 1]} : vector<8x384xf32> to vector<8x128xf32>
    %180 = vector.extract_strided_slice %176 {offsets = [0, 128], sizes = [8, 128], strides = [1, 1]} : vector<8x384xf32> to vector<8x128xf32>
    %181 = vector.extract_strided_slice %176 {offsets = [0, 256], sizes = [8, 128], strides = [1, 1]} : vector<8x384xf32> to vector<8x128xf32>
    %182 = arith.mulf %180, %168 : vector<8x128xf32>
    %183 = arith.mulf %179, %178 : vector<8x128xf32>
    %184 = arith.addf %182, %183 : vector<8x128xf32>
    %185 = math.tanh %184 : vector<8x128xf32>
    %186 = arith.mulf %181, %185 : vector<8x128xf32>
    %187 = vector.extract_strided_slice %186 {offsets = [0, 0], sizes = [2, 6], strides = [1, 1]} : vector<8x128xf32> to vector<2x6xf32>
    %c0_36 = arith.constant 0 : index
    %c0_37 = arith.constant 0 : index
    %188 = vector.load %arg7[%c0_36, %c0_37] : memref<2x48xf32, #tpu.memory_space<vmem>>, vector<2x6xf32>
    tpu.vector_store %arg7[%c0_36, %c0_37], %187 {strides = array<i32>} : memref<2x48xf32, #tpu.memory_space<vmem>>, vector<2x6xf32>,
    %cst_38 = arith.constant dense<0.000000e+00> : vector<8x512xf32>
    %189 = tpu.matmul %186, %4, %cst_38 {dimension_numbers = #tpu.dot_dimension_numbers<[1], [0], [0], [1], [0, 0, 1, 1], [], []>} : vector<8x128xf32>, vector<128x512xf32>, vector<8x512xf32> -> vector<8x512xf32>
    %190 = arith.addf %166, %189 : vector<8x512xf32>
    %191 = vector.extract_strided_slice %190 {offsets = [0, 0], sizes = [8, 384], strides = [1, 1]} : vector<8x512xf32> to vector<8x384xf32>
    %192 = arith.negf %191 : vector<8x384xf32>
    %193 = math.exp %192 : vector<8x384xf32>
    %cst_39 = arith.constant 1.000000e+00 : f32
    %194 = vector.broadcast %cst_39 : f32 to vector<8x384xf32>
    %195 = arith.addf %194, %193 : vector<8x384xf32>
    %196 = arith.divf %194, %195 : vector<8x384xf32>
    %197 = vector.extract_strided_slice %190 {offsets = [0, 384], sizes = [8, 128], strides = [1, 1]} : vector<8x512xf32> to vector<8x128xf32>
    %198 = math.tanh %197 : vector<8x128xf32>
    %199 = vector.extract_strided_slice %196 {offsets = [0, 0], sizes = [8, 128], strides = [1, 1]} : vector<8x384xf32> to vector<8x128xf32>
    %200 = vector.extract_strided_slice %196 {offsets = [0, 128], sizes = [8, 128], strides = [1, 1]} : vector<8x384xf32> to vector<8x128xf32>
    %201 = vector.extract_strided_slice %196 {offsets = [0, 256], sizes = [8, 128], strides = [1, 1]} : vector<8x384xf32> to vector<8x128xf32>
    %202 = arith.mulf %200, %184 : vector<8x128xf32>
    %203 = arith.mulf %199, %198 : vector<8x128xf32>
    %204 = arith.addf %202, %203 : vector<8x128xf32>
    %205 = math.tanh %204 : vector<8x128xf32>
    %206 = arith.mulf %201, %205 : vector<8x128xf32>
    %207 = vector.extract_strided_slice %206 {offsets = [0, 0], sizes = [2, 6], strides = [1, 1]} : vector<8x128xf32> to vector<2x6xf32>
    %c0_40 = arith.constant 0 : index
    %c6 = arith.constant 6 : index
    %208 = vector.load %arg7[%c0_40, %c6] : memref<2x48xf32, #tpu.memory_space<vmem>>, vector<2x6xf32>
    tpu.vector_store %arg7[%c0_40, %c6], %207 {strides = array<i32>} : memref<2x48xf32, #tpu.memory_space<vmem>>, vector<2x6xf32>,
    %cst_41 = arith.constant dense<0.000000e+00> : vector<8x512xf32>
    %209 = tpu.matmul %206, %4, %cst_41 {dimension_numbers = #tpu.dot_dimension_numbers<[1], [0], [0], [1], [0, 0, 1, 1], [], []>} : vector<8x128xf32>, vector<128x512xf32>, vector<8x512xf32> -> vector<8x512xf32>
    %210 = arith.addf %166, %209 : vector<8x512xf32>
    %211 = vector.extract_strided_slice %210 {offsets = [0, 0], sizes = [8, 384], strides = [1, 1]} : vector<8x512xf32> to vector<8x384xf32>
    %212 = arith.negf %211 : vector<8x384xf32>
    %213 = math.exp %212 : vector<8x384xf32>
    %cst_42 = arith.constant 1.000000e+00 : f32
    %214 = vector.broadcast %cst_42 : f32 to vector<8x384xf32>
    %215 = arith.addf %214, %213 : vector<8x384xf32>
    %216 = arith.divf %214, %215 : vector<8x384xf32>
    %217 = vector.extract_strided_slice %210 {offsets = [0, 384], sizes = [8, 128], strides = [1, 1]} : vector<8x512xf32> to vector<8x128xf32>
    %218 = math.tanh %217 : vector<8x128xf32>
    %219 = vector.extract_strided_slice %216 {offsets = [0, 0], sizes = [8, 128], strides = [1, 1]} : vector<8x384xf32> to vector<8x128xf32>
    %220 = vector.extract_strided_slice %216 {offsets = [0, 128], sizes = [8, 128], strides = [1, 1]} : vector<8x384xf32> to vector<8x128xf32>
    %221 = vector.extract_strided_slice %216 {offsets = [0, 256], sizes = [8, 128], strides = [1, 1]} : vector<8x384xf32> to vector<8x128xf32>
    %222 = arith.mulf %220, %204 : vector<8x128xf32>
    %223 = arith.mulf %219, %218 : vector<8x128xf32>
    %224 = arith.addf %222, %223 : vector<8x128xf32>
    %225 = math.tanh %224 : vector<8x128xf32>
    %226 = arith.mulf %221, %225 : vector<8x128xf32>
    %227 = vector.extract_strided_slice %226 {offsets = [0, 0], sizes = [2, 6], strides = [1, 1]} : vector<8x128xf32> to vector<2x6xf32>
    %c0_43 = arith.constant 0 : index
    %c12 = arith.constant 12 : index
    %228 = vector.load %arg7[%c0_43, %c12] : memref<2x48xf32, #tpu.memory_space<vmem>>, vector<2x6xf32>
    tpu.vector_store %arg7[%c0_43, %c12], %227 {strides = array<i32>} : memref<2x48xf32, #tpu.memory_space<vmem>>, vector<2x6xf32>,
    %cst_44 = arith.constant dense<0.000000e+00> : vector<8x512xf32>
    %229 = tpu.matmul %226, %4, %cst_44 {dimension_numbers = #tpu.dot_dimension_numbers<[1], [0], [0], [1], [0, 0, 1, 1], [], []>} : vector<8x128xf32>, vector<128x512xf32>, vector<8x512xf32> -> vector<8x512xf32>
    %230 = arith.addf %166, %229 : vector<8x512xf32>
    %231 = vector.extract_strided_slice %230 {offsets = [0, 0], sizes = [8, 384], strides = [1, 1]} : vector<8x512xf32> to vector<8x384xf32>
    %232 = arith.negf %231 : vector<8x384xf32>
    %233 = math.exp %232 : vector<8x384xf32>
    %cst_45 = arith.constant 1.000000e+00 : f32
    %234 = vector.broadcast %cst_45 : f32 to vector<8x384xf32>
    %235 = arith.addf %234, %233 : vector<8x384xf32>
    %236 = arith.divf %234, %235 : vector<8x384xf32>
    %237 = vector.extract_strided_slice %230 {offsets = [0, 384], sizes = [8, 128], strides = [1, 1]} : vector<8x512xf32> to vector<8x128xf32>
    %238 = math.tanh %237 : vector<8x128xf32>
    %239 = vector.extract_strided_slice %236 {offsets = [0, 0], sizes = [8, 128], strides = [1, 1]} : vector<8x384xf32> to vector<8x128xf32>
    %240 = vector.extract_strided_slice %236 {offsets = [0, 128], sizes = [8, 128], strides = [1, 1]} : vector<8x384xf32> to vector<8x128xf32>
    %241 = vector.extract_strided_slice %236 {offsets = [0, 256], sizes = [8, 128], strides = [1, 1]} : vector<8x384xf32> to vector<8x128xf32>
    %242 = arith.mulf %240, %224 : vector<8x128xf32>
    %243 = arith.mulf %239, %238 : vector<8x128xf32>
    %244 = arith.addf %242, %243 : vector<8x128xf32>
    %245 = math.tanh %244 : vector<8x128xf32>
    %246 = arith.mulf %241, %245 : vector<8x128xf32>
    %247 = vector.extract_strided_slice %246 {offsets = [0, 0], sizes = [2, 6], strides = [1, 1]} : vector<8x128xf32> to vector<2x6xf32>
    %c0_46 = arith.constant 0 : index
    %c18 = arith.constant 18 : index
    %248 = vector.load %arg7[%c0_46, %c18] : memref<2x48xf32, #tpu.memory_space<vmem>>, vector<2x6xf32>
    tpu.vector_store %arg7[%c0_46, %c18], %247 {strides = array<i32>} : memref<2x48xf32, #tpu.memory_space<vmem>>, vector<2x6xf32>,
    %cst_47 = arith.constant dense<0.000000e+00> : vector<8x512xf32>
    %249 = tpu.matmul %246, %4, %cst_47 {dimension_numbers = #tpu.dot_dimension_numbers<[1], [0], [0], [1], [0, 0, 1, 1], [], []>} : vector<8x128xf32>, vector<128x512xf32>, vector<8x512xf32> -> vector<8x512xf32>
    %250 = arith.addf %166, %249 : vector<8x512xf32>
    %251 = vector.extract_strided_slice %250 {offsets = [0, 0], sizes = [8, 384], strides = [1, 1]} : vector<8x512xf32> to vector<8x384xf32>
    %252 = arith.negf %251 : vector<8x384xf32>
    %253 = math.exp %252 : vector<8x384xf32>
    %cst_48 = arith.constant 1.000000e+00 : f32
    %254 = vector.broadcast %cst_48 : f32 to vector<8x384xf32>
    %255 = arith.addf %254, %253 : vector<8x384xf32>
    %256 = arith.divf %254, %255 : vector<8x384xf32>
    %257 = vector.extract_strided_slice %250 {offsets = [0, 384], sizes = [8, 128], strides = [1, 1]} : vector<8x512xf32> to vector<8x128xf32>
    %258 = math.tanh %257 : vector<8x128xf32>
    %259 = vector.extract_strided_slice %256 {offsets = [0, 0], sizes = [8, 128], strides = [1, 1]} : vector<8x384xf32> to vector<8x128xf32>
    %260 = vector.extract_strided_slice %256 {offsets = [0, 128], sizes = [8, 128], strides = [1, 1]} : vector<8x384xf32> to vector<8x128xf32>
    %261 = vector.extract_strided_slice %256 {offsets = [0, 256], sizes = [8, 128], strides = [1, 1]} : vector<8x384xf32> to vector<8x128xf32>
    %262 = arith.mulf %260, %244 : vector<8x128xf32>
    %263 = arith.mulf %259, %258 : vector<8x128xf32>
    %264 = arith.addf %262, %263 : vector<8x128xf32>
    %265 = math.tanh %264 : vector<8x128xf32>
    %266 = arith.mulf %261, %265 : vector<8x128xf32>
    %267 = vector.extract_strided_slice %266 {offsets = [0, 0], sizes = [2, 6], strides = [1, 1]} : vector<8x128xf32> to vector<2x6xf32>
    %c0_49 = arith.constant 0 : index
    %c24 = arith.constant 24 : index
    %268 = vector.load %arg7[%c0_49, %c24] : memref<2x48xf32, #tpu.memory_space<vmem>>, vector<2x6xf32>
    tpu.vector_store %arg7[%c0_49, %c24], %267 {strides = array<i32>} : memref<2x48xf32, #tpu.memory_space<vmem>>, vector<2x6xf32>,
    %cst_50 = arith.constant dense<0.000000e+00> : vector<8x512xf32>
    %269 = tpu.matmul %266, %4, %cst_50 {dimension_numbers = #tpu.dot_dimension_numbers<[1], [0], [0], [1], [0, 0, 1, 1], [], []>} : vector<8x128xf32>, vector<128x512xf32>, vector<8x512xf32> -> vector<8x512xf32>
    %270 = arith.addf %166, %269 : vector<8x512xf32>
    %271 = vector.extract_strided_slice %270 {offsets = [0, 0], sizes = [8, 384], strides = [1, 1]} : vector<8x512xf32> to vector<8x384xf32>
    %272 = arith.negf %271 : vector<8x384xf32>
    %273 = math.exp %272 : vector<8x384xf32>
    %cst_51 = arith.constant 1.000000e+00 : f32
    %274 = vector.broadcast %cst_51 : f32 to vector<8x384xf32>
    %275 = arith.addf %274, %273 : vector<8x384xf32>
    %276 = arith.divf %274, %275 : vector<8x384xf32>
    %277 = vector.extract_strided_slice %270 {offsets = [0, 384], sizes = [8, 128], strides = [1, 1]} : vector<8x512xf32> to vector<8x128xf32>
    %278 = math.tanh %277 : vector<8x128xf32>
    %279 = vector.extract_strided_slice %276 {offsets = [0, 0], sizes = [8, 128], strides = [1, 1]} : vector<8x384xf32> to vector<8x128xf32>
    %280 = vector.extract_strided_slice %276 {offsets = [0, 128], sizes = [8, 128], strides = [1, 1]} : vector<8x384xf32> to vector<8x128xf32>
    %281 = vector.extract_strided_slice %276 {offsets = [0, 256], sizes = [8, 128], strides = [1, 1]} : vector<8x384xf32> to vector<8x128xf32>
    %282 = arith.mulf %280, %264 : vector<8x128xf32>
    %283 = arith.mulf %279, %278 : vector<8x128xf32>
    %284 = arith.addf %282, %283 : vector<8x128xf32>
    %285 = math.tanh %284 : vector<8x128xf32>
    %286 = arith.mulf %281, %285 : vector<8x128xf32>
    %287 = vector.extract_strided_slice %286 {offsets = [0, 0], sizes = [2, 6], strides = [1, 1]} : vector<8x128xf32> to vector<2x6xf32>
    %c0_52 = arith.constant 0 : index
    %c30 = arith.constant 30 : index
    %288 = vector.load %arg7[%c0_52, %c30] : memref<2x48xf32, #tpu.memory_space<vmem>>, vector<2x6xf32>
    tpu.vector_store %arg7[%c0_52, %c30], %287 {strides = array<i32>} : memref<2x48xf32, #tpu.memory_space<vmem>>, vector<2x6xf32>,
    %cst_53 = arith.constant dense<0.000000e+00> : vector<8x512xf32>
    %289 = tpu.matmul %286, %4, %cst_53 {dimension_numbers = #tpu.dot_dimension_numbers<[1], [0], [0], [1], [0, 0, 1, 1], [], []>} : vector<8x128xf32>, vector<128x512xf32>, vector<8x512xf32> -> vector<8x512xf32>
    %290 = arith.addf %166, %289 : vector<8x512xf32>
    %291 = vector.extract_strided_slice %290 {offsets = [0, 0], sizes = [8, 384], strides = [1, 1]} : vector<8x512xf32> to vector<8x384xf32>
    %292 = arith.negf %291 : vector<8x384xf32>
    %293 = math.exp %292 : vector<8x384xf32>
    %cst_54 = arith.constant 1.000000e+00 : f32
    %294 = vector.broadcast %cst_54 : f32 to vector<8x384xf32>
    %295 = arith.addf %294, %293 : vector<8x384xf32>
    %296 = arith.divf %294, %295 : vector<8x384xf32>
    %297 = vector.extract_strided_slice %290 {offsets = [0, 384], sizes = [8, 128], strides = [1, 1]} : vector<8x512xf32> to vector<8x128xf32>
    %298 = math.tanh %297 : vector<8x128xf32>
    %299 = vector.extract_strided_slice %296 {offsets = [0, 0], sizes = [8, 128], strides = [1, 1]} : vector<8x384xf32> to vector<8x128xf32>
    %300 = vector.extract_strided_slice %296 {offsets = [0, 128], sizes = [8, 128], strides = [1, 1]} : vector<8x384xf32> to vector<8x128xf32>
    %301 = vector.extract_strided_slice %296 {offsets = [0, 256], sizes = [8, 128], strides = [1, 1]} : vector<8x384xf32> to vector<8x128xf32>
    %302 = arith.mulf %300, %284 : vector<8x128xf32>
    %303 = arith.mulf %299, %298 : vector<8x128xf32>
    %304 = arith.addf %302, %303 : vector<8x128xf32>
    %305 = math.tanh %304 : vector<8x128xf32>
    %306 = arith.mulf %301, %305 : vector<8x128xf32>
    %307 = vector.extract_strided_slice %306 {offsets = [0, 0], sizes = [2, 6], strides = [1, 1]} : vector<8x128xf32> to vector<2x6xf32>
    %c0_55 = arith.constant 0 : index
    %c36 = arith.constant 36 : index
    %308 = vector.load %arg7[%c0_55, %c36] : memref<2x48xf32, #tpu.memory_space<vmem>>, vector<2x6xf32>
    tpu.vector_store %arg7[%c0_55, %c36], %307 {strides = array<i32>} : memref<2x48xf32, #tpu.memory_space<vmem>>, vector<2x6xf32>,
    %cst_56 = arith.constant dense<0.000000e+00> : vector<8x512xf32>
    %309 = tpu.matmul %306, %4, %cst_56 {dimension_numbers = #tpu.dot_dimension_numbers<[1], [0], [0], [1], [0, 0, 1, 1], [], []>} : vector<8x128xf32>, vector<128x512xf32>, vector<8x512xf32> -> vector<8x512xf32>
    %310 = arith.addf %166, %309 : vector<8x512xf32>
    %311 = vector.extract_strided_slice %310 {offsets = [0, 0], sizes = [8, 384], strides = [1, 1]} : vector<8x512xf32> to vector<8x384xf32>
    %312 = arith.negf %311 : vector<8x384xf32>
    %313 = math.exp %312 : vector<8x384xf32>
    %cst_57 = arith.constant 1.000000e+00 : f32
    %314 = vector.broadcast %cst_57 : f32 to vector<8x384xf32>
    %315 = arith.addf %314, %313 : vector<8x384xf32>
    %316 = arith.divf %314, %315 : vector<8x384xf32>
    %317 = vector.extract_strided_slice %310 {offsets = [0, 384], sizes = [8, 128], strides = [1, 1]} : vector<8x512xf32> to vector<8x128xf32>
    %318 = math.tanh %317 : vector<8x128xf32>
    %319 = vector.extract_strided_slice %316 {offsets = [0, 0], sizes = [8, 128], strides = [1, 1]} : vector<8x384xf32> to vector<8x128xf32>
    %320 = vector.extract_strided_slice %316 {offsets = [0, 128], sizes = [8, 128], strides = [1, 1]} : vector<8x384xf32> to vector<8x128xf32>
    %321 = vector.extract_strided_slice %316 {offsets = [0, 256], sizes = [8, 128], strides = [1, 1]} : vector<8x384xf32> to vector<8x128xf32>
    %322 = arith.mulf %320, %304 : vector<8x128xf32>
    %323 = arith.mulf %319, %318 : vector<8x128xf32>
    %324 = arith.addf %322, %323 : vector<8x128xf32>
    %325 = math.tanh %324 : vector<8x128xf32>
    %326 = arith.mulf %321, %325 : vector<8x128xf32>
    %327 = vector.extract_strided_slice %326 {offsets = [0, 0], sizes = [2, 6], strides = [1, 1]} : vector<8x128xf32> to vector<2x6xf32>
    %c0_58 = arith.constant 0 : index
    %c42 = arith.constant 42 : index
    %328 = vector.load %arg7[%c0_58, %c42] : memref<2x48xf32, #tpu.memory_space<vmem>>, vector<2x6xf32>
    tpu.vector_store %arg7[%c0_58, %c42], %327 {strides = array<i32>} : memref<2x48xf32, #tpu.memory_space<vmem>>, vector<2x6xf32>,
    return
  }
}

</mosaic_0001>

<llo_original>
// kernel: lstm_autoencoder.2
$region0: #{lstm_autoencoder.2}
  #allocation0 [shape = 'u32[]', space=smem, size = 0x4, offset = 0x4, fixed_abs, tag = 'smem constant byte address 0x4 - core index']
  #allocation1 [shape = 'u32[144,128]{1,0:T(1,128)}', space=vmem, size = 0x12000, scoped, tag = 'internal scratch']
  #allocation2 [shape = 'u32[2048]{0}', space=vmem, size = 0x2000, scoped, tag = 'scoped memory for lstm_autoencoder.2']
  #allocation3 [shape = 'u32[2048]{0}', space=vmem, size = 0x2000, scoped, tag = 'scoped memory for lstm_autoencoder.2']
  #allocation4 [shape = 'u32[2048]{0}', space=vmem, size = 0x2000, scoped, tag = 'scoped memory for lstm_autoencoder.2']
  #allocation5 [shape = 'u32[2048]{0}', space=vmem, size = 0x2000, scoped, tag = 'scoped memory for lstm_autoencoder.2']
  #allocation6 [shape = 'u32[2048]{0}', space=vmem, size = 0x2000, scoped, tag = 'scoped memory for lstm_autoencoder.2']
  %s0 = inlined_call_operand.hbm [shape: f32[6,512], index: 0, kind: input, shape index: {}]
  %s1 = inlined_call_operand.hbm [shape: f32[128,512], index: 1, kind: input, shape index: {}]
  %s2 = inlined_call_operand.vmem [shape: f32[1,512], index: 2, kind: input, shape index: {}]
  %s3 = inlined_call_operand.hbm [shape: f32[128,512], index: 3, kind: input, shape index: {}]
  %s4 = inlined_call_operand.hbm [shape: f32[128,512], index: 4, kind: input, shape index: {}]
  %s5 = inlined_call_operand.vmem [shape: f32[1,512], index: 5, kind: input, shape index: {}]
  %s6 = inlined_call_operand.vmem [shape: f32[8,2,6], index: 6, kind: input, shape index: {}]
  %s7 = inlined_call_operand.<no memory space> [shape: f32[], index: 7, kind: input, shape index: {}]
  %s8 = inlined_call_operand.vmem [shape: f32[2,48], index: 8, kind: output, shape index: {}]
  %s9 = sld [smem:[#allocation0]]
  $region54: #{lstm_autoencoder.2} parent=0
    _
  %s11 = ssub.s32 1, %s9
  %s12 = scalar_select 0, %s11, %s9
  %v13 = vstv %s7
  $region1: #{lstm_autoencoder.2} parent=0
    #allocation7 [shape = 'u8[16384]{0}', space=vmem, size = 0x4000, scoped, tag = 'input window, operand 1, single buffered']
    #allocation8 [shape = 's32[1]{0}', space=sflag, size = 0x4, scoped, tag = 'scoped memory for lstm_autoencoder.2']
    #allocation9 [shape = 'u8[262144]{0}', space=vmem, size = 0x40000, scoped, tag = 'input window, operand 2, single buffered']
    #allocation10 [shape = 's32[1]{0}', space=sflag, size = 0x4, scoped, tag = 'scoped memory for lstm_autoencoder.2']
    #allocation11 [shape = 'u8[262144]{0}', space=vmem, size = 0x40000, scoped, tag = 'input window, operand 4, single buffered']
    #allocation12 [shape = 'u8[262144]{0}', space=vmem, size = 0x40000, scoped, tag = 'input window, operand 5, single buffered']
    #allocation13 [shape = 's32[1]{0}', space=sflag, size = 0x4, scoped, tag = 'scoped memory for lstm_autoencoder.2']
    #allocation14 [shape = 'u8[32768]{0}', space=vmem, size = 0x8000, dematerialized = true, scoped, tag = 'FusionAdapter Buffer %pad_bitcast_fusion.1 = f32[64,6]{1,0:T(8,128)} fusion(%param_6.1, %param_7), kind=kLoop, calls=%fused_computation.clone.clone, metadata={op_name="jit(lstm_autoencoder)/reshape" stack_frame_id=9}']
    %14 = vsyncpa [#allocation8], 0
    %15 = vsyncpa [#allocation10], 0
    %16 = vsyncpa [#allocation13], 0
    // Predicated region
    $region2: #{lstm_autoencoder.2} parent=1 // pred_check
      _
    $region3: #{lstm_autoencoder.2} parent=1 // pred_check_branch
      %18 = sbr.rel (0) target = $region5
    $region4: #{lstm_autoencoder.2} parent=1 // pred_region
      _
    $region5: #{lstm_autoencoder.2} parent=1 // pred_fallthru
      _
    // Predicated region
    $region6: #{lstm_autoencoder.2} parent=1 // pred_check
      _
    $region7: #{lstm_autoencoder.2} parent=1 // pred_check_branch
      %20 = sbr.rel (0) target = $region9
    $region8: #{lstm_autoencoder.2} parent=1 // pred_region
      %s22 = ssub.s32 512, 512
      %23 = vsyncadd [#allocation8], %s22
      %s25 = sshll.u32 [#allocation7], 4
      %s26 = int_to_ptr.vmem [resolvable:$true] %s25
      %28 = dma.hbm_to_vmem [thread:$0]  %s0, 512, %s26, [#allocation8]
    $region9: #{lstm_autoencoder.2} parent=1 // pred_fallthru
      _
    // Predicated region
    $region10: #{lstm_autoencoder.2} parent=1 // pred_check
      _
    $region11: #{lstm_autoencoder.2} parent=1 // pred_check_branch
      %30 = sbr.rel (0) target = $region13
    $region12: #{lstm_autoencoder.2} parent=1 // pred_region
      %s32 = ssub.s32 8192, 8192
      %33 = vsyncadd [#allocation10], %s32
      %s34 = sshll.u32 [#allocation9], 4
      %s35 = int_to_ptr.vmem [resolvable:$true] %s34
      %40 = dma.hbm_to_vmem [thread:$0]  %s1, 8192, %s35, [#allocation10], 512, 512, 32
    $region13: #{lstm_autoencoder.2} parent=1 // pred_fallthru
      _
    // Predicated region
    $region14: #{lstm_autoencoder.2} parent=1 // pred_check
      _
    $region15: #{lstm_autoencoder.2} parent=1 // pred_check_branch
      %42 = sbr.rel (0) target = $region17
    $region16: #{lstm_autoencoder.2} parent=1 // pred_region
      _
    $region17: #{lstm_autoencoder.2} parent=1 // pred_fallthru
      _
    // Predicated region
    $region18: #{lstm_autoencoder.2} parent=1 // pred_check
      _
    $region19: #{lstm_autoencoder.2} parent=1 // pred_check_branch
      %44 = sbr.rel (0) target = $region21
    $region20: #{lstm_autoencoder.2} parent=1 // pred_region
      %s46 = ssub.s32 8192, 8192
      %47 = vsyncadd [#allocation10], %s46
      %s48 = sshll.u32 [#allocation11], 4
      %s49 = int_to_ptr.vmem [resolvable:$true] %s48
      %54 = dma.hbm_to_vmem [thread:$0]  %s3, 8192, %s49, [#allocation10], 512, 512, 32
    $region21: #{lstm_autoencoder.2} parent=1 // pred_fallthru
      _
    // Predicated region
    $region22: #{lstm_autoencoder.2} parent=1 // pred_check
      _
    $region23: #{lstm_autoencoder.2} parent=1 // pred_check_branch
      %56 = sbr.rel (0) target = $region25
    $region24: #{lstm_autoencoder.2} parent=1 // pred_region
      %s58 = ssub.s32 8192, 8192
      %59 = vsyncadd [#allocation13], %s58
      %s60 = sshll.u32 [#allocation12], 4
      %s61 = int_to_ptr.vmem [resolvable:$true] %s60
      %66 = dma.hbm_to_vmem [thread:$0]  %s4, 8192, %s61, [#allocation13], 512, 512, 32
    $region25: #{lstm_autoencoder.2} parent=1 // pred_fallthru
      _
    // Predicated region
    $region26: #{lstm_autoencoder.2} parent=1 // pred_check
      _
    $region27: #{lstm_autoencoder.2} parent=1 // pred_check_branch
      %68 = sbr.rel (0) target = $region29
    $region28: #{lstm_autoencoder.2} parent=1 // pred_region
      _
    $region29: #{lstm_autoencoder.2} parent=1 // pred_fallthru
      _
    // Predicated region
    $region30: #{lstm_autoencoder.2} parent=1 // pred_check
      _
    $region31: #{lstm_autoencoder.2} parent=1 // pred_check_branch
      %70 = sbr.rel (0) target = $region33
    $region32: #{lstm_autoencoder.2} parent=1 // pred_region
      %71 = dma.done [#allocation8], 512
    $region33: #{lstm_autoencoder.2} parent=1 // pred_fallthru
      _
    // Predicated region
    $region34: #{lstm_autoencoder.2} parent=1 // pred_check
      _
    $region35: #{lstm_autoencoder.2} parent=1 // pred_check_branch
      %73 = sbr.rel (0) target = $region37
    $region36: #{lstm_autoencoder.2} parent=1 // pred_region
      %74 = dma.done [#allocation10], 8192
    $region37: #{lstm_autoencoder.2} parent=1 // pred_fallthru
      _
    // Predicated region
    $region38: #{lstm_autoencoder.2} parent=1 // pred_check
      _
    $region39: #{lstm_autoencoder.2} parent=1 // pred_check_branch
      %76 = sbr.rel (0) target = $region41
    $region40: #{lstm_autoencoder.2} parent=1 // pred_region
      %77 = dma.done [#allocation10], 8192
    $region41: #{lstm_autoencoder.2} parent=1 // pred_fallthru
      _
    // Predicated region
    $region42: #{lstm_autoencoder.2} parent=1 // pred_check
      _
    $region43: #{lstm_autoencoder.2} parent=1 // pred_check_branch
      %79 = sbr.rel (0) target = $region45
    $region44: #{lstm_autoencoder.2} parent=1 // pred_region
      %80 = dma.done [#allocation13], 8192
    $region45: #{lstm_autoencoder.2} parent=1 // pred_fallthru
      _
    %v81 = vld [vmem:[%s6] sm:$0x3]
    %v82 = vlaneseq
    %v83 = vshrl.u32 %v82, 7
    %vm85 = vcmp.lt.s32.totalorder %v83, 2
    %v86 = vsel %vm85, %v81, %v13
    %v87 = vlaneseq
    %v88 = vand.u32 %v87, 127
    %vm90 = vcmp.lt.s32.totalorder %v88, 6
    %v91 = vsel %vm90, %v86, %v13
    %s93 = ssub.s32 256, 1
    %94 = vst [vmem:[#allocation14] sm:%s93] %v91
    %s95 = scalar_lea.vmem %s6, 2
    %v96 = vld [vmem:[%s95] sm:$0x3]
    %v97 = vlaneseq
    %v98 = vshrl.u32 %v97, 7
    %vm100 = vcmp.lt.s32.totalorder %v98, 2
    %v101 = vsel %vm100, %v96, %v13
    %v102 = vlaneseq
    %v103 = vand.u32 %v102, 127
    %vm105 = vcmp.lt.s32.totalorder %v103, 6
    %v106 = vsel %vm105, %v101, %v13
    %s107 = scalar_lea.vmem [#allocation14], 8
    %s109 = ssub.s32 256, 1
    %110 = vst [vmem:[%s107] sm:%s109] %v106
    %s111 = scalar_lea.vmem %s6, 4
    %v112 = vld [vmem:[%s111] sm:$0x3]
    %v113 = vlaneseq
    %v114 = vshrl.u32 %v113, 7
    %vm116 = vcmp.lt.s32.totalorder %v114, 2
    %v117 = vsel %vm116, %v112, %v13
    %v118 = vlaneseq
    %v119 = vand.u32 %v118, 127
    %vm121 = vcmp.lt.s32.totalorder %v119, 6
    %v122 = vsel %vm121, %v117, %v13
    %s123 = scalar_lea.vmem [#allocation14], 16
    %s125 = ssub.s32 256, 1
    %126 = vst [vmem:[%s123] sm:%s125] %v122
    %s127 = scalar_lea.vmem %s6, 6
    %v128 = vld [vmem:[%s127] sm:$0x3]
    %v129 = vlaneseq
    %v130 = vshrl.u32 %v129, 7
    %vm132 = vcmp.lt.s32.totalorder %v130, 2
    %v133 = vsel %vm132, %v128, %v13
    %v134 = vlaneseq
    %v135 = vand.u32 %v134, 127
    %vm137 = vcmp.lt.s32.totalorder %v135, 6
    %v138 = vsel %vm137, %v133, %v13
    %s139 = scalar_lea.vmem [#allocation14], 24
    %s141 = ssub.s32 256, 1
    %142 = vst [vmem:[%s139] sm:%s141] %v138
    %s143 = scalar_lea.vmem %s6, 8
    %v144 = vld [vmem:[%s143] sm:$0x3]
    %v145 = vlaneseq
    %v146 = vshrl.u32 %v145, 7
    %vm148 = vcmp.lt.s32.totalorder %v146, 2
    %v149 = vsel %vm148, %v144, %v13
    %v150 = vlaneseq
    %v151 = vand.u32 %v150, 127
    %vm153 = vcmp.lt.s32.totalorder %v151, 6
    %v154 = vsel %vm153, %v149, %v13
    %s155 = scalar_lea.vmem [#allocation14], 32
    %s157 = ssub.s32 256, 1
    %158 = vst [vmem:[%s155] sm:%s157] %v154
    %s159 = scalar_lea.vmem %s6, 10
    %v160 = vld [vmem:[%s159] sm:$0x3]
    %v161 = vlaneseq
    %v162 = vshrl.u32 %v161, 7
    %vm164 = vcmp.lt.s32.totalorder %v162, 2
    %v165 = vsel %vm164, %v160, %v13
    %v166 = vlaneseq
    %v167 = vand.u32 %v166, 127
    %vm169 = vcmp.lt.s32.totalorder %v167, 6
    %v170 = vsel %vm169, %v165, %v13
    %s171 = scalar_lea.vmem [#allocation14], 40
    %s173 = ssub.s32 256, 1
    %174 = vst [vmem:[%s171] sm:%s173] %v170
    %s175 = scalar_lea.vmem %s6, 12
    %v176 = vld [vmem:[%s175] sm:$0x3]
    %v177 = vlaneseq
    %v178 = vshrl.u32 %v177, 7
    %vm180 = vcmp.lt.s32.totalorder %v178, 2
    %v181 = vsel %vm180, %v176, %v13
    %v182 = vlaneseq
    %v183 = vand.u32 %v182, 127
    %vm185 = vcmp.lt.s32.totalorder %v183, 6
    %v186 = vsel %vm185, %v181, %v13
    %s187 = scalar_lea.vmem [#allocation14], 48
    %s189 = ssub.s32 256, 1
    %190 = vst [vmem:[%s187] sm:%s189] %v186
    %s191 = scalar_lea.vmem %s6, 14
    %v192 = vld [vmem:[%s191] sm:$0x3]
    %v193 = vlaneseq
    %v194 = vshrl.u32 %v193, 7
    %vm196 = vcmp.lt.s32.totalorder %v194, 2
    %v197 = vsel %vm196, %v192, %v13
    %v198 = vlaneseq
    %v199 = vand.u32 %v198, 127
    %vm201 = vcmp.lt.s32.totalorder %v199, 6
    %v202 = vsel %vm201, %v197, %v13
    %s203 = scalar_lea.vmem [#allocation14], 56
    %s205 = ssub.s32 256, 1
    %206 = vst [vmem:[%s203] sm:%s205] %v202
    %v207 = vld [vmem:[#allocation7] sm:$0x3f]
    %v208 = vld [vmem:[#allocation7 + $0x8] sm:$0x3f]
    %v209 = vld [vmem:[#allocation7 + $0x10] sm:$0x3f]
    %v210 = vld [vmem:[#allocation7 + $0x18] sm:$0x3f]
    %v211 = vld [vmem:[#allocation9] sm:$0xff]
    %v212 = vld [vmem:[#allocation9 + $0x8] sm:$0xff]
    %v213 = vld [vmem:[#allocation9 + $0x10] sm:$0xff]
    %v214 = vld [vmem:[#allocation9 + $0x18] sm:$0xff]
    %v215 = vld [vmem:[#allocation9 + $0x20] sm:$0xff]
    %v216 = vld [vmem:[#allocation9 + $0x28] sm:$0xff]
    %v217 = vld [vmem:[#allocation9 + $0x30] sm:$0xff]
    %v218 = vld [vmem:[#allocation9 + $0x38] sm:$0xff]
    %v219 = vld [vmem:[#allocation9 + $0x40] sm:$0xff]
    %v220 = vld [vmem:[#allocation9 + $0x48] sm:$0xff]
    %v221 = vld [vmem:[#allocation9 + $0x50] sm:$0xff]
    %v222 = vld [vmem:[#allocation9 + $0x58] sm:$0xff]
    %v223 = vld [vmem:[#allocation9 + $0x60] sm:$0xff]
    %v224 = vld [vmem:[#allocation9 + $0x68] sm:$0xff]
    %v225 = vld [vmem:[#allocation9 + $0x70] sm:$0xff]
    %v226 = vld [vmem:[#allocation9 + $0x78] sm:$0xff]
    %v227 = vld [vmem:[#allocation9 + $0x80] sm:$0xff]
    %v228 = vld [vmem:[#allocation9 + $0x88] sm:$0xff]
    %v229 = vld [vmem:[#allocation9 + $0x90] sm:$0xff]
    %v230 = vld [vmem:[#allocation9 + $0x98] sm:$0xff]
    %v231 = vld [vmem:[#allocation9 + $0xa0] sm:$0xff]
    %v232 = vld [vmem:[#allocation9 + $0xa8] sm:$0xff]
    %v233 = vld [vmem:[#allocation9 + $0xb0] sm:$0xff]
    %v234 = vld [vmem:[#allocation9 + $0xb8] sm:$0xff]
    %v235 = vld [vmem:[#allocation9 + $0xc0] sm:$0xff]
    %v236 = vld [vmem:[#allocation9 + $0xc8] sm:$0xff]
    %v237 = vld [vmem:[#allocation9 + $0xd0] sm:$0xff]
    %v238 = vld [vmem:[#allocation9 + $0xd8] sm:$0xff]
    %v239 = vld [vmem:[#allocation9 + $0xe0] sm:$0xff]
    %v240 = vld [vmem:[#allocation9 + $0xe8] sm:$0xff]
    %v241 = vld [vmem:[#allocation9 + $0xf0] sm:$0xff]
    %v242 = vld [vmem:[#allocation9 + $0xf8] sm:$0xff]
    %v243 = vld [vmem:[#allocation9 + $0x100] sm:$0xff]
    %v244 = vld [vmem:[#allocation9 + $0x108] sm:$0xff]
    %v245 = vld [vmem:[#allocation9 + $0x110] sm:$0xff]
    %v246 = vld [vmem:[#allocation9 + $0x118] sm:$0xff]
    %v247 = vld [vmem:[#allocation9 + $0x120] sm:$0xff]
    %v248 = vld [vmem:[#allocation9 + $0x128] sm:$0xff]
    %v249 = vld [vmem:[#allocation9 + $0x130] sm:$0xff]
    %v250 = vld [vmem:[#allocation9 + $0x138] sm:$0xff]
    %v251 = vld [vmem:[#allocation9 + $0x140] sm:$0xff]
    %v252 = vld [vmem:[#allocation9 + $0x148] sm:$0xff]
    %v253 = vld [vmem:[#allocation9 + $0x150] sm:$0xff]
    %v254 = vld [vmem:[#allocation9 + $0x158] sm:$0xff]
    %v255 = vld [vmem:[#allocation9 + $0x160] sm:$0xff]
    %v256 = vld [vmem:[#allocation9 + $0x168] sm:$0xff]
    %v257 = vld [vmem:[#allocation9 + $0x170] sm:$0xff]
    %v258 = vld [vmem:[#allocation9 + $0x178] sm:$0xff]
    %v259 = vld [vmem:[#allocation9 + $0x180] sm:$0xff]
    %v260 = vld [vmem:[#allocation9 + $0x188] sm:$0xff]
    %v261 = vld [vmem:[#allocation9 + $0x190] sm:$0xff]
    %v262 = vld [vmem:[#allocation9 + $0x198] sm:$0xff]
    %v263 = vld [vmem:[#allocation9 + $0x1a0] sm:$0xff]
    %v264 = vld [vmem:[#allocation9 + $0x1a8] sm:$0xff]
    %v265 = vld [vmem:[#allocation9 + $0x1b0] sm:$0xff]
    %v266 = vld [vmem:[#allocation9 + $0x1b8] sm:$0xff]
    %v267 = vld [vmem:[#allocation9 + $0x1c0] sm:$0xff]
    %v268 = vld [vmem:[#allocation9 + $0x1c8] sm:$0xff]
    %v269 = vld [vmem:[#allocation9 + $0x1d0] sm:$0xff]
    %v270 = vld [vmem:[#allocation9 + $0x1d8] sm:$0xff]
    %v271 = vld [vmem:[#allocation9 + $0x1e0] sm:$0xff]
    %v272 = vld [vmem:[#allocation9 + $0x1e8] sm:$0xff]
    %v273 = vld [vmem:[#allocation9 + $0x1f0] sm:$0xff]
    %v274 = vld [vmem:[#allocation9 + $0x1f8] sm:$0xff]
    %v275 = vld [vmem:[%s2] sm:$0xf]
    %v276 = vld [vmem:[#allocation11] sm:$0xff]
    %v277 = vld [vmem:[#allocation11 + $0x8] sm:$0xff]
    %v278 = vld [vmem:[#allocation11 + $0x10] sm:$0xff]
    %v279 = vld [vmem:[#allocation11 + $0x18] sm:$0xff]
    %v280 = vld [vmem:[#allocation11 + $0x20] sm:$0xff]
    %v281 = vld [vmem:[#allocation11 + $0x28] sm:$0xff]
    %v282 = vld [vmem:[#allocation11 + $0x30] sm:$0xff]
    %v283 = vld [vmem:[#allocation11 + $0x38] sm:$0xff]
    %v284 = vld [vmem:[#allocation11 + $0x40] sm:$0xff]
    %v285 = vld [vmem:[#allocation11 + $0x48] sm:$0xff]
    %v286 = vld [vmem:[#allocation11 + $0x50] sm:$0xff]
    %v287 = vld [vmem:[#allocation11 + $0x58] sm:$0xff]
    %v288 = vld [vmem:[#allocation11 + $0x60] sm:$0xff]
    %v289 = vld [vmem:[#allocation11 + $0x68] sm:$0xff]
    %v290 = vld [vmem:[#allocation11 + $0x70] sm:$0xff]
    %v291 = vld [vmem:[#allocation11 + $0x78] sm:$0xff]
    %v292 = vld [vmem:[#allocation11 + $0x80] sm:$0xff]
    %v293 = vld [vmem:[#allocation11 + $0x88] sm:$0xff]
    %v294 = vld [vmem:[#allocation11 + $0x90] sm:$0xff]
    %v295 = vld [vmem:[#allocation11 + $0x98] sm:$0xff]
    %v296 = vld [vmem:[#allocation11 + $0xa0] sm:$0xff]
    %v297 = vld [vmem:[#allocation11 + $0xa8] sm:$0xff]
    %v298 = vld [vmem:[#allocation11 + $0xb0] sm:$0xff]
    %v299 = vld [vmem:[#allocation11 + $0xb8] sm:$0xff]
    %v300 = vld [vmem:[#allocation11 + $0xc0] sm:$0xff]
    %v301 = vld [vmem:[#allocation11 + $0xc8] sm:$0xff]
    %v302 = vld [vmem:[#allocation11 + $0xd0] sm:$0xff]
    %v303 = vld [vmem:[#allocation11 + $0xd8] sm:$0xff]
    %v304 = vld [vmem:[#allocation11 + $0xe0] sm:$0xff]
    %v305 = vld [vmem:[#allocation11 + $0xe8] sm:$0xff]
    %v306 = vld [vmem:[#allocation11 + $0xf0] sm:$0xff]
    %v307 = vld [vmem:[#allocation11 + $0xf8] sm:$0xff]
    %v308 = vld [vmem:[#allocation11 + $0x100] sm:$0xff]
    %v309 = vld [vmem:[#allocation11 + $0x108] sm:$0xff]
    %v310 = vld [vmem:[#allocation11 + $0x110] sm:$0xff]
    %v311 = vld [vmem:[#allocation11 + $0x118] sm:$0xff]
    %v312 = vld [vmem:[#allocation11 + $0x120] sm:$0xff]
    %v313 = vld [vmem:[#allocation11 + $0x128] sm:$0xff]
    %v314 = vld [vmem:[#allocation11 + $0x130] sm:$0xff]
    %v315 = vld [vmem:[#allocation11 + $0x138] sm:$0xff]
    %v316 = vld [vmem:[#allocation11 + $0x140] sm:$0xff]
    %v317 = vld [vmem:[#allocation11 + $0x148] sm:$0xff]
    %v318 = vld [vmem:[#allocation11 + $0x150] sm:$0xff]
    %v319 = vld [vmem:[#allocation11 + $0x158] sm:$0xff]
    %v320 = vld [vmem:[#allocation11 + $0x160] sm:$0xff]
    %v321 = vld [vmem:[#allocation11 + $0x168] sm:$0xff]
    %v322 = vld [vmem:[#allocation11 + $0x170] sm:$0xff]
    %v323 = vld [vmem:[#allocation11 + $0x178] sm:$0xff]
    %v324 = vld [vmem:[#allocation11 + $0x180] sm:$0xff]
    %v325 = vld [vmem:[#allocation11 + $0x188] sm:$0xff]
    %v326 = vld [vmem:[#allocation11 + $0x190] sm:$0xff]
    %v327 = vld [vmem:[#allocation11 + $0x198] sm:$0xff]
    %v328 = vld [vmem:[#allocation11 + $0x1a0] sm:$0xff]
    %v329 = vld [vmem:[#allocation11 + $0x1a8] sm:$0xff]
    %v330 = vld [vmem:[#allocation11 + $0x1b0] sm:$0xff]
    %v331 = vld [vmem:[#allocation11 + $0x1b8] sm:$0xff]
    %v332 = vld [vmem:[#allocation11 + $0x1c0] sm:$0xff]
    %v333 = vld [vmem:[#allocation11 + $0x1c8] sm:$0xff]
    %v334 = vld [vmem:[#allocation11 + $0x1d0] sm:$0xff]
    %v335 = vld [vmem:[#allocation11 + $0x1d8] sm:$0xff]
    %v336 = vld [vmem:[#allocation11 + $0x1e0] sm:$0xff]
    %v337 = vld [vmem:[#allocation11 + $0x1e8] sm:$0xff]
    %v338 = vld [vmem:[#allocation11 + $0x1f0] sm:$0xff]
    %v339 = vld [vmem:[#allocation11 + $0x1f8] sm:$0xff]
    %v340 = vld [vmem:[#allocation12] sm:$0xff]
    %v341 = vld [vmem:[#allocation12 + $0x8] sm:$0xff]
    %v342 = vld [vmem:[#allocation12 + $0x10] sm:$0xff]
    %v343 = vld [vmem:[#allocation12 + $0x18] sm:$0xff]
    %v344 = vld [vmem:[#allocation12 + $0x20] sm:$0xff]
    %v345 = vld [vmem:[#allocation12 + $0x28] sm:$0xff]
    %v346 = vld [vmem:[#allocation12 + $0x30] sm:$0xff]
    %v347 = vld [vmem:[#allocation12 + $0x38] sm:$0xff]
    %v348 = vld [vmem:[#allocation12 + $0x40] sm:$0xff]
    %v349 = vld [vmem:[#allocation12 + $0x48] sm:$0xff]
    %v350 = vld [vmem:[#allocation12 + $0x50] sm:$0xff]
    %v351 = vld [vmem:[#allocation12 + $0x58] sm:$0xff]
    %v352 = vld [vmem:[#allocation12 + $0x60] sm:$0xff]
    %v353 = vld [vmem:[#allocation12 + $0x68] sm:$0xff]
    %v354 = vld [vmem:[#allocation12 + $0x70] sm:$0xff]
    %v355 = vld [vmem:[#allocation12 + $0x78] sm:$0xff]
    %v356 = vld [vmem:[#allocation12 + $0x80] sm:$0xff]
    %v357 = vld [vmem:[#allocation12 + $0x88] sm:$0xff]
    %v358 = vld [vmem:[#allocation12 + $0x90] sm:$0xff]
    %v359 = vld [vmem:[#allocation12 + $0x98] sm:$0xff]
    %v360 = vld [vmem:[#allocation12 + $0xa0] sm:$0xff]
    %v361 = vld [vmem:[#allocation12 + $0xa8] sm:$0xff]
    %v362 = vld [vmem:[#allocation12 + $0xb0] sm:$0xff]
    %v363 = vld [vmem:[#allocation12 + $0xb8] sm:$0xff]
    %v364 = vld [vmem:[#allocation12 + $0xc0] sm:$0xff]
    %v365 = vld [vmem:[#allocation12 + $0xc8] sm:$0xff]
    %v366 = vld [vmem:[#allocation12 + $0xd0] sm:$0xff]
    %v367 = vld [vmem:[#allocation12 + $0xd8] sm:$0xff]
    %v368 = vld [vmem:[#allocation12 + $0xe0] sm:$0xff]
    %v369 = vld [vmem:[#allocation12 + $0xe8] sm:$0xff]
    %v370 = vld [vmem:[#allocation12 + $0xf0] sm:$0xff]
    %v371 = vld [vmem:[#allocation12 + $0xf8] sm:$0xff]
    %v372 = vld [vmem:[#allocation12 + $0x100] sm:$0xff]
    %v373 = vld [vmem:[#allocation12 + $0x108] sm:$0xff]
    %v374 = vld [vmem:[#allocation12 + $0x110] sm:$0xff]
    %v375 = vld [vmem:[#allocation12 + $0x118] sm:$0xff]
    %v376 = vld [vmem:[#allocation12 + $0x120] sm:$0xff]
    %v377 = vld [vmem:[#allocation12 + $0x128] sm:$0xff]
    %v378 = vld [vmem:[#allocation12 + $0x130] sm:$0xff]
    %v379 = vld [vmem:[#allocation12 + $0x138] sm:$0xff]
    %v380 = vld [vmem:[#allocation12 + $0x140] sm:$0xff]
    %v381 = vld [vmem:[#allocation12 + $0x148] sm:$0xff]
    %v382 = vld [vmem:[#allocation12 + $0x150] sm:$0xff]
    %v383 = vld [vmem:[#allocation12 + $0x158] sm:$0xff]
    %v384 = vld [vmem:[#allocation12 + $0x160] sm:$0xff]
    %v385 = vld [vmem:[#allocation12 + $0x168] sm:$0xff]
    %v386 = vld [vmem:[#allocation12 + $0x170] sm:$0xff]
    %v387 = vld [vmem:[#allocation12 + $0x178] sm:$0xff]
    %v388 = vld [vmem:[#allocation12 + $0x180] sm:$0xff]
    %v389 = vld [vmem:[#allocation12 + $0x188] sm:$0xff]
    %v390 = vld [vmem:[#allocation12 + $0x190] sm:$0xff]
    %v391 = vld [vmem:[#allocation12 + $0x198] sm:$0xff]
    %v392 = vld [vmem:[#allocation12 + $0x1a0] sm:$0xff]
    %v393 = vld [vmem:[#allocation12 + $0x1a8] sm:$0xff]
    %v394 = vld [vmem:[#allocation12 + $0x1b0] sm:$0xff]
    %v395 = vld [vmem:[#allocation12 + $0x1b8] sm:$0xff]
    %v396 = vld [vmem:[#allocation12 + $0x1c0] sm:$0xff]
    %v397 = vld [vmem:[#allocation12 + $0x1c8] sm:$0xff]
    %v398 = vld [vmem:[#allocation12 + $0x1d0] sm:$0xff]
    %v399 = vld [vmem:[#allocation12 + $0x1d8] sm:$0xff]
    %v400 = vld [vmem:[#allocation12 + $0x1e0] sm:$0xff]
    %v401 = vld [vmem:[#allocation12 + $0x1e8] sm:$0xff]
    %v402 = vld [vmem:[#allocation12 + $0x1f0] sm:$0xff]
    %v403 = vld [vmem:[#allocation12 + $0x1f8] sm:$0xff]
    %v404 = vld [vmem:[%s5] sm:$0xf]
    %v405 = vld [vmem:[#allocation14] sm:$0xff]
    %v406 = vld [vmem:[#allocation14 + $0x8] sm:$0xff]
    %v407 = vld [vmem:[#allocation14 + $0x10] sm:$0xff]
    %v408 = vld [vmem:[#allocation14 + $0x18] sm:$0xff]
    %v409 = vld [vmem:[#allocation14 + $0x20] sm:$0xff]
    %v410 = vld [vmem:[#allocation14 + $0x28] sm:$0xff]
    %v411 = vld [vmem:[#allocation14 + $0x30] sm:$0xff]
    %v412 = vld [vmem:[#allocation14 + $0x38] sm:$0xff]
    %v414 = vlaneseq
    %v415 = vshrl.u32 %v414, 7
    %v416 = vsub.s32 0, %v415
    %v417 = vrot.slane %v275, %v416
    %v418 = vlaneseq
    %v419 = vshrl.u32 %v418, 7
    %v420 = vsub.s32 1, %v419
    %v421 = vrot.slane %v275, %v420
    %v422 = vlaneseq
    %v423 = vshrl.u32 %v422, 7
    %v424 = vsub.s32 2, %v423
    %v425 = vrot.slane %v275, %v424
    %v426 = vlaneseq
    %v427 = vshrl.u32 %v426, 7
    %v428 = vsub.s32 3, %v427
    %v429 = vrot.slane %v275, %v428
    %vm434 = vcmask 48128
    %v436 = vsel %vm434, %v405, 0
    %v439 = vsel %vm434, %v406, 0
    %v442 = vsel %vm434, %v407, 0
    %v445 = vsel %vm434, %v408, 0
    %v448 = vsel %vm434, %v409, 0
    %v451 = vsel %vm434, %v410, 0
    %v454 = vsel %vm434, %v411, 0
    %v457 = vsel %vm434, %v412, 0
    %vm459 = vcmask 1045504
    %v461 = vsel %vm459, %v207, 0
    %v464 = vsel %vm459, %v208, 0
    %v467 = vsel %vm459, %v209, 0
    %v470 = vsel %vm459, %v210, 0
    %472 = vmatprep.subr.mxu0 0.0
    %473 = vmatpush1.msra.mxu0 0.0
    %474 = vmatprep.subr.mxu0 0.0
    %475 = vmatpush1.msra.mxu0 0.0
    %476 = vmatprep.subr.mxu0 0.0
    %477 = vmatpush1.msra.mxu0 0.0
    %478 = vmatprep.subr.mxu0 0.0
    %479 = vmatpush1.msra.mxu0 0.0
    %480 = vmatprep.subr.mxu0 0.0
    %481 = vmatpush1.msra.mxu0 0.0
    %482 = vmatprep.subr.mxu0 0.0
    %483 = vmatpush1.msra.mxu0 0.0
    %484 = vmatprep.subr.mxu0 0.0
    %485 = vmatpush1.msra.mxu0 0.0
    %486 = vmatprep.subr.mxu0 0.0
    %487 = vmatpush1.msra.mxu0 0.0
    %488 = vmatprep.subr.mxu0 0.0
    %489 = vmatpush1.msra.mxu0 0.0
    %490 = vmatprep.subr.mxu0 0.0
    %491 = vmatpush1.msra.mxu0 0.0
    %492 = vmatprep.subr.mxu0 0.0
    %493 = vmatpush1.msra.mxu0 0.0
    %494 = vmatprep.subr.mxu0 0.0
    %495 = vmatpush1.msra.mxu0 0.0
    %496 = vmatprep.subr.mxu0 0.0
    %497 = vmatpush1.msra.mxu0 0.0
    %498 = vmatprep.subr.mxu0 0.0
    %499 = vmatpush1.msra.mxu0 0.0
    %500 = vmatprep.subr.mxu0 0.0
    %501 = vmatpush1.msra.mxu0 0.0
    %502 = vmatprep.subr.mxu0 %v464
    %503 = vmatpush1.msra.mxu0 %v461
    %504 = vmatprep.subr.mxu0 0.0
    %505 = vmatpush2.msra.mxu0 0.0
    %506 = vmatprep.subr.mxu0 0.0
    %507 = vmatpush2.msra.mxu0 0.0
    %508 = vmatprep.subr.mxu0 0.0
    %509 = vmatpush2.msra.mxu0 0.0
    %510 = vmatprep.subr.mxu0 0.0
    %511 = vmatpush2.msra.mxu0 0.0
    %512 = vmatprep.subr.mxu0 0.0
    %513 = vmatpush2.msra.mxu0 0.0
    %514 = vmatprep.subr.mxu0 0.0
    %515 = vmatpush2.msra.mxu0 0.0
    %516 = vmatprep.subr.mxu0 0.0
    %517 = vmatpush2.msra.mxu0 0.0
    %518 = vmatprep.subr.mxu0 0.0
    %519 = vmatpush2.msra.mxu0 0.0
    %520 = vmatprep.subr.mxu0 0.0
    %521 = vmatpush2.msra.mxu0 0.0
    %522 = vmatprep.subr.mxu0 0.0
    %523 = vmatpush2.msra.mxu0 0.0
    %524 = vmatprep.subr.mxu0 0.0
    %525 = vmatpush2.msra.mxu0 0.0
    %526 = vmatprep.subr.mxu0 0.0
    %527 = vmatpush2.msra.mxu0 0.0
    %528 = vmatprep.subr.mxu0 0.0
    %529 = vmatpush2.msra.mxu0 0.0
    %530 = vmatprep.subr.mxu0 0.0
    %531 = vmatpush2.msra.mxu0 0.0
    %532 = vmatprep.subr.mxu0 0.0
    %533 = vmatpush2.msra.mxu0 0.0
    %534 = vmatprep.subr.mxu0 0.0
    %535 = vmatpush2.msra.mxu0 0.0
    %536 = vmatprep.mubr.f32.mxu0 0.0
    %537 = vmatmul.mubr.f32.gmra.mxu0 %v436
    %v538 = vpop.f32.mrf.mxu0
    %v539 = vadd.f32 %v417, %v538
    %v540 = vpop.f32.mrf.mxu0
    %v541 = vadd.f32 %v421, %v540
    %542 = vmatprep.mubr.f32.mxu0 0.0
    %543 = vmatmul.mubr.f32.gmra.mxu0 %v439
    %v544 = vpop.f32.mrf.mxu0
    %v545 = vadd.f32 %v417, %v544
    %v546 = vpop.f32.mrf.mxu0
    %v547 = vadd.f32 %v421, %v546
    %548 = vmatprep.mubr.f32.mxu0 0.0
    %549 = vmatmul.mubr.f32.gmra.mxu0 %v442
    %v550 = vpop.f32.mrf.mxu0
    %v551 = vadd.f32 %v417, %v550
    %v552 = vpop.f32.mrf.mxu0
    %v553 = vadd.f32 %v421, %v552
    %554 = vmatprep.mubr.f32.mxu0 0.0
    %555 = vmatmul.mubr.f32.gmra.mxu0 %v445
    %v556 = vpop.f32.mrf.mxu0
    %v557 = vadd.f32 %v417, %v556
    %v558 = vpop.f32.mrf.mxu0
    %v559 = vadd.f32 %v421, %v558
    %560 = vmatprep.mubr.f32.mxu0 0.0
    %561 = vmatmul.mubr.f32.gmra.mxu0 %v448
    %v562 = vpop.f32.mrf.mxu0
    %v563 = vadd.f32 %v417, %v562
    %v564 = vpop.f32.mrf.mxu0
    %v565 = vadd.f32 %v421, %v564
    %566 = vmatprep.mubr.f32.mxu0 0.0
    %567 = vmatmul.mubr.f32.gmra.mxu0 %v451
    %v568 = vpop.f32.mrf.mxu0
    %v569 = vadd.f32 %v417, %v568
    %v570 = vpop.f32.mrf.mxu0
    %v571 = vadd.f32 %v421, %v570
    %572 = vmatprep.mubr.f32.mxu0 0.0
    %573 = vmatmul.mubr.f32.gmra.mxu0 %v454
    %v574 = vpop.f32.mrf.mxu0
    %v575 = vadd.f32 %v417, %v574
    %v576 = vpop.f32.mrf.mxu0
    %v577 = vadd.f32 %v421, %v576
    %578 = vmatprep.mubr.f32.mxu0 0.0
    %579 = vmatmul.mubr.f32.gmra.mxu0 %v457
    %v580 = vpop.f32.mrf.mxu0
    %v581 = vadd.f32 %v417, %v580
    %v582 = vpop.f32.mrf.mxu0
    %v583 = vadd.f32 %v421, %v582
    %584 = vdwg.mxu0
    %585 = vmatprep.subr.mxu0 0.0
    %586 = vmatpush1.msra.mxu0 0.0
    %587 = vmatprep.subr.mxu0 0.0
    %588 = vmatpush1.msra.mxu0 0.0
    %589 = vmatprep.subr.mxu0 0.0
    %590 = vmatpush1.msra.mxu0 0.0
    %591 = vmatprep.subr.mxu0 0.0
    %592 = vmatpush1.msra.mxu0 0.0
    %593 = vmatprep.subr.mxu0 0.0
    %594 = vmatpush1.msra.mxu0 0.0
    %595 = vmatprep.subr.mxu0 0.0
    %596 = vmatpush1.msra.mxu0 0.0
    %597 = vmatprep.subr.mxu0 0.0
    %598 = vmatpush1.msra.mxu0 0.0
    %599 = vmatprep.subr.mxu0 0.0
    %600 = vmatpush1.msra.mxu0 0.0
    %601 = vmatprep.subr.mxu0 0.0
    %602 = vmatpush1.msra.mxu0 0.0
    %603 = vmatprep.subr.mxu0 0.0
    %604 = vmatpush1.msra.mxu0 0.0
    %605 = vmatprep.subr.mxu0 0.0
    %606 = vmatpush1.msra.mxu0 0.0
    %607 = vmatprep.subr.mxu0 0.0
    %608 = vmatpush1.msra.mxu0 0.0
    %609 = vmatprep.subr.mxu0 0.0
    %610 = vmatpush1.msra.mxu0 0.0
    %611 = vmatprep.subr.mxu0 0.0
    %612 = vmatpush1.msra.mxu0 0.0
    %613 = vmatprep.subr.mxu0 0.0
    %614 = vmatpush1.msra.mxu0 0.0
    %615 = vmatprep.subr.mxu0 %v470
    %616 = vmatpush1.msra.mxu0 %v467
    %617 = vmatprep.subr.mxu0 0.0
    %618 = vmatpush2.msra.mxu0 0.0
    %619 = vmatprep.subr.mxu0 0.0
    %620 = vmatpush2.msra.mxu0 0.0
    %621 = vmatprep.subr.mxu0 0.0
    %622 = vmatpush2.msra.mxu0 0.0
    %623 = vmatprep.subr.mxu0 0.0
    %624 = vmatpush2.msra.mxu0 0.0
    %625 = vmatprep.subr.mxu0 0.0
    %626 = vmatpush2.msra.mxu0 0.0
    %627 = vmatprep.subr.mxu0 0.0
    %628 = vmatpush2.msra.mxu0 0.0
    %629 = vmatprep.subr.mxu0 0.0
    %630 = vmatpush2.msra.mxu0 0.0
    %631 = vmatprep.subr.mxu0 0.0
    %632 = vmatpush2.msra.mxu0 0.0
    %633 = vmatprep.subr.mxu0 0.0
    %634 = vmatpush2.msra.mxu0 0.0
    %635 = vmatprep.subr.mxu0 0.0
    %636 = vmatpush2.msra.mxu0 0.0
    %637 = vmatprep.subr.mxu0 0.0
    %638 = vmatpush2.msra.mxu0 0.0
    %639 = vmatprep.subr.mxu0 0.0
    %640 = vmatpush2.msra.mxu0 0.0
    %641 = vmatprep.subr.mxu0 0.0
    %642 = vmatpush2.msra.mxu0 0.0
    %643 = vmatprep.subr.mxu0 0.0
    %644 = vmatpush2.msra.mxu0 0.0
    %645 = vmatprep.subr.mxu0 0.0
    %646 = vmatpush2.msra.mxu0 0.0
    %647 = vmatprep.subr.mxu0 0.0
    %648 = vmatpush2.msra.mxu0 0.0
    %649 = vmatprep.mubr.f32.mxu0 0.0
    %650 = vmatmul.mubr.f32.gmra.mxu0 %v436
    %v651 = vpop.f32.mrf.mxu0
    %v652 = vadd.f32 %v425, %v651
    %v653 = vpop.f32.mrf.mxu0
    %v654 = vadd.f32 %v429, %v653
    %655 = vmatprep.mubr.f32.mxu0 0.0
    %656 = vmatmul.mubr.f32.gmra.mxu0 %v439
    %v657 = vpop.f32.mrf.mxu0
    %v658 = vadd.f32 %v425, %v657
    %v659 = vpop.f32.mrf.mxu0
    %v660 = vadd.f32 %v429, %v659
    %661 = vmatprep.mubr.f32.mxu0 0.0
    %662 = vmatmul.mubr.f32.gmra.mxu0 %v442
    %v663 = vpop.f32.mrf.mxu0
    %v664 = vadd.f32 %v425, %v663
    %v665 = vpop.f32.mrf.mxu0
    %v666 = vadd.f32 %v429, %v665
    %667 = vmatprep.mubr.f32.mxu0 0.0
    %668 = vmatmul.mubr.f32.gmra.mxu0 %v445
    %v669 = vpop.f32.mrf.mxu0
    %v670 = vadd.f32 %v425, %v669
    %v671 = vpop.f32.mrf.mxu0
    %v672 = vadd.f32 %v429, %v671
    %673 = vmatprep.mubr.f32.mxu0 0.0
    %674 = vmatmul.mubr.f32.gmra.mxu0 %v448
    %v675 = vpop.f32.mrf.mxu0
    %v676 = vadd.f32 %v425, %v675
    %v677 = vpop.f32.mrf.mxu0
    %v678 = vadd.f32 %v429, %v677
    %679 = vmatprep.mubr.f32.mxu0 0.0
    %680 = vmatmul.mubr.f32.gmra.mxu0 %v451
    %v681 = vpop.f32.mrf.mxu0
    %v682 = vadd.f32 %v425, %v681
    %v683 = vpop.f32.mrf.mxu0
    %v684 = vadd.f32 %v429, %v683
    %685 = vmatprep.mubr.f32.mxu0 0.0
    %686 = vmatmul.mubr.f32.gmra.mxu0 %v454
    %v687 = vpop.f32.mrf.mxu0
    %v688 = vadd.f32 %v425, %v687
    %v689 = vpop.f32.mrf.mxu0
    %v690 = vadd.f32 %v429, %v689
    %691 = vmatprep.mubr.f32.mxu0 0.0
    %692 = vmatmul.mubr.f32.gmra.mxu0 %v457
    %v693 = vpop.f32.mrf.mxu0
    %v694 = vadd.f32 %v425, %v693
    %v695 = vpop.f32.mrf.mxu0
    %v696 = vadd.f32 %v429, %v695
    %697 = vdwg.mxu0
    %698 = vmatprep.subr.mxu0 %v272
    %699 = vmatpush1.msra.mxu0 %v271
    %700 = vmatprep.subr.mxu0 %v268
    %701 = vmatpush1.msra.mxu0 %v267
    %702 = vmatprep.subr.mxu0 %v264
    %703 = vmatpush1.msra.mxu0 %v263
    %704 = vmatprep.subr.mxu0 %v260
    %705 = vmatpush1.msra.mxu0 %v259
    %706 = vmatprep.subr.mxu0 %v256
    %707 = vmatpush1.msra.mxu0 %v255
    %708 = vmatprep.subr.mxu0 %v252
    %709 = vmatpush1.msra.mxu0 %v251
    %710 = vmatprep.subr.mxu0 %v248
    %711 = vmatpush1.msra.mxu0 %v247
    %712 = vmatprep.subr.mxu0 %v244
    %713 = vmatpush1.msra.mxu0 %v243
    %714 = vmatprep.subr.mxu0 %v240
    %715 = vmatpush1.msra.mxu0 %v239
    %716 = vmatprep.subr.mxu0 %v236
    %717 = vmatpush1.msra.mxu0 %v235
    %718 = vmatprep.subr.mxu0 %v232
    %719 = vmatpush1.msra.mxu0 %v231
    %720 = vmatprep.subr.mxu0 %v228
    %721 = vmatpush1.msra.mxu0 %v227
    %722 = vmatprep.subr.mxu0 %v224
    %723 = vmatpush1.msra.mxu0 %v223
    %724 = vmatprep.subr.mxu0 %v220
    %725 = vmatpush1.msra.mxu0 %v219
    %726 = vmatprep.subr.mxu0 %v216
    %727 = vmatpush1.msra.mxu0 %v215
    %728 = vmatprep.subr.mxu0 %v212
    %729 = vmatpush1.msra.mxu0 %v211
    %730 = vmatprep.subr.mxu0 0.0
    %731 = vmatpush2.msra.mxu0 0.0
    %732 = vmatprep.subr.mxu0 0.0
    %733 = vmatpush2.msra.mxu0 0.0
    %734 = vmatprep.subr.mxu0 0.0
    %735 = vmatpush2.msra.mxu0 0.0
    %736 = vmatprep.subr.mxu0 0.0
    %737 = vmatpush2.msra.mxu0 0.0
    %738 = vmatprep.subr.mxu0 0.0
    %739 = vmatpush2.msra.mxu0 0.0
    %740 = vmatprep.subr.mxu0 0.0
    %741 = vmatpush2.msra.mxu0 0.0
    %742 = vmatprep.subr.mxu0 0.0
    %743 = vmatpush2.msra.mxu0 0.0
    %744 = vmatprep.subr.mxu0 0.0
    %745 = vmatpush2.msra.mxu0 0.0
    %746 = vmatprep.subr.mxu0 0.0
    %747 = vmatpush2.msra.mxu0 0.0
    %748 = vmatprep.subr.mxu0 0.0
    %749 = vmatpush2.msra.mxu0 0.0
    %750 = vmatprep.subr.mxu0 0.0
    %751 = vmatpush2.msra.mxu0 0.0
    %752 = vmatprep.subr.mxu0 0.0
    %753 = vmatpush2.msra.mxu0 0.0
    %754 = vmatprep.subr.mxu0 0.0
    %755 = vmatpush2.msra.mxu0 0.0
    %756 = vmatprep.subr.mxu0 0.0
    %757 = vmatpush2.msra.mxu0 0.0
    %758 = vmatprep.subr.mxu0 0.0
    %759 = vmatpush2.msra.mxu0 0.0
    %760 = vmatprep.subr.mxu0 0.0
    %761 = vmatpush2.msra.mxu0 0.0
    %762 = vmatprep.mubr.f32.mxu0 0.0
    %763 = vmatmul.mubr.f32.gmra.mxu0 0.0
    %v764 = vpop.f32.mrf.mxu0
    %v765 = vadd.f32 0.0, %v764
    %v766 = vpop.f32.mrf.mxu0
    %v767 = vadd.f32 0.0, %v766
    %768 = vdwg.mxu0
    %769 = vmatprep.subr.mxu0 %v274
    %770 = vmatpush1.msra.mxu0 %v273
    %771 = vmatprep.subr.mxu0 %v270
    %772 = vmatpush1.msra.mxu0 %v269
    %773 = vmatprep.subr.mxu0 %v266
    %774 = vmatpush1.msra.mxu0 %v265
    %775 = vmatprep.subr.mxu0 %v262
    %776 = vmatpush1.msra.mxu0 %v261
    %777 = vmatprep.subr.mxu0 %v258
    %778 = vmatpush1.msra.mxu0 %v257
    %779 = vmatprep.subr.mxu0 %v254
    %780 = vmatpush1.msra.mxu0 %v253
    %781 = vmatprep.subr.mxu0 %v250
    %782 = vmatpush1.msra.mxu0 %v249
    %783 = vmatprep.subr.mxu0 %v246
    %784 = vmatpush1.msra.mxu0 %v245
    %785 = vmatprep.subr.mxu0 %v242
    %786 = vmatpush1.msra.mxu0 %v241
    %787 = vmatprep.subr.mxu0 %v238
    %788 = vmatpush1.msra.mxu0 %v237
    %789 = vmatprep.subr.mxu0 %v234
    %790 = vmatpush1.msra.mxu0 %v233
    %791 = vmatprep.subr.mxu0 %v230
    %792 = vmatpush1.msra.mxu0 %v229
    %793 = vmatprep.subr.mxu0 %v226
    %794 = vmatpush1.msra.mxu0 %v225
    %795 = vmatprep.subr.mxu0 %v222
    %796 = vmatpush1.msra.mxu0 %v221
    %797 = vmatprep.subr.mxu0 %v218
    %798 = vmatpush1.msra.mxu0 %v217
    %799 = vmatprep.subr.mxu0 %v214
    %800 = vmatpush1.msra.mxu0 %v213
    %801 = vmatprep.subr.mxu0 0.0
    %802 = vmatpush2.msra.mxu0 0.0
    %803 = vmatprep.subr.mxu0 0.0
    %804 = vmatpush2.msra.mxu0 0.0
    %805 = vmatprep.subr.mxu0 0.0
    %806 = vmatpush2.msra.mxu0 0.0
    %807 = vmatprep.subr.mxu0 0.0
    %808 = vmatpush2.msra.mxu0 0.0
    %809 = vmatprep.subr.mxu0 0.0
    %810 = vmatpush2.msra.mxu0 0.0
    %811 = vmatprep.subr.mxu0 0.0
    %812 = vmatpush2.msra.mxu0 0.0
    %813 = vmatprep.subr.mxu0 0.0
    %814 = vmatpush2.msra.mxu0 0.0
    %815 = vmatprep.subr.mxu0 0.0
    %816 = vmatpush2.msra.mxu0 0.0
    %817 = vmatprep.subr.mxu0 0.0
    %818 = vmatpush2.msra.mxu0 0.0
    %819 = vmatprep.subr.mxu0 0.0
    %820 = vmatpush2.msra.mxu0 0.0
    %821 = vmatprep.subr.mxu0 0.0
    %822 = vmatpush2.msra.mxu0 0.0
    %823 = vmatprep.subr.mxu0 0.0
    %824 = vmatpush2.msra.mxu0 0.0
    %825 = vmatprep.subr.mxu0 0.0
    %826 = vmatpush2.msra.mxu0 0.0
    %827 = vmatprep.subr.mxu0 0.0
    %828 = vmatpush2.msra.mxu0 0.0
    %829 = vmatprep.subr.mxu0 0.0
    %830 = vmatpush2.msra.mxu0 0.0
    %831 = vmatprep.subr.mxu0 0.0
    %832 = vmatpush2.msra.mxu0 0.0
    %833 = vmatprep.mubr.f32.mxu0 0.0
    %834 = vmatmul.mubr.f32.gmra.mxu0 0.0
    %v835 = vpop.f32.mrf.mxu0
    %v836 = vadd.f32 0.0, %v835
    %v837 = vpop.f32.mrf.mxu0
    %v838 = vadd.f32 0.0, %v837
    %839 = vdwg.mxu0
    %v840 = vadd.f32 %v539, %v765
    %v841 = vadd.f32 %v541, %v767
    %v842 = vadd.f32 %v652, %v836
    %v843 = vadd.f32 %v654, %v838
    %v844 = vxor.u32 %v840, 2147483648
    %v845 = vxor.u32 %v841, 2147483648
    %v846 = vxor.u32 %v842, 2147483648
    %v847 = vmul.f32 %v844, 1.442695
    %v848 = vpow.pop %v847
    %v849 = vmul.f32 %v845, 1.442695
    %v850 = vpow.pop %v849
    %v851 = vmul.f32 %v846, 1.442695
    %v852 = vpow.pop %v851
    %v853 = vadd.f32 %v848, 1.0
    %v854 = vadd.f32 %v850, 1.0
    %v855 = vadd.f32 %v852, 1.0
    %v856 = vrcp.pop %v853
    %v857 = vmul.f32 1.0, %v856
    %v858 = vrcp.pop %v854
    %v859 = vmul.f32 1.0, %v858
    %v860 = vrcp.pop %v855
    %v861 = vmul.f32 1.0, %v860
    %v862 = vtanh.pop %v843
    %v863 = vmul.f32 %v859, 0.0
    %v864 = vmul.f32 %v857, %v862
    %v865 = vadd.f32 %v863, %v864
    %v866 = vtanh.pop %v865
    %v867 = vmul.f32 %v861, %v866
    %868 = vmatprep.subr.mxu0 %v272
    %869 = vmatpush1.msra.mxu0 %v271
    %870 = vmatprep.subr.mxu0 %v268
    %871 = vmatpush1.msra.mxu0 %v267
    %872 = vmatprep.subr.mxu0 %v264
    %873 = vmatpush1.msra.mxu0 %v263
    %874 = vmatprep.subr.mxu0 %v260
    %875 = vmatpush1.msra.mxu0 %v259
    %876 = vmatprep.subr.mxu0 %v256
    %877 = vmatpush1.msra.mxu0 %v255
    %878 = vmatprep.subr.mxu0 %v252
    %879 = vmatpush1.msra.mxu0 %v251
    %880 = vmatprep.subr.mxu0 %v248
    %881 = vmatpush1.msra.mxu0 %v247
    %882 = vmatprep.subr.mxu0 %v244
    %883 = vmatpush1.msra.mxu0 %v243
    %884 = vmatprep.subr.mxu0 %v240
    %885 = vmatpush1.msra.mxu0 %v239
    %886 = vmatprep.subr.mxu0 %v236
    %887 = vmatpush1.msra.mxu0 %v235
    %888 = vmatprep.subr.mxu0 %v232
    %889 = vmatpush1.msra.mxu0 %v231
    %890 = vmatprep.subr.mxu0 %v228
    %891 = vmatpush1.msra.mxu0 %v227
    %892 = vmatprep.subr.mxu0 %v224
    %893 = vmatpush1.msra.mxu0 %v223
    %894 = vmatprep.subr.mxu0 %v220
    %895 = vmatpush1.msra.mxu0 %v219
    %896 = vmatprep.subr.mxu0 %v216
    %897 = vmatpush1.msra.mxu0 %v215
    %898 = vmatprep.subr.mxu0 %v212
    %899 = vmatpush1.msra.mxu0 %v211
    %900 = vmatprep.subr.mxu0 0.0
    %901 = vmatpush2.msra.mxu0 0.0
    %902 = vmatprep.subr.mxu0 0.0
    %903 = vmatpush2.msra.mxu0 0.0
    %904 = vmatprep.subr.mxu0 0.0
    %905 = vmatpush2.msra.mxu0 0.0
    %906 = vmatprep.subr.mxu0 0.0
    %907 = vmatpush2.msra.mxu0 0.0
    %908 = vmatprep.subr.mxu0 0.0
    %909 = vmatpush2.msra.mxu0 0.0
    %910 = vmatprep.subr.mxu0 0.0
    %911 = vmatpush2.msra.mxu0 0.0
    %912 = vmatprep.subr.mxu0 0.0
    %913 = vmatpush2.msra.mxu0 0.0
    %914 = vmatprep.subr.mxu0 0.0
    %915 = vmatpush2.msra.mxu0 0.0
    %916 = vmatprep.subr.mxu0 0.0
    %917 = vmatpush2.msra.mxu0 0.0
    %918 = vmatprep.subr.mxu0 0.0
    %919 = vmatpush2.msra.mxu0 0.0
    %920 = vmatprep.subr.mxu0 0.0
    %921 = vmatpush2.msra.mxu0 0.0
    %922 = vmatprep.subr.mxu0 0.0
    %923 = vmatpush2.msra.mxu0 0.0
    %924 = vmatprep.subr.mxu0 0.0
    %925 = vmatpush2.msra.mxu0 0.0
    %926 = vmatprep.subr.mxu0 0.0
    %927 = vmatpush2.msra.mxu0 0.0
    %928 = vmatprep.subr.mxu0 0.0
    %929 = vmatpush2.msra.mxu0 0.0
    %930 = vmatprep.subr.mxu0 0.0
    %931 = vmatpush2.msra.mxu0 0.0
    %932 = vmatprep.mubr.f32.mxu0 0.0
    %933 = vmatmul.mubr.f32.gmra.mxu0 %v867
    %v934 = vpop.f32.mrf.mxu0
    %v935 = vadd.f32 0.0, %v934
    %v936 = vpop.f32.mrf.mxu0
    %v937 = vadd.f32 0.0, %v936
    %938 = vdwg.mxu0
    %939 = vmatprep.subr.mxu0 %v274
    %940 = vmatpush1.msra.mxu0 %v273
    %941 = vmatprep.subr.mxu0 %v270
    %942 = vmatpush1.msra.mxu0 %v269
    %943 = vmatprep.subr.mxu0 %v266
    %944 = vmatpush1.msra.mxu0 %v265
    %945 = vmatprep.subr.mxu0 %v262
    %946 = vmatpush1.msra.mxu0 %v261
    %947 = vmatprep.subr.mxu0 %v258
    %948 = vmatpush1.msra.mxu0 %v257
    %949 = vmatprep.subr.mxu0 %v254
    %950 = vmatpush1.msra.mxu0 %v253
    %951 = vmatprep.subr.mxu0 %v250
    %952 = vmatpush1.msra.mxu0 %v249
    %953 = vmatprep.subr.mxu0 %v246
    %954 = vmatpush1.msra.mxu0 %v245
    %955 = vmatprep.subr.mxu0 %v242
    %956 = vmatpush1.msra.mxu0 %v241
    %957 = vmatprep.subr.mxu0 %v238
    %958 = vmatpush1.msra.mxu0 %v237
    %959 = vmatprep.subr.mxu0 %v234
    %960 = vmatpush1.msra.mxu0 %v233
    %961 = vmatprep.subr.mxu0 %v230
    %962 = vmatpush1.msra.mxu0 %v229
    %963 = vmatprep.subr.mxu0 %v226
    %964 = vmatpush1.msra.mxu0 %v225
    %965 = vmatprep.subr.mxu0 %v222
    %966 = vmatpush1.msra.mxu0 %v221
    %967 = vmatprep.subr.mxu0 %v218
    %968 = vmatpush1.msra.mxu0 %v217
    %969 = vmatprep.subr.mxu0 %v214
    %970 = vmatpush1.msra.mxu0 %v213
    %971 = vmatprep.subr.mxu0 0.0
    %972 = vmatpush2.msra.mxu0 0.0
    %973 = vmatprep.subr.mxu0 0.0
    %974 = vmatpush2.msra.mxu0 0.0
    %975 = vmatprep.subr.mxu0 0.0
    %976 = vmatpush2.msra.mxu0 0.0
    %977 = vmatprep.subr.mxu0 0.0
    %978 = vmatpush2.msra.mxu0 0.0
    %979 = vmatprep.subr.mxu0 0.0
    %980 = vmatpush2.msra.mxu0 0.0
    %981 = vmatprep.subr.mxu0 0.0
    %982 = vmatpush2.msra.mxu0 0.0
    %983 = vmatprep.subr.mxu0 0.0
    %984 = vmatpush2.msra.mxu0 0.0
    %985 = vmatprep.subr.mxu0 0.0
    %986 = vmatpush2.msra.mxu0 0.0
    %987 = vmatprep.subr.mxu0 0.0
    %988 = vmatpush2.msra.mxu0 0.0
    %989 = vmatprep.subr.mxu0 0.0
    %990 = vmatpush2.msra.mxu0 0.0
    %991 = vmatprep.subr.mxu0 0.0
    %992 = vmatpush2.msra.mxu0 0.0
    %993 = vmatprep.subr.mxu0 0.0
    %994 = vmatpush2.msra.mxu0 0.0
    %995 = vmatprep.subr.mxu0 0.0
    %996 = vmatpush2.msra.mxu0 0.0
    %997 = vmatprep.subr.mxu0 0.0
    %998 = vmatpush2.msra.mxu0 0.0
    %999 = vmatprep.subr.mxu0 0.0
    %1000 = vmatpush2.msra.mxu0 0.0
    %1001 = vmatprep.subr.mxu0 0.0
    %1002 = vmatpush2.msra.mxu0 0.0
    %1003 = vmatprep.mubr.f32.mxu0 0.0
    %1004 = vmatmul.mubr.f32.gmra.mxu0 %v867
    %v1005 = vpop.f32.mrf.mxu0
    %v1006 = vadd.f32 0.0, %v1005
    %v1007 = vpop.f32.mrf.mxu0
    %v1008 = vadd.f32 0.0, %v1007
    %1009 = vdwg.mxu0
    %v1010 = vadd.f32 %v545, %v935
    %v1011 = vadd.f32 %v547, %v937
    %v1012 = vadd.f32 %v658, %v1006
    %v1013 = vadd.f32 %v660, %v1008
    %v1014 = vxor.u32 %v1010, 2147483648
    %v1015 = vxor.u32 %v1011, 2147483648
    %v1016 = vxor.u32 %v1012, 2147483648
    %v1017 = vmul.f32 %v1014, 1.442695
    %v1018 = vpow.pop %v1017
    %v1019 = vmul.f32 %v1015, 1.442695
    %v1020 = vpow.pop %v1019
    %v1021 = vmul.f32 %v1016, 1.442695
    %v1022 = vpow.pop %v1021
    %v1023 = vadd.f32 %v1018, 1.0
    %v1024 = vadd.f32 %v1020, 1.0
    %v1025 = vadd.f32 %v1022, 1.0
    %v1026 = vrcp.pop %v1023
    %v1027 = vmul.f32 1.0, %v1026
    %v1028 = vrcp.pop %v1024
    %v1029 = vmul.f32 1.0, %v1028
    %v1030 = vrcp.pop %v1025
    %v1031 = vmul.f32 1.0, %v1030
    %v1032 = vtanh.pop %v1013
    %v1033 = vmul.f32 %v1029, %v865
    %v1034 = vmul.f32 %v1027, %v1032
    %v1035 = vadd.f32 %v1033, %v1034
    %v1036 = vtanh.pop %v1035
    %v1037 = vmul.f32 %v1031, %v1036
    %1038 = vmatprep.subr.mxu0 %v272
    %1039 = vmatpush1.msra.mxu0 %v271
    %1040 = vmatprep.subr.mxu0 %v268
    %1041 = vmatpush1.msra.mxu0 %v267
    %1042 = vmatprep.subr.mxu0 %v264
    %1043 = vmatpush1.msra.mxu0 %v263
    %1044 = vmatprep.subr.mxu0 %v260
    %1045 = vmatpush1.msra.mxu0 %v259
    %1046 = vmatprep.subr.mxu0 %v256
    %1047 = vmatpush1.msra.mxu0 %v255
    %1048 = vmatprep.subr.mxu0 %v252
    %1049 = vmatpush1.msra.mxu0 %v251
    %1050 = vmatprep.subr.mxu0 %v248
    %1051 = vmatpush1.msra.mxu0 %v247
    %1052 = vmatprep.subr.mxu0 %v244
    %1053 = vmatpush1.msra.mxu0 %v243
    %1054 = vmatprep.subr.mxu0 %v240
    %1055 = vmatpush1.msra.mxu0 %v239
    %1056 = vmatprep.subr.mxu0 %v236
    %1057 = vmatpush1.msra.mxu0 %v235
    %1058 = vmatprep.subr.mxu0 %v232
    %1059 = vmatpush1.msra.mxu0 %v231
    %1060 = vmatprep.subr.mxu0 %v228
    %1061 = vmatpush1.msra.mxu0 %v227
    %1062 = vmatprep.subr.mxu0 %v224
    %1063 = vmatpush1.msra.mxu0 %v223
    %1064 = vmatprep.subr.mxu0 %v220
    %1065 = vmatpush1.msra.mxu0 %v219
    %1066 = vmatprep.subr.mxu0 %v216
    %1067 = vmatpush1.msra.mxu0 %v215
    %1068 = vmatprep.subr.mxu0 %v212
    %1069 = vmatpush1.msra.mxu0 %v211
    %1070 = vmatprep.subr.mxu0 0.0
    %1071 = vmatpush2.msra.mxu0 0.0
    %1072 = vmatprep.subr.mxu0 0.0
    %1073 = vmatpush2.msra.mxu0 0.0
    %1074 = vmatprep.subr.mxu0 0.0
    %1075 = vmatpush2.msra.mxu0 0.0
    %1076 = vmatprep.subr.mxu0 0.0
    %1077 = vmatpush2.msra.mxu0 0.0
    %1078 = vmatprep.subr.mxu0 0.0
    %1079 = vmatpush2.msra.mxu0 0.0
    %1080 = vmatprep.subr.mxu0 0.0
    %1081 = vmatpush2.msra.mxu0 0.0
    %1082 = vmatprep.subr.mxu0 0.0
    %1083 = vmatpush2.msra.mxu0 0.0
    %1084 = vmatprep.subr.mxu0 0.0
    %1085 = vmatpush2.msra.mxu0 0.0
    %1086 = vmatprep.subr.mxu0 0.0
    %1087 = vmatpush2.msra.mxu0 0.0
    %1088 = vmatprep.subr.mxu0 0.0
    %1089 = vmatpush2.msra.mxu0 0.0
    %1090 = vmatprep.subr.mxu0 0.0
    %1091 = vmatpush2.msra.mxu0 0.0
    %1092 = vmatprep.subr.mxu0 0.0
    %1093 = vmatpush2.msra.mxu0 0.0
    %1094 = vmatprep.subr.mxu0 0.0
    %1095 = vmatpush2.msra.mxu0 0.0
    %1096 = vmatprep.subr.mxu0 0.0
    %1097 = vmatpush2.msra.mxu0 0.0
    %1098 = vmatprep.subr.mxu0 0.0
    %1099 = vmatpush2.msra.mxu0 0.0
    %1100 = vmatprep.subr.mxu0 0.0
    %1101 = vmatpush2.msra.mxu0 0.0
    %1102 = vmatprep.mubr.f32.mxu0 0.0
    %1103 = vmatmul.mubr.f32.gmra.mxu0 %v1037
    %v1104 = vpop.f32.mrf.mxu0
    %v1105 = vadd.f32 0.0, %v1104
    %v1106 = vpop.f32.mrf.mxu0
    %v1107 = vadd.f32 0.0, %v1106
    %1108 = vdwg.mxu0
    %1109 = vmatprep.subr.mxu0 %v274
    %1110 = vmatpush1.msra.mxu0 %v273
    %1111 = vmatprep.subr.mxu0 %v270
    %1112 = vmatpush1.msra.mxu0 %v269
    %1113 = vmatprep.subr.mxu0 %v266
    %1114 = vmatpush1.msra.mxu0 %v265
    %1115 = vmatprep.subr.mxu0 %v262
    %1116 = vmatpush1.msra.mxu0 %v261
    %1117 = vmatprep.subr.mxu0 %v258
    %1118 = vmatpush1.msra.mxu0 %v257
    %1119 = vmatprep.subr.mxu0 %v254
    %1120 = vmatpush1.msra.mxu0 %v253
    %1121 = vmatprep.subr.mxu0 %v250
    %1122 = vmatpush1.msra.mxu0 %v249
    %1123 = vmatprep.subr.mxu0 %v246
    %1124 = vmatpush1.msra.mxu0 %v245
    %1125 = vmatprep.subr.mxu0 %v242
    %1126 = vmatpush1.msra.mxu0 %v241
    %1127 = vmatprep.subr.mxu0 %v238
    %1128 = vmatpush1.msra.mxu0 %v237
    %1129 = vmatprep.subr.mxu0 %v234
    %1130 = vmatpush1.msra.mxu0 %v233
    %1131 = vmatprep.subr.mxu0 %v230
    %1132 = vmatpush1.msra.mxu0 %v229
    %1133 = vmatprep.subr.mxu0 %v226
    %1134 = vmatpush1.msra.mxu0 %v225
    %1135 = vmatprep.subr.mxu0 %v222
    %1136 = vmatpush1.msra.mxu0 %v221
    %1137 = vmatprep.subr.mxu0 %v218
    %1138 = vmatpush1.msra.mxu0 %v217
    %1139 = vmatprep.subr.mxu0 %v214
    %1140 = vmatpush1.msra.mxu0 %v213
    %1141 = vmatprep.subr.mxu0 0.0
    %1142 = vmatpush2.msra.mxu0 0.0
    %1143 = vmatprep.subr.mxu0 0.0
    %1144 = vmatpush2.msra.mxu0 0.0
    %1145 = vmatprep.subr.mxu0 0.0
    %1146 = vmatpush2.msra.mxu0 0.0
    %1147 = vmatprep.subr.mxu0 0.0
    %1148 = vmatpush2.msra.mxu0 0.0
    %1149 = vmatprep.subr.mxu0 0.0
    %1150 = vmatpush2.msra.mxu0 0.0
    %1151 = vmatprep.subr.mxu0 0.0
    %1152 = vmatpush2.msra.mxu0 0.0
    %1153 = vmatprep.subr.mxu0 0.0
    %1154 = vmatpush2.msra.mxu0 0.0
    %1155 = vmatprep.subr.mxu0 0.0
    %1156 = vmatpush2.msra.mxu0 0.0
    %1157 = vmatprep.subr.mxu0 0.0
    %1158 = vmatpush2.msra.mxu0 0.0
    %1159 = vmatprep.subr.mxu0 0.0
    %1160 = vmatpush2.msra.mxu0 0.0
    %1161 = vmatprep.subr.mxu0 0.0
    %1162 = vmatpush2.msra.mxu0 0.0
    %1163 = vmatprep.subr.mxu0 0.0
    %1164 = vmatpush2.msra.mxu0 0.0
    %1165 = vmatprep.subr.mxu0 0.0
    %1166 = vmatpush2.msra.mxu0 0.0
    %1167 = vmatprep.subr.mxu0 0.0
    %1168 = vmatpush2.msra.mxu0 0.0
    %1169 = vmatprep.subr.mxu0 0.0
    %1170 = vmatpush2.msra.mxu0 0.0
    %1171 = vmatprep.subr.mxu0 0.0
    %1172 = vmatpush2.msra.mxu0 0.0
    %1173 = vmatprep.mubr.f32.mxu0 0.0
    %1174 = vmatmul.mubr.f32.gmra.mxu0 %v1037
    %v1175 = vpop.f32.mrf.mxu0
    %v1176 = vadd.f32 0.0, %v1175
    %v1177 = vpop.f32.mrf.mxu0
    %v1178 = vadd.f32 0.0, %v1177
    %1179 = vdwg.mxu0
    %v1180 = vadd.f32 %v551, %v1105
    %v1181 = vadd.f32 %v553, %v1107
    %v1182 = vadd.f32 %v664, %v1176
    %v1183 = vadd.f32 %v666, %v1178
    %v1184 = vxor.u32 %v1180, 2147483648
    %v1185 = vxor.u32 %v1181, 2147483648
    %v1186 = vxor.u32 %v1182, 2147483648
    %v1187 = vmul.f32 %v1184, 1.442695
    %v1188 = vpow.pop %v1187
    %v1189 = vmul.f32 %v1185, 1.442695
    %v1190 = vpow.pop %v1189
    %v1191 = vmul.f32 %v1186, 1.442695
    %v1192 = vpow.pop %v1191
    %v1193 = vadd.f32 %v1188, 1.0
    %v1194 = vadd.f32 %v1190, 1.0
    %v1195 = vadd.f32 %v1192, 1.0
    %v1196 = vrcp.pop %v1193
    %v1197 = vmul.f32 1.0, %v1196
    %v1198 = vrcp.pop %v1194
    %v1199 = vmul.f32 1.0, %v1198
    %v1200 = vrcp.pop %v1195
    %v1201 = vmul.f32 1.0, %v1200
    %v1202 = vtanh.pop %v1183
    %v1203 = vmul.f32 %v1199, %v1035
    %v1204 = vmul.f32 %v1197, %v1202
    %v1205 = vadd.f32 %v1203, %v1204
    %v1206 = vtanh.pop %v1205
    %v1207 = vmul.f32 %v1201, %v1206
    %1208 = vmatprep.subr.mxu0 %v272
    %1209 = vmatpush1.msra.mxu0 %v271
    %1210 = vmatprep.subr.mxu0 %v268
    %1211 = vmatpush1.msra.mxu0 %v267
    %1212 = vmatprep.subr.mxu0 %v264
    %1213 = vmatpush1.msra.mxu0 %v263
    %1214 = vmatprep.subr.mxu0 %v260
    %1215 = vmatpush1.msra.mxu0 %v259
    %1216 = vmatprep.subr.mxu0 %v256
    %1217 = vmatpush1.msra.mxu0 %v255
    %1218 = vmatprep.subr.mxu0 %v252
    %1219 = vmatpush1.msra.mxu0 %v251
    %1220 = vmatprep.subr.mxu0 %v248
    %1221 = vmatpush1.msra.mxu0 %v247
    %1222 = vmatprep.subr.mxu0 %v244
    %1223 = vmatpush1.msra.mxu0 %v243
    %1224 = vmatprep.subr.mxu0 %v240
    %1225 = vmatpush1.msra.mxu0 %v239
    %1226 = vmatprep.subr.mxu0 %v236
    %1227 = vmatpush1.msra.mxu0 %v235
    %1228 = vmatprep.subr.mxu0 %v232
    %1229 = vmatpush1.msra.mxu0 %v231
    %1230 = vmatprep.subr.mxu0 %v228
    %1231 = vmatpush1.msra.mxu0 %v227
    %1232 = vmatprep.subr.mxu0 %v224
    %1233 = vmatpush1.msra.mxu0 %v223
    %1234 = vmatprep.subr.mxu0 %v220
    %1235 = vmatpush1.msra.mxu0 %v219
    %1236 = vmatprep.subr.mxu0 %v216
    %1237 = vmatpush1.msra.mxu0 %v215
    %1238 = vmatprep.subr.mxu0 %v212
    %1239 = vmatpush1.msra.mxu0 %v211
    %1240 = vmatprep.subr.mxu0 0.0
    %1241 = vmatpush2.msra.mxu0 0.0
    %1242 = vmatprep.subr.mxu0 0.0
    %1243 = vmatpush2.msra.mxu0 0.0
    %1244 = vmatprep.subr.mxu0 0.0
    %1245 = vmatpush2.msra.mxu0 0.0
    %1246 = vmatprep.subr.mxu0 0.0
    %1247 = vmatpush2.msra.mxu0 0.0
    %1248 = vmatprep.subr.mxu0 0.0
    %1249 = vmatpush2.msra.mxu0 0.0
    %1250 = vmatprep.subr.mxu0 0.0
    %1251 = vmatpush2.msra.mxu0 0.0
    %1252 = vmatprep.subr.mxu0 0.0
    %1253 = vmatpush2.msra.mxu0 0.0
    %1254 = vmatprep.subr.mxu0 0.0
    %1255 = vmatpush2.msra.mxu0 0.0
    %1256 = vmatprep.subr.mxu0 0.0
    %1257 = vmatpush2.msra.mxu0 0.0
    %1258 = vmatprep.subr.mxu0 0.0
    %1259 = vmatpush2.msra.mxu0 0.0
    %1260 = vmatprep.subr.mxu0 0.0
    %1261 = vmatpush2.msra.mxu0 0.0
    %1262 = vmatprep.subr.mxu0 0.0
    %1263 = vmatpush2.msra.mxu0 0.0
    %1264 = vmatprep.subr.mxu0 0.0
    %1265 = vmatpush2.msra.mxu0 0.0
    %1266 = vmatprep.subr.mxu0 0.0
    %1267 = vmatpush2.msra.mxu0 0.0
    %1268 = vmatprep.subr.mxu0 0.0
    %1269 = vmatpush2.msra.mxu0 0.0
    %1270 = vmatprep.subr.mxu0 0.0
    %1271 = vmatpush2.msra.mxu0 0.0
    %1272 = vmatprep.mubr.f32.mxu0 0.0
    %1273 = vmatmul.mubr.f32.gmra.mxu0 %v1207
    %v1274 = vpop.f32.mrf.mxu0
    %v1275 = vadd.f32 0.0, %v1274
    %v1276 = vpop.f32.mrf.mxu0
    %v1277 = vadd.f32 0.0, %v1276
    %1278 = vdwg.mxu0
    %1279 = vmatprep.subr.mxu0 %v274
    %1280 = vmatpush1.msra.mxu0 %v273
    %1281 = vmatprep.subr.mxu0 %v270
    %1282 = vmatpush1.msra.mxu0 %v269
    %1283 = vmatprep.subr.mxu0 %v266
    %1284 = vmatpush1.msra.mxu0 %v265
    %1285 = vmatprep.subr.mxu0 %v262
    %1286 = vmatpush1.msra.mxu0 %v261
    %1287 = vmatprep.subr.mxu0 %v258
    %1288 = vmatpush1.msra.mxu0 %v257
    %1289 = vmatprep.subr.mxu0 %v254
    %1290 = vmatpush1.msra.mxu0 %v253
    %1291 = vmatprep.subr.mxu0 %v250
    %1292 = vmatpush1.msra.mxu0 %v249
    %1293 = vmatprep.subr.mxu0 %v246
    %1294 = vmatpush1.msra.mxu0 %v245
    %1295 = vmatprep.subr.mxu0 %v242
    %1296 = vmatpush1.msra.mxu0 %v241
    %1297 = vmatprep.subr.mxu0 %v238
    %1298 = vmatpush1.msra.mxu0 %v237
    %1299 = vmatprep.subr.mxu0 %v234
    %1300 = vmatpush1.msra.mxu0 %v233
    %1301 = vmatprep.subr.mxu0 %v230
    %1302 = vmatpush1.msra.mxu0 %v229
    %1303 = vmatprep.subr.mxu0 %v226
    %1304 = vmatpush1.msra.mxu0 %v225
    %1305 = vmatprep.subr.mxu0 %v222
    %1306 = vmatpush1.msra.mxu0 %v221
    %1307 = vmatprep.subr.mxu0 %v218
    %1308 = vmatpush1.msra.mxu0 %v217
    %1309 = vmatprep.subr.mxu0 %v214
    %1310 = vmatpush1.msra.mxu0 %v213
    %1311 = vmatprep.subr.mxu0 0.0
    %1312 = vmatpush2.msra.mxu0 0.0
    %1313 = vmatprep.subr.mxu0 0.0
    %1314 = vmatpush2.msra.mxu0 0.0
    %1315 = vmatprep.subr.mxu0 0.0
    %1316 = vmatpush2.msra.mxu0 0.0
    %1317 = vmatprep.subr.mxu0 0.0
    %1318 = vmatpush2.msra.mxu0 0.0
    %1319 = vmatprep.subr.mxu0 0.0
    %1320 = vmatpush2.msra.mxu0 0.0
    %1321 = vmatprep.subr.mxu0 0.0
    %1322 = vmatpush2.msra.mxu0 0.0
    %1323 = vmatprep.subr.mxu0 0.0
    %1324 = vmatpush2.msra.mxu0 0.0
    %1325 = vmatprep.subr.mxu0 0.0
    %1326 = vmatpush2.msra.mxu0 0.0
    %1327 = vmatprep.subr.mxu0 0.0
    %1328 = vmatpush2.msra.mxu0 0.0
    %1329 = vmatprep.subr.mxu0 0.0
    %1330 = vmatpush2.msra.mxu0 0.0
    %1331 = vmatprep.subr.mxu0 0.0
    %1332 = vmatpush2.msra.mxu0 0.0
    %1333 = vmatprep.subr.mxu0 0.0
    %1334 = vmatpush2.msra.mxu0 0.0
    %1335 = vmatprep.subr.mxu0 0.0
    %1336 = vmatpush2.msra.mxu0 0.0
    %1337 = vmatprep.subr.mxu0 0.0
    %1338 = vmatpush2.msra.mxu0 0.0
    %1339 = vmatprep.subr.mxu0 0.0
    %1340 = vmatpush2.msra.mxu0 0.0
    %1341 = vmatprep.subr.mxu0 0.0
    %1342 = vmatpush2.msra.mxu0 0.0
    %1343 = vmatprep.mubr.f32.mxu0 0.0
    %1344 = vmatmul.mubr.f32.gmra.mxu0 %v1207
    %v1345 = vpop.f32.mrf.mxu0
    %v1346 = vadd.f32 0.0, %v1345
    %v1347 = vpop.f32.mrf.mxu0
    %v1348 = vadd.f32 0.0, %v1347
    %1349 = vdwg.mxu0
    %v1350 = vadd.f32 %v557, %v1275
    %v1351 = vadd.f32 %v559, %v1277
    %v1352 = vadd.f32 %v670, %v1346
    %v1353 = vadd.f32 %v672, %v1348
    %v1354 = vxor.u32 %v1350, 2147483648
    %v1355 = vxor.u32 %v1351, 2147483648
    %v1356 = vxor.u32 %v1352, 2147483648
    %v1357 = vmul.f32 %v1354, 1.442695
    %v1358 = vpow.pop %v1357
    %v1359 = vmul.f32 %v1355, 1.442695
    %v1360 = vpow.pop %v1359
    %v1361 = vmul.f32 %v1356, 1.442695
    %v1362 = vpow.pop %v1361
    %v1363 = vadd.f32 %v1358, 1.0
    %v1364 = vadd.f32 %v1360, 1.0
    %v1365 = vadd.f32 %v1362, 1.0
    %v1366 = vrcp.pop %v1363
    %v1367 = vmul.f32 1.0, %v1366
    %v1368 = vrcp.pop %v1364
    %v1369 = vmul.f32 1.0, %v1368
    %v1370 = vrcp.pop %v1365
    %v1371 = vmul.f32 1.0, %v1370
    %v1372 = vtanh.pop %v1353
    %v1373 = vmul.f32 %v1369, %v1205
    %v1374 = vmul.f32 %v1367, %v1372
    %v1375 = vadd.f32 %v1373, %v1374
    %v1376 = vtanh.pop %v1375
    %v1377 = vmul.f32 %v1371, %v1376
    %1378 = vmatprep.subr.mxu0 %v272
    %1379 = vmatpush1.msra.mxu0 %v271
    %1380 = vmatprep.subr.mxu0 %v268
    %1381 = vmatpush1.msra.mxu0 %v267
    %1382 = vmatprep.subr.mxu0 %v264
    %1383 = vmatpush1.msra.mxu0 %v263
    %1384 = vmatprep.subr.mxu0 %v260
    %1385 = vmatpush1.msra.mxu0 %v259
    %1386 = vmatprep.subr.mxu0 %v256
    %1387 = vmatpush1.msra.mxu0 %v255
    %1388 = vmatprep.subr.mxu0 %v252
    %1389 = vmatpush1.msra.mxu0 %v251
    %1390 = vmatprep.subr.mxu0 %v248
    %1391 = vmatpush1.msra.mxu0 %v247
    %1392 = vmatprep.subr.mxu0 %v244
    %1393 = vmatpush1.msra.mxu0 %v243
    %1394 = vmatprep.subr.mxu0 %v240
    %1395 = vmatpush1.msra.mxu0 %v239
    %1396 = vmatprep.subr.mxu0 %v236
    %1397 = vmatpush1.msra.mxu0 %v235
    %1398 = vmatprep.subr.mxu0 %v232
    %1399 = vmatpush1.msra.mxu0 %v231
    %1400 = vmatprep.subr.mxu0 %v228
    %1401 = vmatpush1.msra.mxu0 %v227
    %1402 = vmatprep.subr.mxu0 %v224
    %1403 = vmatpush1.msra.mxu0 %v223
    %1404 = vmatprep.subr.mxu0 %v220
    %1405 = vmatpush1.msra.mxu0 %v219
    %1406 = vmatprep.subr.mxu0 %v216
    %1407 = vmatpush1.msra.mxu0 %v215
    %1408 = vmatprep.subr.mxu0 %v212
    %1409 = vmatpush1.msra.mxu0 %v211
    %1410 = vmatprep.subr.mxu0 0.0
    %1411 = vmatpush2.msra.mxu0 0.0
    %1412 = vmatprep.subr.mxu0 0.0
    %1413 = vmatpush2.msra.mxu0 0.0
    %1414 = vmatprep.subr.mxu0 0.0
    %1415 = vmatpush2.msra.mxu0 0.0
    %1416 = vmatprep.subr.mxu0 0.0
    %1417 = vmatpush2.msra.mxu0 0.0
    %1418 = vmatprep.subr.mxu0 0.0
    %1419 = vmatpush2.msra.mxu0 0.0
    %1420 = vmatprep.subr.mxu0 0.0
    %1421 = vmatpush2.msra.mxu0 0.0
    %1422 = vmatprep.subr.mxu0 0.0
    %1423 = vmatpush2.msra.mxu0 0.0
    %1424 = vmatprep.subr.mxu0 0.0
    %1425 = vmatpush2.msra.mxu0 0.0
    %1426 = vmatprep.subr.mxu0 0.0
    %1427 = vmatpush2.msra.mxu0 0.0
    %1428 = vmatprep.subr.mxu0 0.0
    %1429 = vmatpush2.msra.mxu0 0.0
    %1430 = vmatprep.subr.mxu0 0.0
    %1431 = vmatpush2.msra.mxu0 0.0
    %1432 = vmatprep.subr.mxu0 0.0
    %1433 = vmatpush2.msra.mxu0 0.0
    %1434 = vmatprep.subr.mxu0 0.0
    %1435 = vmatpush2.msra.mxu0 0.0
    %1436 = vmatprep.subr.mxu0 0.0
    %1437 = vmatpush2.msra.mxu0 0.0
    %1438 = vmatprep.subr.mxu0 0.0
    %1439 = vmatpush2.msra.mxu0 0.0
    %1440 = vmatprep.subr.mxu0 0.0
    %1441 = vmatpush2.msra.mxu0 0.0
    %1442 = vmatprep.mubr.f32.mxu0 0.0
    %1443 = vmatmul.mubr.f32.gmra.mxu0 %v1377
    %v1444 = vpop.f32.mrf.mxu0
    %v1445 = vadd.f32 0.0, %v1444
    %v1446 = vpop.f32.mrf.mxu0
    %v1447 = vadd.f32 0.0, %v1446
    %1448 = vdwg.mxu0
    %1449 = vmatprep.subr.mxu0 %v274
    %1450 = vmatpush1.msra.mxu0 %v273
    %1451 = vmatprep.subr.mxu0 %v270
    %1452 = vmatpush1.msra.mxu0 %v269
    %1453 = vmatprep.subr.mxu0 %v266
    %1454 = vmatpush1.msra.mxu0 %v265
    %1455 = vmatprep.subr.mxu0 %v262
    %1456 = vmatpush1.msra.mxu0 %v261
    %1457 = vmatprep.subr.mxu0 %v258
    %1458 = vmatpush1.msra.mxu0 %v257
    %1459 = vmatprep.subr.mxu0 %v254
    %1460 = vmatpush1.msra.mxu0 %v253
    %1461 = vmatprep.subr.mxu0 %v250
    %1462 = vmatpush1.msra.mxu0 %v249
    %1463 = vmatprep.subr.mxu0 %v246
    %1464 = vmatpush1.msra.mxu0 %v245
    %1465 = vmatprep.subr.mxu0 %v242
    %1466 = vmatpush1.msra.mxu0 %v241
    %1467 = vmatprep.subr.mxu0 %v238
    %1468 = vmatpush1.msra.mxu0 %v237
    %1469 = vmatprep.subr.mxu0 %v234
    %1470 = vmatpush1.msra.mxu0 %v233
    %1471 = vmatprep.subr.mxu0 %v230
    %1472 = vmatpush1.msra.mxu0 %v229
    %1473 = vmatprep.subr.mxu0 %v226
    %1474 = vmatpush1.msra.mxu0 %v225
    %1475 = vmatprep.subr.mxu0 %v222
    %1476 = vmatpush1.msra.mxu0 %v221
    %1477 = vmatprep.subr.mxu0 %v218
    %1478 = vmatpush1.msra.mxu0 %v217
    %1479 = vmatprep.subr.mxu0 %v214
    %1480 = vmatpush1.msra.mxu0 %v213
    %1481 = vmatprep.subr.mxu0 0.0
    %1482 = vmatpush2.msra.mxu0 0.0
    %1483 = vmatprep.subr.mxu0 0.0
    %1484 = vmatpush2.msra.mxu0 0.0
    %1485 = vmatprep.subr.mxu0 0.0
    %1486 = vmatpush2.msra.mxu0 0.0
    %1487 = vmatprep.subr.mxu0 0.0
    %1488 = vmatpush2.msra.mxu0 0.0
    %1489 = vmatprep.subr.mxu0 0.0
    %1490 = vmatpush2.msra.mxu0 0.0
    %1491 = vmatprep.subr.mxu0 0.0
    %1492 = vmatpush2.msra.mxu0 0.0
    %1493 = vmatprep.subr.mxu0 0.0
    %1494 = vmatpush2.msra.mxu0 0.0
    %1495 = vmatprep.subr.mxu0 0.0
    %1496 = vmatpush2.msra.mxu0 0.0
    %1497 = vmatprep.subr.mxu0 0.0
    %1498 = vmatpush2.msra.mxu0 0.0
    %1499 = vmatprep.subr.mxu0 0.0
    %1500 = vmatpush2.msra.mxu0 0.0
    %1501 = vmatprep.subr.mxu0 0.0
    %1502 = vmatpush2.msra.mxu0 0.0
    %1503 = vmatprep.subr.mxu0 0.0
    %1504 = vmatpush2.msra.mxu0 0.0
    %1505 = vmatprep.subr.mxu0 0.0
    %1506 = vmatpush2.msra.mxu0 0.0
    %1507 = vmatprep.subr.mxu0 0.0
    %1508 = vmatpush2.msra.mxu0 0.0
    %1509 = vmatprep.subr.mxu0 0.0
    %1510 = vmatpush2.msra.mxu0 0.0
    %1511 = vmatprep.subr.mxu0 0.0
    %1512 = vmatpush2.msra.mxu0 0.0
    %1513 = vmatprep.mubr.f32.mxu0 0.0
    %1514 = vmatmul.mubr.f32.gmra.mxu0 %v1377
    %v1515 = vpop.f32.mrf.mxu0
    %v1516 = vadd.f32 0.0, %v1515
    %v1517 = vpop.f32.mrf.mxu0
    %v1518 = vadd.f32 0.0, %v1517
    %1519 = vdwg.mxu0
    %v1520 = vadd.f32 %v563, %v1445
    %v1521 = vadd.f32 %v565, %v1447
    %v1522 = vadd.f32 %v676, %v1516
    %v1523 = vadd.f32 %v678, %v1518
    %v1524 = vxor.u32 %v1520, 2147483648
    %v1525 = vxor.u32 %v1521, 2147483648
    %v1526 = vxor.u32 %v1522, 2147483648
    %v1527 = vmul.f32 %v1524, 1.442695
    %v1528 = vpow.pop %v1527
    %v1529 = vmul.f32 %v1525, 1.442695
    %v1530 = vpow.pop %v1529
    %v1531 = vmul.f32 %v1526, 1.442695
    %v1532 = vpow.pop %v1531
    %v1533 = vadd.f32 %v1528, 1.0
    %v1534 = vadd.f32 %v1530, 1.0
    %v1535 = vadd.f32 %v1532, 1.0
    %v1536 = vrcp.pop %v1533
    %v1537 = vmul.f32 1.0, %v1536
    %v1538 = vrcp.pop %v1534
    %v1539 = vmul.f32 1.0, %v1538
    %v1540 = vrcp.pop %v1535
    %v1541 = vmul.f32 1.0, %v1540
    %v1542 = vtanh.pop %v1523
    %v1543 = vmul.f32 %v1539, %v1375
    %v1544 = vmul.f32 %v1537, %v1542
    %v1545 = vadd.f32 %v1543, %v1544
    %v1546 = vtanh.pop %v1545
    %v1547 = vmul.f32 %v1541, %v1546
    %1548 = vmatprep.subr.mxu0 %v272
    %1549 = vmatpush1.msra.mxu0 %v271
    %1550 = vmatprep.subr.mxu0 %v268
    %1551 = vmatpush1.msra.mxu0 %v267
    %1552 = vmatprep.subr.mxu0 %v264
    %1553 = vmatpush1.msra.mxu0 %v263
    %1554 = vmatprep.subr.mxu0 %v260
    %1555 = vmatpush1.msra.mxu0 %v259
    %1556 = vmatprep.subr.mxu0 %v256
    %1557 = vmatpush1.msra.mxu0 %v255
    %1558 = vmatprep.subr.mxu0 %v252
    %1559 = vmatpush1.msra.mxu0 %v251
    %1560 = vmatprep.subr.mxu0 %v248
    %1561 = vmatpush1.msra.mxu0 %v247
    %1562 = vmatprep.subr.mxu0 %v244
    %1563 = vmatpush1.msra.mxu0 %v243
    %1564 = vmatprep.subr.mxu0 %v240
    %1565 = vmatpush1.msra.mxu0 %v239
    %1566 = vmatprep.subr.mxu0 %v236
    %1567 = vmatpush1.msra.mxu0 %v235
    %1568 = vmatprep.subr.mxu0 %v232
    %1569 = vmatpush1.msra.mxu0 %v231
    %1570 = vmatprep.subr.mxu0 %v228
    %1571 = vmatpush1.msra.mxu0 %v227
    %1572 = vmatprep.subr.mxu0 %v224
    %1573 = vmatpush1.msra.mxu0 %v223
    %1574 = vmatprep.subr.mxu0 %v220
    %1575 = vmatpush1.msra.mxu0 %v219
    %1576 = vmatprep.subr.mxu0 %v216
    %1577 = vmatpush1.msra.mxu0 %v215
    %1578 = vmatprep.subr.mxu0 %v212
    %1579 = vmatpush1.msra.mxu0 %v211
    %1580 = vmatprep.subr.mxu0 0.0
    %1581 = vmatpush2.msra.mxu0 0.0
    %1582 = vmatprep.subr.mxu0 0.0
    %1583 = vmatpush2.msra.mxu0 0.0
    %1584 = vmatprep.subr.mxu0 0.0
    %1585 = vmatpush2.msra.mxu0 0.0
    %1586 = vmatprep.subr.mxu0 0.0
    %1587 = vmatpush2.msra.mxu0 0.0
    %1588 = vmatprep.subr.mxu0 0.0
    %1589 = vmatpush2.msra.mxu0 0.0
    %1590 = vmatprep.subr.mxu0 0.0
    %1591 = vmatpush2.msra.mxu0 0.0
    %1592 = vmatprep.subr.mxu0 0.0
    %1593 = vmatpush2.msra.mxu0 0.0
    %1594 = vmatprep.subr.mxu0 0.0
    %1595 = vmatpush2.msra.mxu0 0.0
    %1596 = vmatprep.subr.mxu0 0.0
    %1597 = vmatpush2.msra.mxu0 0.0
    %1598 = vmatprep.subr.mxu0 0.0
    %1599 = vmatpush2.msra.mxu0 0.0
    %1600 = vmatprep.subr.mxu0 0.0
    %1601 = vmatpush2.msra.mxu0 0.0
    %1602 = vmatprep.subr.mxu0 0.0
    %1603 = vmatpush2.msra.mxu0 0.0
    %1604 = vmatprep.subr.mxu0 0.0
    %1605 = vmatpush2.msra.mxu0 0.0
    %1606 = vmatprep.subr.mxu0 0.0
    %1607 = vmatpush2.msra.mxu0 0.0
    %1608 = vmatprep.subr.mxu0 0.0
    %1609 = vmatpush2.msra.mxu0 0.0
    %1610 = vmatprep.subr.mxu0 0.0
    %1611 = vmatpush2.msra.mxu0 0.0
    %1612 = vmatprep.mubr.f32.mxu0 0.0
    %1613 = vmatmul.mubr.f32.gmra.mxu0 %v1547
    %v1614 = vpop.f32.mrf.mxu0
    %v1615 = vadd.f32 0.0, %v1614
    %v1616 = vpop.f32.mrf.mxu0
    %v1617 = vadd.f32 0.0, %v1616
    %1618 = vdwg.mxu0
    %1619 = vmatprep.subr.mxu0 %v274
    %1620 = vmatpush1.msra.mxu0 %v273
    %1621 = vmatprep.subr.mxu0 %v270
    %1622 = vmatpush1.msra.mxu0 %v269
    %1623 = vmatprep.subr.mxu0 %v266
    %1624 = vmatpush1.msra.mxu0 %v265
    %1625 = vmatprep.subr.mxu0 %v262
    %1626 = vmatpush1.msra.mxu0 %v261
    %1627 = vmatprep.subr.mxu0 %v258
    %1628 = vmatpush1.msra.mxu0 %v257
    %1629 = vmatprep.subr.mxu0 %v254
    %1630 = vmatpush1.msra.mxu0 %v253
    %1631 = vmatprep.subr.mxu0 %v250
    %1632 = vmatpush1.msra.mxu0 %v249
    %1633 = vmatprep.subr.mxu0 %v246
    %1634 = vmatpush1.msra.mxu0 %v245
    %1635 = vmatprep.subr.mxu0 %v242
    %1636 = vmatpush1.msra.mxu0 %v241
    %1637 = vmatprep.subr.mxu0 %v238
    %1638 = vmatpush1.msra.mxu0 %v237
    %1639 = vmatprep.subr.mxu0 %v234
    %1640 = vmatpush1.msra.mxu0 %v233
    %1641 = vmatprep.subr.mxu0 %v230
    %1642 = vmatpush1.msra.mxu0 %v229
    %1643 = vmatprep.subr.mxu0 %v226
    %1644 = vmatpush1.msra.mxu0 %v225
    %1645 = vmatprep.subr.mxu0 %v222
    %1646 = vmatpush1.msra.mxu0 %v221
    %1647 = vmatprep.subr.mxu0 %v218
    %1648 = vmatpush1.msra.mxu0 %v217
    %1649 = vmatprep.subr.mxu0 %v214
    %1650 = vmatpush1.msra.mxu0 %v213
    %1651 = vmatprep.subr.mxu0 0.0
    %1652 = vmatpush2.msra.mxu0 0.0
    %1653 = vmatprep.subr.mxu0 0.0
    %1654 = vmatpush2.msra.mxu0 0.0
    %1655 = vmatprep.subr.mxu0 0.0
    %1656 = vmatpush2.msra.mxu0 0.0
    %1657 = vmatprep.subr.mxu0 0.0
    %1658 = vmatpush2.msra.mxu0 0.0
    %1659 = vmatprep.subr.mxu0 0.0
    %1660 = vmatpush2.msra.mxu0 0.0
    %1661 = vmatprep.subr.mxu0 0.0
    %1662 = vmatpush2.msra.mxu0 0.0
    %1663 = vmatprep.subr.mxu0 0.0
    %1664 = vmatpush2.msra.mxu0 0.0
    %1665 = vmatprep.subr.mxu0 0.0
    %1666 = vmatpush2.msra.mxu0 0.0
    %1667 = vmatprep.subr.mxu0 0.0
    %1668 = vmatpush2.msra.mxu0 0.0
    %1669 = vmatprep.subr.mxu0 0.0
    %1670 = vmatpush2.msra.mxu0 0.0
    %1671 = vmatprep.subr.mxu0 0.0
    %1672 = vmatpush2.msra.mxu0 0.0
    %1673 = vmatprep.subr.mxu0 0.0
    %1674 = vmatpush2.msra.mxu0 0.0
    %1675 = vmatprep.subr.mxu0 0.0
    %1676 = vmatpush2.msra.mxu0 0.0
    %1677 = vmatprep.subr.mxu0 0.0
    %1678 = vmatpush2.msra.mxu0 0.0
    %1679 = vmatprep.subr.mxu0 0.0
    %1680 = vmatpush2.msra.mxu0 0.0
    %1681 = vmatprep.subr.mxu0 0.0
    %1682 = vmatpush2.msra.mxu0 0.0
    %1683 = vmatprep.mubr.f32.mxu0 0.0
    %1684 = vmatmul.mubr.f32.gmra.mxu0 %v1547
    %v1685 = vpop.f32.mrf.mxu0
    %v1686 = vadd.f32 0.0, %v1685
    %v1687 = vpop.f32.mrf.mxu0
    %v1688 = vadd.f32 0.0, %v1687
    %1689 = vdwg.mxu0
    %v1690 = vadd.f32 %v569, %v1615
    %v1691 = vadd.f32 %v571, %v1617
    %v1692 = vadd.f32 %v682, %v1686
    %v1693 = vadd.f32 %v684, %v1688
    %v1694 = vxor.u32 %v1690, 2147483648
    %v1695 = vxor.u32 %v1691, 2147483648
    %v1696 = vxor.u32 %v1692, 2147483648
    %v1697 = vmul.f32 %v1694, 1.442695
    %v1698 = vpow.pop %v1697
    %v1699 = vmul.f32 %v1695, 1.442695
    %v1700 = vpow.pop %v1699
    %v1701 = vmul.f32 %v1696, 1.442695
    %v1702 = vpow.pop %v1701
    %v1703 = vadd.f32 %v1698, 1.0
    %v1704 = vadd.f32 %v1700, 1.0
    %v1705 = vadd.f32 %v1702, 1.0
    %v1706 = vrcp.pop %v1703
    %v1707 = vmul.f32 1.0, %v1706
    %v1708 = vrcp.pop %v1704
    %v1709 = vmul.f32 1.0, %v1708
    %v1710 = vrcp.pop %v1705
    %v1711 = vmul.f32 1.0, %v1710
    %v1712 = vtanh.pop %v1693
    %v1713 = vmul.f32 %v1709, %v1545
    %v1714 = vmul.f32 %v1707, %v1712
    %v1715 = vadd.f32 %v1713, %v1714
    %v1716 = vtanh.pop %v1715
    %v1717 = vmul.f32 %v1711, %v1716
    %1718 = vmatprep.subr.mxu0 %v272
    %1719 = vmatpush1.msra.mxu0 %v271
    %1720 = vmatprep.subr.mxu0 %v268
    %1721 = vmatpush1.msra.mxu0 %v267
    %1722 = vmatprep.subr.mxu0 %v264
    %1723 = vmatpush1.msra.mxu0 %v263
    %1724 = vmatprep.subr.mxu0 %v260
    %1725 = vmatpush1.msra.mxu0 %v259
    %1726 = vmatprep.subr.mxu0 %v256
    %1727 = vmatpush1.msra.mxu0 %v255
    %1728 = vmatprep.subr.mxu0 %v252
    %1729 = vmatpush1.msra.mxu0 %v251
    %1730 = vmatprep.subr.mxu0 %v248
    %1731 = vmatpush1.msra.mxu0 %v247
    %1732 = vmatprep.subr.mxu0 %v244
    %1733 = vmatpush1.msra.mxu0 %v243
    %1734 = vmatprep.subr.mxu0 %v240
    %1735 = vmatpush1.msra.mxu0 %v239
    %1736 = vmatprep.subr.mxu0 %v236
    %1737 = vmatpush1.msra.mxu0 %v235
    %1738 = vmatprep.subr.mxu0 %v232
    %1739 = vmatpush1.msra.mxu0 %v231
    %1740 = vmatprep.subr.mxu0 %v228
    %1741 = vmatpush1.msra.mxu0 %v227
    %1742 = vmatprep.subr.mxu0 %v224
    %1743 = vmatpush1.msra.mxu0 %v223
    %1744 = vmatprep.subr.mxu0 %v220
    %1745 = vmatpush1.msra.mxu0 %v219
    %1746 = vmatprep.subr.mxu0 %v216
    %1747 = vmatpush1.msra.mxu0 %v215
    %1748 = vmatprep.subr.mxu0 %v212
    %1749 = vmatpush1.msra.mxu0 %v211
    %1750 = vmatprep.subr.mxu0 0.0
    %1751 = vmatpush2.msra.mxu0 0.0
    %1752 = vmatprep.subr.mxu0 0.0
    %1753 = vmatpush2.msra.mxu0 0.0
    %1754 = vmatprep.subr.mxu0 0.0
    %1755 = vmatpush2.msra.mxu0 0.0
    %1756 = vmatprep.subr.mxu0 0.0
    %1757 = vmatpush2.msra.mxu0 0.0
    %1758 = vmatprep.subr.mxu0 0.0
    %1759 = vmatpush2.msra.mxu0 0.0
    %1760 = vmatprep.subr.mxu0 0.0
    %1761 = vmatpush2.msra.mxu0 0.0
    %1762 = vmatprep.subr.mxu0 0.0
    %1763 = vmatpush2.msra.mxu0 0.0
    %1764 = vmatprep.subr.mxu0 0.0
    %1765 = vmatpush2.msra.mxu0 0.0
    %1766 = vmatprep.subr.mxu0 0.0
    %1767 = vmatpush2.msra.mxu0 0.0
    %1768 = vmatprep.subr.mxu0 0.0
    %1769 = vmatpush2.msra.mxu0 0.0
    %1770 = vmatprep.subr.mxu0 0.0
    %1771 = vmatpush2.msra.mxu0 0.0
    %1772 = vmatprep.subr.mxu0 0.0
    %1773 = vmatpush2.msra.mxu0 0.0
    %1774 = vmatprep.subr.mxu0 0.0
    %1775 = vmatpush2.msra.mxu0 0.0
    %1776 = vmatprep.subr.mxu0 0.0
    %1777 = vmatpush2.msra.mxu0 0.0
    %1778 = vmatprep.subr.mxu0 0.0
    %1779 = vmatpush2.msra.mxu0 0.0
    %1780 = vmatprep.subr.mxu0 0.0
    %1781 = vmatpush2.msra.mxu0 0.0
    %1782 = vmatprep.mubr.f32.mxu0 0.0
    %1783 = vmatmul.mubr.f32.gmra.mxu0 %v1717
    %v1784 = vpop.f32.mrf.mxu0
    %v1785 = vadd.f32 0.0, %v1784
    %v1786 = vpop.f32.mrf.mxu0
    %v1787 = vadd.f32 0.0, %v1786
    %1788 = vdwg.mxu0
    %1789 = vmatprep.subr.mxu0 %v274
    %1790 = vmatpush1.msra.mxu0 %v273
    %1791 = vmatprep.subr.mxu0 %v270
    %1792 = vmatpush1.msra.mxu0 %v269
    %1793 = vmatprep.subr.mxu0 %v266
    %1794 = vmatpush1.msra.mxu0 %v265
    %1795 = vmatprep.subr.mxu0 %v262
    %1796 = vmatpush1.msra.mxu0 %v261
    %1797 = vmatprep.subr.mxu0 %v258
    %1798 = vmatpush1.msra.mxu0 %v257
    %1799 = vmatprep.subr.mxu0 %v254
    %1800 = vmatpush1.msra.mxu0 %v253
    %1801 = vmatprep.subr.mxu0 %v250
    %1802 = vmatpush1.msra.mxu0 %v249
    %1803 = vmatprep.subr.mxu0 %v246
    %1804 = vmatpush1.msra.mxu0 %v245
    %1805 = vmatprep.subr.mxu0 %v242
    %1806 = vmatpush1.msra.mxu0 %v241
    %1807 = vmatprep.subr.mxu0 %v238
    %1808 = vmatpush1.msra.mxu0 %v237
    %1809 = vmatprep.subr.mxu0 %v234
    %1810 = vmatpush1.msra.mxu0 %v233
    %1811 = vmatprep.subr.mxu0 %v230
    %1812 = vmatpush1.msra.mxu0 %v229
    %1813 = vmatprep.subr.mxu0 %v226
    %1814 = vmatpush1.msra.mxu0 %v225
    %1815 = vmatprep.subr.mxu0 %v222
    %1816 = vmatpush1.msra.mxu0 %v221
    %1817 = vmatprep.subr.mxu0 %v218
    %1818 = vmatpush1.msra.mxu0 %v217
    %1819 = vmatprep.subr.mxu0 %v214
    %1820 = vmatpush1.msra.mxu0 %v213
    %1821 = vmatprep.subr.mxu0 0.0
    %1822 = vmatpush2.msra.mxu0 0.0
    %1823 = vmatprep.subr.mxu0 0.0
    %1824 = vmatpush2.msra.mxu0 0.0
    %1825 = vmatprep.subr.mxu0 0.0
    %1826 = vmatpush2.msra.mxu0 0.0
    %1827 = vmatprep.subr.mxu0 0.0
    %1828 = vmatpush2.msra.mxu0 0.0
    %1829 = vmatprep.subr.mxu0 0.0
    %1830 = vmatpush2.msra.mxu0 0.0
    %1831 = vmatprep.subr.mxu0 0.0
    %1832 = vmatpush2.msra.mxu0 0.0
    %1833 = vmatprep.subr.mxu0 0.0
    %1834 = vmatpush2.msra.mxu0 0.0
    %1835 = vmatprep.subr.mxu0 0.0
    %1836 = vmatpush2.msra.mxu0 0.0
    %1837 = vmatprep.subr.mxu0 0.0
    %1838 = vmatpush2.msra.mxu0 0.0
    %1839 = vmatprep.subr.mxu0 0.0
    %1840 = vmatpush2.msra.mxu0 0.0
    %1841 = vmatprep.subr.mxu0 0.0
    %1842 = vmatpush2.msra.mxu0 0.0
    %1843 = vmatprep.subr.mxu0 0.0
    %1844 = vmatpush2.msra.mxu0 0.0
    %1845 = vmatprep.subr.mxu0 0.0
    %1846 = vmatpush2.msra.mxu0 0.0
    %1847 = vmatprep.subr.mxu0 0.0
    %1848 = vmatpush2.msra.mxu0 0.0
    %1849 = vmatprep.subr.mxu0 0.0
    %1850 = vmatpush2.msra.mxu0 0.0
    %1851 = vmatprep.subr.mxu0 0.0
    %1852 = vmatpush2.msra.mxu0 0.0
    %1853 = vmatprep.mubr.f32.mxu0 0.0
    %1854 = vmatmul.mubr.f32.gmra.mxu0 %v1717
    %v1855 = vpop.f32.mrf.mxu0
    %v1856 = vadd.f32 0.0, %v1855
    %v1857 = vpop.f32.mrf.mxu0
    %v1858 = vadd.f32 0.0, %v1857
    %1859 = vdwg.mxu0
    %v1860 = vadd.f32 %v575, %v1785
    %v1861 = vadd.f32 %v577, %v1787
    %v1862 = vadd.f32 %v688, %v1856
    %v1863 = vadd.f32 %v690, %v1858
    %v1864 = vxor.u32 %v1860, 2147483648
    %v1865 = vxor.u32 %v1861, 2147483648
    %v1866 = vxor.u32 %v1862, 2147483648
    %v1867 = vmul.f32 %v1864, 1.442695
    %v1868 = vpow.pop %v1867
    %v1869 = vmul.f32 %v1865, 1.442695
    %v1870 = vpow.pop %v1869
    %v1871 = vmul.f32 %v1866, 1.442695
    %v1872 = vpow.pop %v1871
    %v1873 = vadd.f32 %v1868, 1.0
    %v1874 = vadd.f32 %v1870, 1.0
    %v1875 = vadd.f32 %v1872, 1.0
    %v1876 = vrcp.pop %v1873
    %v1877 = vmul.f32 1.0, %v1876
    %v1878 = vrcp.pop %v1874
    %v1879 = vmul.f32 1.0, %v1878
    %v1880 = vrcp.pop %v1875
    %v1881 = vmul.f32 1.0, %v1880
    %v1882 = vtanh.pop %v1863
    %v1883 = vmul.f32 %v1879, %v1715
    %v1884 = vmul.f32 %v1877, %v1882
    %v1885 = vadd.f32 %v1883, %v1884
    %v1886 = vtanh.pop %v1885
    %v1887 = vmul.f32 %v1881, %v1886
    %1888 = vmatprep.subr.mxu0 %v272
    %1889 = vmatpush1.msra.mxu0 %v271
    %1890 = vmatprep.subr.mxu0 %v268
    %1891 = vmatpush1.msra.mxu0 %v267
    %1892 = vmatprep.subr.mxu0 %v264
    %1893 = vmatpush1.msra.mxu0 %v263
    %1894 = vmatprep.subr.mxu0 %v260
    %1895 = vmatpush1.msra.mxu0 %v259
    %1896 = vmatprep.subr.mxu0 %v256
    %1897 = vmatpush1.msra.mxu0 %v255
    %1898 = vmatprep.subr.mxu0 %v252
    %1899 = vmatpush1.msra.mxu0 %v251
    %1900 = vmatprep.subr.mxu0 %v248
    %1901 = vmatpush1.msra.mxu0 %v247
    %1902 = vmatprep.subr.mxu0 %v244
    %1903 = vmatpush1.msra.mxu0 %v243
    %1904 = vmatprep.subr.mxu0 %v240
    %1905 = vmatpush1.msra.mxu0 %v239
    %1906 = vmatprep.subr.mxu0 %v236
    %1907 = vmatpush1.msra.mxu0 %v235
    %1908 = vmatprep.subr.mxu0 %v232
    %1909 = vmatpush1.msra.mxu0 %v231
    %1910 = vmatprep.subr.mxu0 %v228
    %1911 = vmatpush1.msra.mxu0 %v227
    %1912 = vmatprep.subr.mxu0 %v224
    %1913 = vmatpush1.msra.mxu0 %v223
    %1914 = vmatprep.subr.mxu0 %v220
    %1915 = vmatpush1.msra.mxu0 %v219
    %1916 = vmatprep.subr.mxu0 %v216
    %1917 = vmatpush1.msra.mxu0 %v215
    %1918 = vmatprep.subr.mxu0 %v212
    %1919 = vmatpush1.msra.mxu0 %v211
    %1920 = vmatprep.subr.mxu0 0.0
    %1921 = vmatpush2.msra.mxu0 0.0
    %1922 = vmatprep.subr.mxu0 0.0
    %1923 = vmatpush2.msra.mxu0 0.0
    %1924 = vmatprep.subr.mxu0 0.0
    %1925 = vmatpush2.msra.mxu0 0.0
    %1926 = vmatprep.subr.mxu0 0.0
    %1927 = vmatpush2.msra.mxu0 0.0
    %1928 = vmatprep.subr.mxu0 0.0
    %1929 = vmatpush2.msra.mxu0 0.0
    %1930 = vmatprep.subr.mxu0 0.0
    %1931 = vmatpush2.msra.mxu0 0.0
    %1932 = vmatprep.subr.mxu0 0.0
    %1933 = vmatpush2.msra.mxu0 0.0
    %1934 = vmatprep.subr.mxu0 0.0
    %1935 = vmatpush2.msra.mxu0 0.0
    %1936 = vmatprep.subr.mxu0 0.0
    %1937 = vmatpush2.msra.mxu0 0.0
    %1938 = vmatprep.subr.mxu0 0.0
    %1939 = vmatpush2.msra.mxu0 0.0
    %1940 = vmatprep.subr.mxu0 0.0
    %1941 = vmatpush2.msra.mxu0 0.0
    %1942 = vmatprep.subr.mxu0 0.0
    %1943 = vmatpush2.msra.mxu0 0.0
    %1944 = vmatprep.subr.mxu0 0.0
    %1945 = vmatpush2.msra.mxu0 0.0
    %1946 = vmatprep.subr.mxu0 0.0
    %1947 = vmatpush2.msra.mxu0 0.0
    %1948 = vmatprep.subr.mxu0 0.0
    %1949 = vmatpush2.msra.mxu0 0.0
    %1950 = vmatprep.subr.mxu0 0.0
    %1951 = vmatpush2.msra.mxu0 0.0
    %1952 = vmatprep.mubr.f32.mxu0 0.0
    %1953 = vmatmul.mubr.f32.gmra.mxu0 %v1887
    %v1954 = vpop.f32.mrf.mxu0
    %v1955 = vadd.f32 0.0, %v1954
    %v1956 = vpop.f32.mrf.mxu0
    %v1957 = vadd.f32 0.0, %v1956
    %1958 = vdwg.mxu0
    %1959 = vmatprep.subr.mxu0 %v274
    %1960 = vmatpush1.msra.mxu0 %v273
    %1961 = vmatprep.subr.mxu0 %v270
    %1962 = vmatpush1.msra.mxu0 %v269
    %1963 = vmatprep.subr.mxu0 %v266
    %1964 = vmatpush1.msra.mxu0 %v265
    %1965 = vmatprep.subr.mxu0 %v262
    %1966 = vmatpush1.msra.mxu0 %v261
    %1967 = vmatprep.subr.mxu0 %v258
    %1968 = vmatpush1.msra.mxu0 %v257
    %1969 = vmatprep.subr.mxu0 %v254
    %1970 = vmatpush1.msra.mxu0 %v253
    %1971 = vmatprep.subr.mxu0 %v250
    %1972 = vmatpush1.msra.mxu0 %v249
    %1973 = vmatprep.subr.mxu0 %v246
    %1974 = vmatpush1.msra.mxu0 %v245
    %1975 = vmatprep.subr.mxu0 %v242
    %1976 = vmatpush1.msra.mxu0 %v241
    %1977 = vmatprep.subr.mxu0 %v238
    %1978 = vmatpush1.msra.mxu0 %v237
    %1979 = vmatprep.subr.mxu0 %v234
    %1980 = vmatpush1.msra.mxu0 %v233
    %1981 = vmatprep.subr.mxu0 %v230
    %1982 = vmatpush1.msra.mxu0 %v229
    %1983 = vmatprep.subr.mxu0 %v226
    %1984 = vmatpush1.msra.mxu0 %v225
    %1985 = vmatprep.subr.mxu0 %v222
    %1986 = vmatpush1.msra.mxu0 %v221
    %1987 = vmatprep.subr.mxu0 %v218
    %1988 = vmatpush1.msra.mxu0 %v217
    %1989 = vmatprep.subr.mxu0 %v214
    %1990 = vmatpush1.msra.mxu0 %v213
    %1991 = vmatprep.subr.mxu0 0.0
    %1992 = vmatpush2.msra.mxu0 0.0
    %1993 = vmatprep.subr.mxu0 0.0
    %1994 = vmatpush2.msra.mxu0 0.0
    %1995 = vmatprep.subr.mxu0 0.0
    %1996 = vmatpush2.msra.mxu0 0.0
    %1997 = vmatprep.subr.mxu0 0.0
    %1998 = vmatpush2.msra.mxu0 0.0
    %1999 = vmatprep.subr.mxu0 0.0
    %2000 = vmatpush2.msra.mxu0 0.0
    %2001 = vmatprep.subr.mxu0 0.0
    %2002 = vmatpush2.msra.mxu0 0.0
    %2003 = vmatprep.subr.mxu0 0.0
    %2004 = vmatpush2.msra.mxu0 0.0
    %2005 = vmatprep.subr.mxu0 0.0
    %2006 = vmatpush2.msra.mxu0 0.0
    %2007 = vmatprep.subr.mxu0 0.0
    %2008 = vmatpush2.msra.mxu0 0.0
    %2009 = vmatprep.subr.mxu0 0.0
    %2010 = vmatpush2.msra.mxu0 0.0
    %2011 = vmatprep.subr.mxu0 0.0
    %2012 = vmatpush2.msra.mxu0 0.0
    %2013 = vmatprep.subr.mxu0 0.0
    %2014 = vmatpush2.msra.mxu0 0.0
    %2015 = vmatprep.subr.mxu0 0.0
    %2016 = vmatpush2.msra.mxu0 0.0
    %2017 = vmatprep.subr.mxu0 0.0
    %2018 = vmatpush2.msra.mxu0 0.0
    %2019 = vmatprep.subr.mxu0 0.0
    %2020 = vmatpush2.msra.mxu0 0.0
    %2021 = vmatprep.subr.mxu0 0.0
    %2022 = vmatpush2.msra.mxu0 0.0
    %2023 = vmatprep.mubr.f32.mxu0 0.0
    %2024 = vmatmul.mubr.f32.gmra.mxu0 %v1887
    %v2025 = vpop.f32.mrf.mxu0
    %v2026 = vadd.f32 0.0, %v2025
    %v2027 = vpop.f32.mrf.mxu0
    %v2028 = vadd.f32 0.0, %v2027
    %2029 = vdwg.mxu0
    %v2030 = vadd.f32 %v581, %v1955
    %v2031 = vadd.f32 %v583, %v1957
    %v2032 = vadd.f32 %v694, %v2026
    %v2033 = vadd.f32 %v696, %v2028
    %v2034 = vxor.u32 %v2030, 2147483648
    %v2035 = vxor.u32 %v2031, 2147483648
    %v2036 = vxor.u32 %v2032, 2147483648
    %v2037 = vmul.f32 %v2034, 1.442695
    %v2038 = vpow.pop %v2037
    %v2039 = vmul.f32 %v2035, 1.442695
    %v2040 = vpow.pop %v2039
    %v2041 = vmul.f32 %v2036, 1.442695
    %v2042 = vpow.pop %v2041
    %v2043 = vadd.f32 %v2038, 1.0
    %v2044 = vadd.f32 %v2040, 1.0
    %v2045 = vadd.f32 %v2042, 1.0
    %v2046 = vrcp.pop %v2043
    %v2047 = vmul.f32 1.0, %v2046
    %v2048 = vrcp.pop %v2044
    %v2049 = vmul.f32 1.0, %v2048
    %v2050 = vrcp.pop %v2045
    %v2051 = vmul.f32 1.0, %v2050
    %v2052 = vtanh.pop %v2033
    %v2053 = vmul.f32 %v2049, %v1885
    %v2054 = vmul.f32 %v2047, %v2052
    %v2055 = vadd.f32 %v2053, %v2054
    %v2056 = vtanh.pop %v2055
    %v2057 = vmul.f32 %v2051, %v2056
    %v2059 = vlaneseq
    %v2060 = vshrl.u32 %v2059, 7
    %v2061 = vsub.s32 0, %v2060
    %v2062 = vrot.slane %v404, %v2061
    %v2063 = vlaneseq
    %v2064 = vshrl.u32 %v2063, 7
    %v2065 = vsub.s32 1, %v2064
    %v2066 = vrot.slane %v404, %v2065
    %v2067 = vlaneseq
    %v2068 = vshrl.u32 %v2067, 7
    %v2069 = vsub.s32 2, %v2068
    %v2070 = vrot.slane %v404, %v2069
    %v2071 = vlaneseq
    %v2072 = vshrl.u32 %v2071, 7
    %v2073 = vsub.s32 3, %v2072
    %v2074 = vrot.slane %v404, %v2073
    %2079 = vmatprep.subr.mxu0 %v337
    %2080 = vmatpush1.msra.mxu0 %v336
    %2081 = vmatprep.subr.mxu0 %v333
    %2082 = vmatpush1.msra.mxu0 %v332
    %2083 = vmatprep.subr.mxu0 %v329
    %2084 = vmatpush1.msra.mxu0 %v328
    %2085 = vmatprep.subr.mxu0 %v325
    %2086 = vmatpush1.msra.mxu0 %v324
    %2087 = vmatprep.subr.mxu0 %v321
    %2088 = vmatpush1.msra.mxu0 %v320
    %2089 = vmatprep.subr.mxu0 %v317
    %2090 = vmatpush1.msra.mxu0 %v316
    %2091 = vmatprep.subr.mxu0 %v313
    %2092 = vmatpush1.msra.mxu0 %v312
    %2093 = vmatprep.subr.mxu0 %v309
    %2094 = vmatpush1.msra.mxu0 %v308
    %2095 = vmatprep.subr.mxu0 %v305
    %2096 = vmatpush1.msra.mxu0 %v304
    %2097 = vmatprep.subr.mxu0 %v301
    %2098 = vmatpush1.msra.mxu0 %v300
    %2099 = vmatprep.subr.mxu0 %v297
    %2100 = vmatpush1.msra.mxu0 %v296
    %2101 = vmatprep.subr.mxu0 %v293
    %2102 = vmatpush1.msra.mxu0 %v292
    %2103 = vmatprep.subr.mxu0 %v289
    %2104 = vmatpush1.msra.mxu0 %v288
    %2105 = vmatprep.subr.mxu0 %v285
    %2106 = vmatpush1.msra.mxu0 %v284
    %2107 = vmatprep.subr.mxu0 %v281
    %2108 = vmatpush1.msra.mxu0 %v280
    %2109 = vmatprep.subr.mxu0 %v277
    %2110 = vmatpush1.msra.mxu0 %v276
    %2111 = vmatprep.subr.mxu0 0.0
    %2112 = vmatpush2.msra.mxu0 0.0
    %2113 = vmatprep.subr.mxu0 0.0
    %2114 = vmatpush2.msra.mxu0 0.0
    %2115 = vmatprep.subr.mxu0 0.0
    %2116 = vmatpush2.msra.mxu0 0.0
    %2117 = vmatprep.subr.mxu0 0.0
    %2118 = vmatpush2.msra.mxu0 0.0
    %2119 = vmatprep.subr.mxu0 0.0
    %2120 = vmatpush2.msra.mxu0 0.0
    %2121 = vmatprep.subr.mxu0 0.0
    %2122 = vmatpush2.msra.mxu0 0.0
    %2123 = vmatprep.subr.mxu0 0.0
    %2124 = vmatpush2.msra.mxu0 0.0
    %2125 = vmatprep.subr.mxu0 0.0
    %2126 = vmatpush2.msra.mxu0 0.0
    %2127 = vmatprep.subr.mxu0 0.0
    %2128 = vmatpush2.msra.mxu0 0.0
    %2129 = vmatprep.subr.mxu0 0.0
    %2130 = vmatpush2.msra.mxu0 0.0
    %2131 = vmatprep.subr.mxu0 0.0
    %2132 = vmatpush2.msra.mxu0 0.0
    %2133 = vmatprep.subr.mxu0 0.0
    %2134 = vmatpush2.msra.mxu0 0.0
    %2135 = vmatprep.subr.mxu0 0.0
    %2136 = vmatpush2.msra.mxu0 0.0
    %2137 = vmatprep.subr.mxu0 0.0
    %2138 = vmatpush2.msra.mxu0 0.0
    %2139 = vmatprep.subr.mxu0 0.0
    %2140 = vmatpush2.msra.mxu0 0.0
    %2141 = vmatprep.subr.mxu0 0.0
    %2142 = vmatpush2.msra.mxu0 0.0
    %2143 = vmatprep.mubr.f32.mxu0 0.0
    %2144 = vmatmul.mubr.f32.gmra.mxu0 %v2057
    %v2145 = vpop.f32.mrf.mxu0
    %v2146 = vadd.f32 %v2062, %v2145
    %v2147 = vpop.f32.mrf.mxu0
    %v2148 = vadd.f32 %v2066, %v2147
    %2149 = vdwg.mxu0
    %2150 = vmatprep.subr.mxu0 %v339
    %2151 = vmatpush1.msra.mxu0 %v338
    %2152 = vmatprep.subr.mxu0 %v335
    %2153 = vmatpush1.msra.mxu0 %v334
    %2154 = vmatprep.subr.mxu0 %v331
    %2155 = vmatpush1.msra.mxu0 %v330
    %2156 = vmatprep.subr.mxu0 %v327
    %2157 = vmatpush1.msra.mxu0 %v326
    %2158 = vmatprep.subr.mxu0 %v323
    %2159 = vmatpush1.msra.mxu0 %v322
    %2160 = vmatprep.subr.mxu0 %v319
    %2161 = vmatpush1.msra.mxu0 %v318
    %2162 = vmatprep.subr.mxu0 %v315
    %2163 = vmatpush1.msra.mxu0 %v314
    %2164 = vmatprep.subr.mxu0 %v311
    %2165 = vmatpush1.msra.mxu0 %v310
    %2166 = vmatprep.subr.mxu0 %v307
    %2167 = vmatpush1.msra.mxu0 %v306
    %2168 = vmatprep.subr.mxu0 %v303
    %2169 = vmatpush1.msra.mxu0 %v302
    %2170 = vmatprep.subr.mxu0 %v299
    %2171 = vmatpush1.msra.mxu0 %v298
    %2172 = vmatprep.subr.mxu0 %v295
    %2173 = vmatpush1.msra.mxu0 %v294
    %2174 = vmatprep.subr.mxu0 %v291
    %2175 = vmatpush1.msra.mxu0 %v290
    %2176 = vmatprep.subr.mxu0 %v287
    %2177 = vmatpush1.msra.mxu0 %v286
    %2178 = vmatprep.subr.mxu0 %v283
    %2179 = vmatpush1.msra.mxu0 %v282
    %2180 = vmatprep.subr.mxu0 %v279
    %2181 = vmatpush1.msra.mxu0 %v278
    %2182 = vmatprep.subr.mxu0 0.0
    %2183 = vmatpush2.msra.mxu0 0.0
    %2184 = vmatprep.subr.mxu0 0.0
    %2185 = vmatpush2.msra.mxu0 0.0
    %2186 = vmatprep.subr.mxu0 0.0
    %2187 = vmatpush2.msra.mxu0 0.0
    %2188 = vmatprep.subr.mxu0 0.0
    %2189 = vmatpush2.msra.mxu0 0.0
    %2190 = vmatprep.subr.mxu0 0.0
    %2191 = vmatpush2.msra.mxu0 0.0
    %2192 = vmatprep.subr.mxu0 0.0
    %2193 = vmatpush2.msra.mxu0 0.0
    %2194 = vmatprep.subr.mxu0 0.0
    %2195 = vmatpush2.msra.mxu0 0.0
    %2196 = vmatprep.subr.mxu0 0.0
    %2197 = vmatpush2.msra.mxu0 0.0
    %2198 = vmatprep.subr.mxu0 0.0
    %2199 = vmatpush2.msra.mxu0 0.0
    %2200 = vmatprep.subr.mxu0 0.0
    %2201 = vmatpush2.msra.mxu0 0.0
    %2202 = vmatprep.subr.mxu0 0.0
    %2203 = vmatpush2.msra.mxu0 0.0
    %2204 = vmatprep.subr.mxu0 0.0
    %2205 = vmatpush2.msra.mxu0 0.0
    %2206 = vmatprep.subr.mxu0 0.0
    %2207 = vmatpush2.msra.mxu0 0.0
    %2208 = vmatprep.subr.mxu0 0.0
    %2209 = vmatpush2.msra.mxu0 0.0
    %2210 = vmatprep.subr.mxu0 0.0
    %2211 = vmatpush2.msra.mxu0 0.0
    %2212 = vmatprep.subr.mxu0 0.0
    %2213 = vmatpush2.msra.mxu0 0.0
    %2214 = vmatprep.mubr.f32.mxu0 0.0
    %2215 = vmatmul.mubr.f32.gmra.mxu0 %v2057
    %v2216 = vpop.f32.mrf.mxu0
    %v2217 = vadd.f32 %v2070, %v2216
    %v2218 = vpop.f32.mrf.mxu0
    %v2219 = vadd.f32 %v2074, %v2218
    %2220 = vdwg.mxu0
    %2221 = vmatprep.subr.mxu0 %v401
    %2222 = vmatpush1.msra.mxu0 %v400
    %2223 = vmatprep.subr.mxu0 %v397
    %2224 = vmatpush1.msra.mxu0 %v396
    %2225 = vmatprep.subr.mxu0 %v393
    %2226 = vmatpush1.msra.mxu0 %v392
    %2227 = vmatprep.subr.mxu0 %v389
    %2228 = vmatpush1.msra.mxu0 %v388
    %2229 = vmatprep.subr.mxu0 %v385
    %2230 = vmatpush1.msra.mxu0 %v384
    %2231 = vmatprep.subr.mxu0 %v381
    %2232 = vmatpush1.msra.mxu0 %v380
    %2233 = vmatprep.subr.mxu0 %v377
    %2234 = vmatpush1.msra.mxu0 %v376
    %2235 = vmatprep.subr.mxu0 %v373
    %2236 = vmatpush1.msra.mxu0 %v372
    %2237 = vmatprep.subr.mxu0 %v369
    %2238 = vmatpush1.msra.mxu0 %v368
    %2239 = vmatprep.subr.mxu0 %v365
    %2240 = vmatpush1.msra.mxu0 %v364
    %2241 = vmatprep.subr.mxu0 %v361
    %2242 = vmatpush1.msra.mxu0 %v360
    %2243 = vmatprep.subr.mxu0 %v357
    %2244 = vmatpush1.msra.mxu0 %v356
    %2245 = vmatprep.subr.mxu0 %v353
    %2246 = vmatpush1.msra.mxu0 %v352
    %2247 = vmatprep.subr.mxu0 %v349
    %2248 = vmatpush1.msra.mxu0 %v348
    %2249 = vmatprep.subr.mxu0 %v345
    %2250 = vmatpush1.msra.mxu0 %v344
    %2251 = vmatprep.subr.mxu0 %v341
    %2252 = vmatpush1.msra.mxu0 %v340
    %2253 = vmatprep.subr.mxu0 0.0
    %2254 = vmatpush2.msra.mxu0 0.0
    %2255 = vmatprep.subr.mxu0 0.0
    %2256 = vmatpush2.msra.mxu0 0.0
    %2257 = vmatprep.subr.mxu0 0.0
    %2258 = vmatpush2.msra.mxu0 0.0
    %2259 = vmatprep.subr.mxu0 0.0
    %2260 = vmatpush2.msra.mxu0 0.0
    %2261 = vmatprep.subr.mxu0 0.0
    %2262 = vmatpush2.msra.mxu0 0.0
    %2263 = vmatprep.subr.mxu0 0.0
    %2264 = vmatpush2.msra.mxu0 0.0
    %2265 = vmatprep.subr.mxu0 0.0
    %2266 = vmatpush2.msra.mxu0 0.0
    %2267 = vmatprep.subr.mxu0 0.0
    %2268 = vmatpush2.msra.mxu0 0.0
    %2269 = vmatprep.subr.mxu0 0.0
    %2270 = vmatpush2.msra.mxu0 0.0
    %2271 = vmatprep.subr.mxu0 0.0
    %2272 = vmatpush2.msra.mxu0 0.0
    %2273 = vmatprep.subr.mxu0 0.0
    %2274 = vmatpush2.msra.mxu0 0.0
    %2275 = vmatprep.subr.mxu0 0.0
    %2276 = vmatpush2.msra.mxu0 0.0
    %2277 = vmatprep.subr.mxu0 0.0
    %2278 = vmatpush2.msra.mxu0 0.0
    %2279 = vmatprep.subr.mxu0 0.0
    %2280 = vmatpush2.msra.mxu0 0.0
    %2281 = vmatprep.subr.mxu0 0.0
    %2282 = vmatpush2.msra.mxu0 0.0
    %2283 = vmatprep.subr.mxu0 0.0
    %2284 = vmatpush2.msra.mxu0 0.0
    %2285 = vmatprep.mubr.f32.mxu0 0.0
    %2286 = vmatmul.mubr.f32.gmra.mxu0 0.0
    %v2287 = vpop.f32.mrf.mxu0
    %v2288 = vadd.f32 0.0, %v2287
    %v2289 = vpop.f32.mrf.mxu0
    %v2290 = vadd.f32 0.0, %v2289
    %2291 = vdwg.mxu0
    %2292 = vmatprep.subr.mxu0 %v403
    %2293 = vmatpush1.msra.mxu0 %v402
    %2294 = vmatprep.subr.mxu0 %v399
    %2295 = vmatpush1.msra.mxu0 %v398
    %2296 = vmatprep.subr.mxu0 %v395
    %2297 = vmatpush1.msra.mxu0 %v394
    %2298 = vmatprep.subr.mxu0 %v391
    %2299 = vmatpush1.msra.mxu0 %v390
    %2300 = vmatprep.subr.mxu0 %v387
    %2301 = vmatpush1.msra.mxu0 %v386
    %2302 = vmatprep.subr.mxu0 %v383
    %2303 = vmatpush1.msra.mxu0 %v382
    %2304 = vmatprep.subr.mxu0 %v379
    %2305 = vmatpush1.msra.mxu0 %v378
    %2306 = vmatprep.subr.mxu0 %v375
    %2307 = vmatpush1.msra.mxu0 %v374
    %2308 = vmatprep.subr.mxu0 %v371
    %2309 = vmatpush1.msra.mxu0 %v370
    %2310 = vmatprep.subr.mxu0 %v367
    %2311 = vmatpush1.msra.mxu0 %v366
    %2312 = vmatprep.subr.mxu0 %v363
    %2313 = vmatpush1.msra.mxu0 %v362
    %2314 = vmatprep.subr.mxu0 %v359
    %2315 = vmatpush1.msra.mxu0 %v358
    %2316 = vmatprep.subr.mxu0 %v355
    %2317 = vmatpush1.msra.mxu0 %v354
    %2318 = vmatprep.subr.mxu0 %v351
    %2319 = vmatpush1.msra.mxu0 %v350
    %2320 = vmatprep.subr.mxu0 %v347
    %2321 = vmatpush1.msra.mxu0 %v346
    %2322 = vmatprep.subr.mxu0 %v343
    %2323 = vmatpush1.msra.mxu0 %v342
    %2324 = vmatprep.subr.mxu0 0.0
    %2325 = vmatpush2.msra.mxu0 0.0
    %2326 = vmatprep.subr.mxu0 0.0
    %2327 = vmatpush2.msra.mxu0 0.0
    %2328 = vmatprep.subr.mxu0 0.0
    %2329 = vmatpush2.msra.mxu0 0.0
    %2330 = vmatprep.subr.mxu0 0.0
    %2331 = vmatpush2.msra.mxu0 0.0
    %2332 = vmatprep.subr.mxu0 0.0
    %2333 = vmatpush2.msra.mxu0 0.0
    %2334 = vmatprep.subr.mxu0 0.0
    %2335 = vmatpush2.msra.mxu0 0.0
    %2336 = vmatprep.subr.mxu0 0.0
    %2337 = vmatpush2.msra.mxu0 0.0
    %2338 = vmatprep.subr.mxu0 0.0
    %2339 = vmatpush2.msra.mxu0 0.0
    %2340 = vmatprep.subr.mxu0 0.0
    %2341 = vmatpush2.msra.mxu0 0.0
    %2342 = vmatprep.subr.mxu0 0.0
    %2343 = vmatpush2.msra.mxu0 0.0
    %2344 = vmatprep.subr.mxu0 0.0
    %2345 = vmatpush2.msra.mxu0 0.0
    %2346 = vmatprep.subr.mxu0 0.0
    %2347 = vmatpush2.msra.mxu0 0.0
    %2348 = vmatprep.subr.mxu0 0.0
    %2349 = vmatpush2.msra.mxu0 0.0
    %2350 = vmatprep.subr.mxu0 0.0
    %2351 = vmatpush2.msra.mxu0 0.0
    %2352 = vmatprep.subr.mxu0 0.0
    %2353 = vmatpush2.msra.mxu0 0.0
    %2354 = vmatprep.subr.mxu0 0.0
    %2355 = vmatpush2.msra.mxu0 0.0
    %2356 = vmatprep.mubr.f32.mxu0 0.0
    %2357 = vmatmul.mubr.f32.gmra.mxu0 0.0
    %v2358 = vpop.f32.mrf.mxu0
    %v2359 = vadd.f32 0.0, %v2358
    %v2360 = vpop.f32.mrf.mxu0
    %v2361 = vadd.f32 0.0, %v2360
    %2362 = vdwg.mxu0
    %v2363 = vadd.f32 %v2146, %v2288
    %v2364 = vadd.f32 %v2148, %v2290
    %v2365 = vadd.f32 %v2217, %v2359
    %v2366 = vadd.f32 %v2219, %v2361
    %v2367 = vxor.u32 %v2363, 2147483648
    %v2368 = vxor.u32 %v2364, 2147483648
    %v2369 = vxor.u32 %v2365, 2147483648
    %v2370 = vmul.f32 %v2367, 1.442695
    %v2371 = vpow.pop %v2370
    %v2372 = vmul.f32 %v2368, 1.442695
    %v2373 = vpow.pop %v2372
    %v2374 = vmul.f32 %v2369, 1.442695
    %v2375 = vpow.pop %v2374
    %v2376 = vadd.f32 %v2371, 1.0
    %v2377 = vadd.f32 %v2373, 1.0
    %v2378 = vadd.f32 %v2375, 1.0
    %v2379 = vrcp.pop %v2376
    %v2380 = vmul.f32 1.0, %v2379
    %v2381 = vrcp.pop %v2377
    %v2382 = vmul.f32 1.0, %v2381
    %v2383 = vrcp.pop %v2378
    %v2384 = vmul.f32 1.0, %v2383
    %v2385 = vtanh.pop %v2366
    %v2386 = vmul.f32 %v2382, 0.0
    %v2387 = vmul.f32 %v2380, %v2385
    %v2388 = vadd.f32 %v2386, %v2387
    %v2389 = vtanh.pop %v2388
    %v2390 = vmul.f32 %v2384, %v2389
    %vm2391 = vcmask 41984
    %2392 = vst.msk [vmem:[%s8] sm:$0x3] %vm2391, %v2390
    %2393 = vmatprep.subr.mxu0 %v401
    %2394 = vmatpush1.msra.mxu0 %v400
    %2395 = vmatprep.subr.mxu0 %v397
    %2396 = vmatpush1.msra.mxu0 %v396
    %2397 = vmatprep.subr.mxu0 %v393
    %2398 = vmatpush1.msra.mxu0 %v392
    %2399 = vmatprep.subr.mxu0 %v389
    %2400 = vmatpush1.msra.mxu0 %v388
    %2401 = vmatprep.subr.mxu0 %v385
    %2402 = vmatpush1.msra.mxu0 %v384
    %2403 = vmatprep.subr.mxu0 %v381
    %2404 = vmatpush1.msra.mxu0 %v380
    %2405 = vmatprep.subr.mxu0 %v377
    %2406 = vmatpush1.msra.mxu0 %v376
    %2407 = vmatprep.subr.mxu0 %v373
    %2408 = vmatpush1.msra.mxu0 %v372
    %2409 = vmatprep.subr.mxu0 %v369
    %2410 = vmatpush1.msra.mxu0 %v368
    %2411 = vmatprep.subr.mxu0 %v365
    %2412 = vmatpush1.msra.mxu0 %v364
    %2413 = vmatprep.subr.mxu0 %v361
    %2414 = vmatpush1.msra.mxu0 %v360
    %2415 = vmatprep.subr.mxu0 %v357
    %2416 = vmatpush1.msra.mxu0 %v356
    %2417 = vmatprep.subr.mxu0 %v353
    %2418 = vmatpush1.msra.mxu0 %v352
    %2419 = vmatprep.subr.mxu0 %v349
    %2420 = vmatpush1.msra.mxu0 %v348
    %2421 = vmatprep.subr.mxu0 %v345
    %2422 = vmatpush1.msra.mxu0 %v344
    %2423 = vmatprep.subr.mxu0 %v341
    %2424 = vmatpush1.msra.mxu0 %v340
    %2425 = vmatprep.subr.mxu0 0.0
    %2426 = vmatpush2.msra.mxu0 0.0
    %2427 = vmatprep.subr.mxu0 0.0
    %2428 = vmatpush2.msra.mxu0 0.0
    %2429 = vmatprep.subr.mxu0 0.0
    %2430 = vmatpush2.msra.mxu0 0.0
    %2431 = vmatprep.subr.mxu0 0.0
    %2432 = vmatpush2.msra.mxu0 0.0
    %2433 = vmatprep.subr.mxu0 0.0
    %2434 = vmatpush2.msra.mxu0 0.0
    %2435 = vmatprep.subr.mxu0 0.0
    %2436 = vmatpush2.msra.mxu0 0.0
    %2437 = vmatprep.subr.mxu0 0.0
    %2438 = vmatpush2.msra.mxu0 0.0
    %2439 = vmatprep.subr.mxu0 0.0
    %2440 = vmatpush2.msra.mxu0 0.0
    %2441 = vmatprep.subr.mxu0 0.0
    %2442 = vmatpush2.msra.mxu0 0.0
    %2443 = vmatprep.subr.mxu0 0.0
    %2444 = vmatpush2.msra.mxu0 0.0
    %2445 = vmatprep.subr.mxu0 0.0
    %2446 = vmatpush2.msra.mxu0 0.0
    %2447 = vmatprep.subr.mxu0 0.0
    %2448 = vmatpush2.msra.mxu0 0.0
    %2449 = vmatprep.subr.mxu0 0.0
    %2450 = vmatpush2.msra.mxu0 0.0
    %2451 = vmatprep.subr.mxu0 0.0
    %2452 = vmatpush2.msra.mxu0 0.0
    %2453 = vmatprep.subr.mxu0 0.0
    %2454 = vmatpush2.msra.mxu0 0.0
    %2455 = vmatprep.subr.mxu0 0.0
    %2456 = vmatpush2.msra.mxu0 0.0
    %2457 = vmatprep.mubr.f32.mxu0 0.0
    %2458 = vmatmul.mubr.f32.gmra.mxu0 %v2390
    %v2459 = vpop.f32.mrf.mxu0
    %v2460 = vadd.f32 0.0, %v2459
    %v2461 = vpop.f32.mrf.mxu0
    %v2462 = vadd.f32 0.0, %v2461
    %2463 = vdwg.mxu0
    %2464 = vmatprep.subr.mxu0 %v403
    %2465 = vmatpush1.msra.mxu0 %v402
    %2466 = vmatprep.subr.mxu0 %v399
    %2467 = vmatpush1.msra.mxu0 %v398
    %2468 = vmatprep.subr.mxu0 %v395
    %2469 = vmatpush1.msra.mxu0 %v394
    %2470 = vmatprep.subr.mxu0 %v391
    %2471 = vmatpush1.msra.mxu0 %v390
    %2472 = vmatprep.subr.mxu0 %v387
    %2473 = vmatpush1.msra.mxu0 %v386
    %2474 = vmatprep.subr.mxu0 %v383
    %2475 = vmatpush1.msra.mxu0 %v382
    %2476 = vmatprep.subr.mxu0 %v379
    %2477 = vmatpush1.msra.mxu0 %v378
    %2478 = vmatprep.subr.mxu0 %v375
    %2479 = vmatpush1.msra.mxu0 %v374
    %2480 = vmatprep.subr.mxu0 %v371
    %2481 = vmatpush1.msra.mxu0 %v370
    %2482 = vmatprep.subr.mxu0 %v367
    %2483 = vmatpush1.msra.mxu0 %v366
    %2484 = vmatprep.subr.mxu0 %v363
    %2485 = vmatpush1.msra.mxu0 %v362
    %2486 = vmatprep.subr.mxu0 %v359
    %2487 = vmatpush1.msra.mxu0 %v358
    %2488 = vmatprep.subr.mxu0 %v355
    %2489 = vmatpush1.msra.mxu0 %v354
    %2490 = vmatprep.subr.mxu0 %v351
    %2491 = vmatpush1.msra.mxu0 %v350
    %2492 = vmatprep.subr.mxu0 %v347
    %2493 = vmatpush1.msra.mxu0 %v346
    %2494 = vmatprep.subr.mxu0 %v343
    %2495 = vmatpush1.msra.mxu0 %v342
    %2496 = vmatprep.subr.mxu0 0.0
    %2497 = vmatpush2.msra.mxu0 0.0
    %2498 = vmatprep.subr.mxu0 0.0
    %2499 = vmatpush2.msra.mxu0 0.0
    %2500 = vmatprep.subr.mxu0 0.0
    %2501 = vmatpush2.msra.mxu0 0.0
    %2502 = vmatprep.subr.mxu0 0.0
    %2503 = vmatpush2.msra.mxu0 0.0
    %2504 = vmatprep.subr.mxu0 0.0
    %2505 = vmatpush2.msra.mxu0 0.0
    %2506 = vmatprep.subr.mxu0 0.0
    %2507 = vmatpush2.msra.mxu0 0.0
    %2508 = vmatprep.subr.mxu0 0.0
    %2509 = vmatpush2.msra.mxu0 0.0
    %2510 = vmatprep.subr.mxu0 0.0
    %2511 = vmatpush2.msra.mxu0 0.0
    %2512 = vmatprep.subr.mxu0 0.0
    %2513 = vmatpush2.msra.mxu0 0.0
    %2514 = vmatprep.subr.mxu0 0.0
    %2515 = vmatpush2.msra.mxu0 0.0
    %2516 = vmatprep.subr.mxu0 0.0
    %2517 = vmatpush2.msra.mxu0 0.0
    %2518 = vmatprep.subr.mxu0 0.0
    %2519 = vmatpush2.msra.mxu0 0.0
    %2520 = vmatprep.subr.mxu0 0.0
    %2521 = vmatpush2.msra.mxu0 0.0
    %2522 = vmatprep.subr.mxu0 0.0
    %2523 = vmatpush2.msra.mxu0 0.0
    %2524 = vmatprep.subr.mxu0 0.0
    %2525 = vmatpush2.msra.mxu0 0.0
    %2526 = vmatprep.subr.mxu0 0.0
    %2527 = vmatpush2.msra.mxu0 0.0
    %2528 = vmatprep.mubr.f32.mxu0 0.0
    %2529 = vmatmul.mubr.f32.gmra.mxu0 %v2390
    %v2530 = vpop.f32.mrf.mxu0
    %v2531 = vadd.f32 0.0, %v2530
    %v2532 = vpop.f32.mrf.mxu0
    %v2533 = vadd.f32 0.0, %v2532
    %2534 = vdwg.mxu0
    %v2535 = vadd.f32 %v2146, %v2460
    %v2536 = vadd.f32 %v2148, %v2462
    %v2537 = vadd.f32 %v2217, %v2531
    %v2538 = vadd.f32 %v2219, %v2533
    %v2539 = vxor.u32 %v2535, 2147483648
    %v2540 = vxor.u32 %v2536, 2147483648
    %v2541 = vxor.u32 %v2537, 2147483648
    %v2542 = vmul.f32 %v2539, 1.442695
    %v2543 = vpow.pop %v2542
    %v2544 = vmul.f32 %v2540, 1.442695
    %v2545 = vpow.pop %v2544
    %v2546 = vmul.f32 %v2541, 1.442695
    %v2547 = vpow.pop %v2546
    %v2548 = vadd.f32 %v2543, 1.0
    %v2549 = vadd.f32 %v2545, 1.0
    %v2550 = vadd.f32 %v2547, 1.0
    %v2551 = vrcp.pop %v2548
    %v2552 = vmul.f32 1.0, %v2551
    %v2553 = vrcp.pop %v2549
    %v2554 = vmul.f32 1.0, %v2553
    %v2555 = vrcp.pop %v2550
    %v2556 = vmul.f32 1.0, %v2555
    %v2557 = vtanh.pop %v2538
    %v2558 = vmul.f32 %v2554, %v2388
    %v2559 = vmul.f32 %v2552, %v2557
    %v2560 = vadd.f32 %v2558, %v2559
    %v2561 = vtanh.pop %v2560
    %v2562 = vmul.f32 %v2556, %v2561
    %2564 = vrot.lane.b32.xlu0 %v2562, 6
    %v2565 = vpop.permute.xlu0 %2564
    %vm2567 = vcmask 91184
    %2568 = vst.msk [vmem:[%s8] sm:$0x3] %vm2567, %v2565
    %2569 = vmatprep.subr.mxu0 %v401
    %2570 = vmatpush1.msra.mxu0 %v400
    %2571 = vmatprep.subr.mxu0 %v397
    %2572 = vmatpush1.msra.mxu0 %v396
    %2573 = vmatprep.subr.mxu0 %v393
    %2574 = vmatpush1.msra.mxu0 %v392
    %2575 = vmatprep.subr.mxu0 %v389
    %2576 = vmatpush1.msra.mxu0 %v388
    %2577 = vmatprep.subr.mxu0 %v385
    %2578 = vmatpush1.msra.mxu0 %v384
    %2579 = vmatprep.subr.mxu0 %v381
    %2580 = vmatpush1.msra.mxu0 %v380
    %2581 = vmatprep.subr.mxu0 %v377
    %2582 = vmatpush1.msra.mxu0 %v376
    %2583 = vmatprep.subr.mxu0 %v373
    %2584 = vmatpush1.msra.mxu0 %v372
    %2585 = vmatprep.subr.mxu0 %v369
    %2586 = vmatpush1.msra.mxu0 %v368
    %2587 = vmatprep.subr.mxu0 %v365
    %2588 = vmatpush1.msra.mxu0 %v364
    %2589 = vmatprep.subr.mxu0 %v361
    %2590 = vmatpush1.msra.mxu0 %v360
    %2591 = vmatprep.subr.mxu0 %v357
    %2592 = vmatpush1.msra.mxu0 %v356
    %2593 = vmatprep.subr.mxu0 %v353
    %2594 = vmatpush1.msra.mxu0 %v352
    %2595 = vmatprep.subr.mxu0 %v349
    %2596 = vmatpush1.msra.mxu0 %v348
    %2597 = vmatprep.subr.mxu0 %v345
    %2598 = vmatpush1.msra.mxu0 %v344
    %2599 = vmatprep.subr.mxu0 %v341
    %2600 = vmatpush1.msra.mxu0 %v340
    %2601 = vmatprep.subr.mxu0 0.0
    %2602 = vmatpush2.msra.mxu0 0.0
    %2603 = vmatprep.subr.mxu0 0.0
    %2604 = vmatpush2.msra.mxu0 0.0
    %2605 = vmatprep.subr.mxu0 0.0
    %2606 = vmatpush2.msra.mxu0 0.0
    %2607 = vmatprep.subr.mxu0 0.0
    %2608 = vmatpush2.msra.mxu0 0.0
    %2609 = vmatprep.subr.mxu0 0.0
    %2610 = vmatpush2.msra.mxu0 0.0
    %2611 = vmatprep.subr.mxu0 0.0
    %2612 = vmatpush2.msra.mxu0 0.0
    %2613 = vmatprep.subr.mxu0 0.0
    %2614 = vmatpush2.msra.mxu0 0.0
    %2615 = vmatprep.subr.mxu0 0.0
    %2616 = vmatpush2.msra.mxu0 0.0
    %2617 = vmatprep.subr.mxu0 0.0
    %2618 = vmatpush2.msra.mxu0 0.0
    %2619 = vmatprep.subr.mxu0 0.0
    %2620 = vmatpush2.msra.mxu0 0.0
    %2621 = vmatprep.subr.mxu0 0.0
    %2622 = vmatpush2.msra.mxu0 0.0
    %2623 = vmatprep.subr.mxu0 0.0
    %2624 = vmatpush2.msra.mxu0 0.0
    %2625 = vmatprep.subr.mxu0 0.0
    %2626 = vmatpush2.msra.mxu0 0.0
    %2627 = vmatprep.subr.mxu0 0.0
    %2628 = vmatpush2.msra.mxu0 0.0
    %2629 = vmatprep.subr.mxu0 0.0
    %2630 = vmatpush2.msra.mxu0 0.0
    %2631 = vmatprep.subr.mxu0 0.0
    %2632 = vmatpush2.msra.mxu0 0.0
    %2633 = vmatprep.mubr.f32.mxu0 0.0
    %2634 = vmatmul.mubr.f32.gmra.mxu0 %v2562
    %v2635 = vpop.f32.mrf.mxu0
    %v2636 = vadd.f32 0.0, %v2635
    %v2637 = vpop.f32.mrf.mxu0
    %v2638 = vadd.f32 0.0, %v2637
    %2639 = vdwg.mxu0
    %2640 = vmatprep.subr.mxu0 %v403
    %2641 = vmatpush1.msra.mxu0 %v402
    %2642 = vmatprep.subr.mxu0 %v399
    %2643 = vmatpush1.msra.mxu0 %v398
    %2644 = vmatprep.subr.mxu0 %v395
    %2645 = vmatpush1.msra.mxu0 %v394
    %2646 = vmatprep.subr.mxu0 %v391
    %2647 = vmatpush1.msra.mxu0 %v390
    %2648 = vmatprep.subr.mxu0 %v387
    %2649 = vmatpush1.msra.mxu0 %v386
    %2650 = vmatprep.subr.mxu0 %v383
    %2651 = vmatpush1.msra.mxu0 %v382
    %2652 = vmatprep.subr.mxu0 %v379
    %2653 = vmatpush1.msra.mxu0 %v378
    %2654 = vmatprep.subr.mxu0 %v375
    %2655 = vmatpush1.msra.mxu0 %v374
    %2656 = vmatprep.subr.mxu0 %v371
    %2657 = vmatpush1.msra.mxu0 %v370
    %2658 = vmatprep.subr.mxu0 %v367
    %2659 = vmatpush1.msra.mxu0 %v366
    %2660 = vmatprep.subr.mxu0 %v363
    %2661 = vmatpush1.msra.mxu0 %v362
    %2662 = vmatprep.subr.mxu0 %v359
    %2663 = vmatpush1.msra.mxu0 %v358
    %2664 = vmatprep.subr.mxu0 %v355
    %2665 = vmatpush1.msra.mxu0 %v354
    %2666 = vmatprep.subr.mxu0 %v351
    %2667 = vmatpush1.msra.mxu0 %v350
    %2668 = vmatprep.subr.mxu0 %v347
    %2669 = vmatpush1.msra.mxu0 %v346
    %2670 = vmatprep.subr.mxu0 %v343
    %2671 = vmatpush1.msra.mxu0 %v342
    %2672 = vmatprep.subr.mxu0 0.0
    %2673 = vmatpush2.msra.mxu0 0.0
    %2674 = vmatprep.subr.mxu0 0.0
    %2675 = vmatpush2.msra.mxu0 0.0
    %2676 = vmatprep.subr.mxu0 0.0
    %2677 = vmatpush2.msra.mxu0 0.0
    %2678 = vmatprep.subr.mxu0 0.0
    %2679 = vmatpush2.msra.mxu0 0.0
    %2680 = vmatprep.subr.mxu0 0.0
    %2681 = vmatpush2.msra.mxu0 0.0
    %2682 = vmatprep.subr.mxu0 0.0
    %2683 = vmatpush2.msra.mxu0 0.0
    %2684 = vmatprep.subr.mxu0 0.0
    %2685 = vmatpush2.msra.mxu0 0.0
    %2686 = vmatprep.subr.mxu0 0.0
    %2687 = vmatpush2.msra.mxu0 0.0
    %2688 = vmatprep.subr.mxu0 0.0
    %2689 = vmatpush2.msra.mxu0 0.0
    %2690 = vmatprep.subr.mxu0 0.0
    %2691 = vmatpush2.msra.mxu0 0.0
    %2692 = vmatprep.subr.mxu0 0.0
    %2693 = vmatpush2.msra.mxu0 0.0
    %2694 = vmatprep.subr.mxu0 0.0
    %2695 = vmatpush2.msra.mxu0 0.0
    %2696 = vmatprep.subr.mxu0 0.0
    %2697 = vmatpush2.msra.mxu0 0.0
    %2698 = vmatprep.subr.mxu0 0.0
    %2699 = vmatpush2.msra.mxu0 0.0
    %2700 = vmatprep.subr.mxu0 0.0
    %2701 = vmatpush2.msra.mxu0 0.0
    %2702 = vmatprep.subr.mxu0 0.0
    %2703 = vmatpush2.msra.mxu0 0.0
    %2704 = vmatprep.mubr.f32.mxu0 0.0
    %2705 = vmatmul.mubr.f32.gmra.mxu0 %v2562
    %v2706 = vpop.f32.mrf.mxu0
    %v2707 = vadd.f32 0.0, %v2706
    %v2708 = vpop.f32.mrf.mxu0
    %v2709 = vadd.f32 0.0, %v2708
    %2710 = vdwg.mxu0
    %v2711 = vadd.f32 %v2146, %v2636
    %v2712 = vadd.f32 %v2148, %v2638
    %v2713 = vadd.f32 %v2217, %v2707
    %v2714 = vadd.f32 %v2219, %v2709
    %v2715 = vxor.u32 %v2711, 2147483648
    %v2716 = vxor.u32 %v2712, 2147483648
    %v2717 = vxor.u32 %v2713, 2147483648
    %v2718 = vmul.f32 %v2715, 1.442695
    %v2719 = vpow.pop %v2718
    %v2720 = vmul.f32 %v2716, 1.442695
    %v2721 = vpow.pop %v2720
    %v2722 = vmul.f32 %v2717, 1.442695
    %v2723 = vpow.pop %v2722
    %v2724 = vadd.f32 %v2719, 1.0
    %v2725 = vadd.f32 %v2721, 1.0
    %v2726 = vadd.f32 %v2723, 1.0
    %v2727 = vrcp.pop %v2724
    %v2728 = vmul.f32 1.0, %v2727
    %v2729 = vrcp.pop %v2725
    %v2730 = vmul.f32 1.0, %v2729
    %v2731 = vrcp.pop %v2726
    %v2732 = vmul.f32 1.0, %v2731
    %v2733 = vtanh.pop %v2714
    %v2734 = vmul.f32 %v2730, %v2560
    %v2735 = vmul.f32 %v2728, %v2733
    %v2736 = vadd.f32 %v2734, %v2735
    %v2737 = vtanh.pop %v2736
    %v2738 = vmul.f32 %v2732, %v2737
    %2740 = vrot.lane.b32.xlu0 %v2738, 12
    %v2741 = vpop.permute.xlu0 %2740
    %vm2743 = vcmask 140384
    %2744 = vst.msk [vmem:[%s8] sm:$0x3] %vm2743, %v2741
    %2745 = vmatprep.subr.mxu0 %v401
    %2746 = vmatpush1.msra.mxu0 %v400
    %2747 = vmatprep.subr.mxu0 %v397
    %2748 = vmatpush1.msra.mxu0 %v396
    %2749 = vmatprep.subr.mxu0 %v393
    %2750 = vmatpush1.msra.mxu0 %v392
    %2751 = vmatprep.subr.mxu0 %v389
    %2752 = vmatpush1.msra.mxu0 %v388
    %2753 = vmatprep.subr.mxu0 %v385
    %2754 = vmatpush1.msra.mxu0 %v384
    %2755 = vmatprep.subr.mxu0 %v381
    %2756 = vmatpush1.msra.mxu0 %v380
    %2757 = vmatprep.subr.mxu0 %v377
    %2758 = vmatpush1.msra.mxu0 %v376
    %2759 = vmatprep.subr.mxu0 %v373
    %2760 = vmatpush1.msra.mxu0 %v372
    %2761 = vmatprep.subr.mxu0 %v369
    %2762 = vmatpush1.msra.mxu0 %v368
    %2763 = vmatprep.subr.mxu0 %v365
    %2764 = vmatpush1.msra.mxu0 %v364
    %2765 = vmatprep.subr.mxu0 %v361
    %2766 = vmatpush1.msra.mxu0 %v360
    %2767 = vmatprep.subr.mxu0 %v357
    %2768 = vmatpush1.msra.mxu0 %v356
    %2769 = vmatprep.subr.mxu0 %v353
    %2770 = vmatpush1.msra.mxu0 %v352
    %2771 = vmatprep.subr.mxu0 %v349
    %2772 = vmatpush1.msra.mxu0 %v348
    %2773 = vmatprep.subr.mxu0 %v345
    %2774 = vmatpush1.msra.mxu0 %v344
    %2775 = vmatprep.subr.mxu0 %v341
    %2776 = vmatpush1.msra.mxu0 %v340
    %2777 = vmatprep.subr.mxu0 0.0
    %2778 = vmatpush2.msra.mxu0 0.0
    %2779 = vmatprep.subr.mxu0 0.0
    %2780 = vmatpush2.msra.mxu0 0.0
    %2781 = vmatprep.subr.mxu0 0.0
    %2782 = vmatpush2.msra.mxu0 0.0
    %2783 = vmatprep.subr.mxu0 0.0
    %2784 = vmatpush2.msra.mxu0 0.0
    %2785 = vmatprep.subr.mxu0 0.0
    %2786 = vmatpush2.msra.mxu0 0.0
    %2787 = vmatprep.subr.mxu0 0.0
    %2788 = vmatpush2.msra.mxu0 0.0
    %2789 = vmatprep.subr.mxu0 0.0
    %2790 = vmatpush2.msra.mxu0 0.0
    %2791 = vmatprep.subr.mxu0 0.0
    %2792 = vmatpush2.msra.mxu0 0.0
    %2793 = vmatprep.subr.mxu0 0.0
    %2794 = vmatpush2.msra.mxu0 0.0
    %2795 = vmatprep.subr.mxu0 0.0
    %2796 = vmatpush2.msra.mxu0 0.0
    %2797 = vmatprep.subr.mxu0 0.0
    %2798 = vmatpush2.msra.mxu0 0.0
    %2799 = vmatprep.subr.mxu0 0.0
    %2800 = vmatpush2.msra.mxu0 0.0
    %2801 = vmatprep.subr.mxu0 0.0
    %2802 = vmatpush2.msra.mxu0 0.0
    %2803 = vmatprep.subr.mxu0 0.0
    %2804 = vmatpush2.msra.mxu0 0.0
    %2805 = vmatprep.subr.mxu0 0.0
    %2806 = vmatpush2.msra.mxu0 0.0
    %2807 = vmatprep.subr.mxu0 0.0
    %2808 = vmatpush2.msra.mxu0 0.0
    %2809 = vmatprep.mubr.f32.mxu0 0.0
    %2810 = vmatmul.mubr.f32.gmra.mxu0 %v2738
    %v2811 = vpop.f32.mrf.mxu0
    %v2812 = vadd.f32 0.0, %v2811
    %v2813 = vpop.f32.mrf.mxu0
    %v2814 = vadd.f32 0.0, %v2813
    %2815 = vdwg.mxu0
    %2816 = vmatprep.subr.mxu0 %v403
    %2817 = vmatpush1.msra.mxu0 %v402
    %2818 = vmatprep.subr.mxu0 %v399
    %2819 = vmatpush1.msra.mxu0 %v398
    %2820 = vmatprep.subr.mxu0 %v395
    %2821 = vmatpush1.msra.mxu0 %v394
    %2822 = vmatprep.subr.mxu0 %v391
    %2823 = vmatpush1.msra.mxu0 %v390
    %2824 = vmatprep.subr.mxu0 %v387
    %2825 = vmatpush1.msra.mxu0 %v386
    %2826 = vmatprep.subr.mxu0 %v383
    %2827 = vmatpush1.msra.mxu0 %v382
    %2828 = vmatprep.subr.mxu0 %v379
    %2829 = vmatpush1.msra.mxu0 %v378
    %2830 = vmatprep.subr.mxu0 %v375
    %2831 = vmatpush1.msra.mxu0 %v374
    %2832 = vmatprep.subr.mxu0 %v371
    %2833 = vmatpush1.msra.mxu0 %v370
    %2834 = vmatprep.subr.mxu0 %v367
    %2835 = vmatpush1.msra.mxu0 %v366
    %2836 = vmatprep.subr.mxu0 %v363
    %2837 = vmatpush1.msra.mxu0 %v362
    %2838 = vmatprep.subr.mxu0 %v359
    %2839 = vmatpush1.msra.mxu0 %v358
    %2840 = vmatprep.subr.mxu0 %v355
    %2841 = vmatpush1.msra.mxu0 %v354
    %2842 = vmatprep.subr.mxu0 %v351
    %2843 = vmatpush1.msra.mxu0 %v350
    %2844 = vmatprep.subr.mxu0 %v347
    %2845 = vmatpush1.msra.mxu0 %v346
    %2846 = vmatprep.subr.mxu0 %v343
    %2847 = vmatpush1.msra.mxu0 %v342
    %2848 = vmatprep.subr.mxu0 0.0
    %2849 = vmatpush2.msra.mxu0 0.0
    %2850 = vmatprep.subr.mxu0 0.0
    %2851 = vmatpush2.msra.mxu0 0.0
    %2852 = vmatprep.subr.mxu0 0.0
    %2853 = vmatpush2.msra.mxu0 0.0
    %2854 = vmatprep.subr.mxu0 0.0
    %2855 = vmatpush2.msra.mxu0 0.0
    %2856 = vmatprep.subr.mxu0 0.0
    %2857 = vmatpush2.msra.mxu0 0.0
    %2858 = vmatprep.subr.mxu0 0.0
    %2859 = vmatpush2.msra.mxu0 0.0
    %2860 = vmatprep.subr.mxu0 0.0
    %2861 = vmatpush2.msra.mxu0 0.0
    %2862 = vmatprep.subr.mxu0 0.0
    %2863 = vmatpush2.msra.mxu0 0.0
    %2864 = vmatprep.subr.mxu0 0.0
    %2865 = vmatpush2.msra.mxu0 0.0
    %2866 = vmatprep.subr.mxu0 0.0
    %2867 = vmatpush2.msra.mxu0 0.0
    %2868 = vmatprep.subr.mxu0 0.0
    %2869 = vmatpush2.msra.mxu0 0.0
    %2870 = vmatprep.subr.mxu0 0.0
    %2871 = vmatpush2.msra.mxu0 0.0
    %2872 = vmatprep.subr.mxu0 0.0
    %2873 = vmatpush2.msra.mxu0 0.0
    %2874 = vmatprep.subr.mxu0 0.0
    %2875 = vmatpush2.msra.mxu0 0.0
    %2876 = vmatprep.subr.mxu0 0.0
    %2877 = vmatpush2.msra.mxu0 0.0
    %2878 = vmatprep.subr.mxu0 0.0
    %2879 = vmatpush2.msra.mxu0 0.0
    %2880 = vmatprep.mubr.f32.mxu0 0.0
    %2881 = vmatmul.mubr.f32.gmra.mxu0 %v2738
    %v2882 = vpop.f32.mrf.mxu0
    %v2883 = vadd.f32 0.0, %v2882
    %v2884 = vpop.f32.mrf.mxu0
    %v2885 = vadd.f32 0.0, %v2884
    %2886 = vdwg.mxu0
    %v2887 = vadd.f32 %v2146, %v2812
    %v2888 = vadd.f32 %v2148, %v2814
    %v2889 = vadd.f32 %v2217, %v2883
    %v2890 = vadd.f32 %v2219, %v2885
    %v2891 = vxor.u32 %v2887, 2147483648
    %v2892 = vxor.u32 %v2888, 2147483648
    %v2893 = vxor.u32 %v2889, 2147483648
    %v2894 = vmul.f32 %v2891, 1.442695
    %v2895 = vpow.pop %v2894
    %v2896 = vmul.f32 %v2892, 1.442695
    %v2897 = vpow.pop %v2896
    %v2898 = vmul.f32 %v2893, 1.442695
    %v2899 = vpow.pop %v2898
    %v2900 = vadd.f32 %v2895, 1.0
    %v2901 = vadd.f32 %v2897, 1.0
    %v2902 = vadd.f32 %v2899, 1.0
    %v2903 = vrcp.pop %v2900
    %v2904 = vmul.f32 1.0, %v2903
    %v2905 = vrcp.pop %v2901
    %v2906 = vmul.f32 1.0, %v2905
    %v2907 = vrcp.pop %v2902
    %v2908 = vmul.f32 1.0, %v2907
    %v2909 = vtanh.pop %v2890
    %v2910 = vmul.f32 %v2906, %v2736
    %v2911 = vmul.f32 %v2904, %v2909
    %v2912 = vadd.f32 %v2910, %v2911
    %v2913 = vtanh.pop %v2912
    %v2914 = vmul.f32 %v2908, %v2913
    %2916 = vrot.lane.b32.xlu0 %v2914, 18
    %v2917 = vpop.permute.xlu0 %2916
    %vm2919 = vcmask 189584
    %2920 = vst.msk [vmem:[%s8] sm:$0x3] %vm2919, %v2917
    %2921 = vmatprep.subr.mxu0 %v401
    %2922 = vmatpush1.msra.mxu0 %v400
    %2923 = vmatprep.subr.mxu0 %v397
    %2924 = vmatpush1.msra.mxu0 %v396
    %2925 = vmatprep.subr.mxu0 %v393
    %2926 = vmatpush1.msra.mxu0 %v392
    %2927 = vmatprep.subr.mxu0 %v389
    %2928 = vmatpush1.msra.mxu0 %v388
    %2929 = vmatprep.subr.mxu0 %v385
    %2930 = vmatpush1.msra.mxu0 %v384
    %2931 = vmatprep.subr.mxu0 %v381
    %2932 = vmatpush1.msra.mxu0 %v380
    %2933 = vmatprep.subr.mxu0 %v377
    %2934 = vmatpush1.msra.mxu0 %v376
    %2935 = vmatprep.subr.mxu0 %v373
    %2936 = vmatpush1.msra.mxu0 %v372
    %2937 = vmatprep.subr.mxu0 %v369
    %2938 = vmatpush1.msra.mxu0 %v368
    %2939 = vmatprep.subr.mxu0 %v365
    %2940 = vmatpush1.msra.mxu0 %v364
    %2941 = vmatprep.subr.mxu0 %v361
    %2942 = vmatpush1.msra.mxu0 %v360
    %2943 = vmatprep.subr.mxu0 %v357
    %2944 = vmatpush1.msra.mxu0 %v356
    %2945 = vmatprep.subr.mxu0 %v353
    %2946 = vmatpush1.msra.mxu0 %v352
    %2947 = vmatprep.subr.mxu0 %v349
    %2948 = vmatpush1.msra.mxu0 %v348
    %2949 = vmatprep.subr.mxu0 %v345
    %2950 = vmatpush1.msra.mxu0 %v344
    %2951 = vmatprep.subr.mxu0 %v341
    %2952 = vmatpush1.msra.mxu0 %v340
    %2953 = vmatprep.subr.mxu0 0.0
    %2954 = vmatpush2.msra.mxu0 0.0
    %2955 = vmatprep.subr.mxu0 0.0
    %2956 = vmatpush2.msra.mxu0 0.0
    %2957 = vmatprep.subr.mxu0 0.0
    %2958 = vmatpush2.msra.mxu0 0.0
    %2959 = vmatprep.subr.mxu0 0.0
    %2960 = vmatpush2.msra.mxu0 0.0
    %2961 = vmatprep.subr.mxu0 0.0
    %2962 = vmatpush2.msra.mxu0 0.0
    %2963 = vmatprep.subr.mxu0 0.0
    %2964 = vmatpush2.msra.mxu0 0.0
    %2965 = vmatprep.subr.mxu0 0.0
    %2966 = vmatpush2.msra.mxu0 0.0
    %2967 = vmatprep.subr.mxu0 0.0
    %2968 = vmatpush2.msra.mxu0 0.0
    %2969 = vmatprep.subr.mxu0 0.0
    %2970 = vmatpush2.msra.mxu0 0.0
    %2971 = vmatprep.subr.mxu0 0.0
    %2972 = vmatpush2.msra.mxu0 0.0
    %2973 = vmatprep.subr.mxu0 0.0
    %2974 = vmatpush2.msra.mxu0 0.0
    %2975 = vmatprep.subr.mxu0 0.0
    %2976 = vmatpush2.msra.mxu0 0.0
    %2977 = vmatprep.subr.mxu0 0.0
    %2978 = vmatpush2.msra.mxu0 0.0
    %2979 = vmatprep.subr.mxu0 0.0
    %2980 = vmatpush2.msra.mxu0 0.0
    %2981 = vmatprep.subr.mxu0 0.0
    %2982 = vmatpush2.msra.mxu0 0.0
    %2983 = vmatprep.subr.mxu0 0.0
    %2984 = vmatpush2.msra.mxu0 0.0
    %2985 = vmatprep.mubr.f32.mxu0 0.0
    %2986 = vmatmul.mubr.f32.gmra.mxu0 %v2914
    %v2987 = vpop.f32.mrf.mxu0
    %v2988 = vadd.f32 0.0, %v2987
    %v2989 = vpop.f32.mrf.mxu0
    %v2990 = vadd.f32 0.0, %v2989
    %2991 = vdwg.mxu0
    %2992 = vmatprep.subr.mxu0 %v403
    %2993 = vmatpush1.msra.mxu0 %v402
    %2994 = vmatprep.subr.mxu0 %v399
    %2995 = vmatpush1.msra.mxu0 %v398
    %2996 = vmatprep.subr.mxu0 %v395
    %2997 = vmatpush1.msra.mxu0 %v394
    %2998 = vmatprep.subr.mxu0 %v391
    %2999 = vmatpush1.msra.mxu0 %v390
    %3000 = vmatprep.subr.mxu0 %v387
    %3001 = vmatpush1.msra.mxu0 %v386
    %3002 = vmatprep.subr.mxu0 %v383
    %3003 = vmatpush1.msra.mxu0 %v382
    %3004 = vmatprep.subr.mxu0 %v379
    %3005 = vmatpush1.msra.mxu0 %v378
    %3006 = vmatprep.subr.mxu0 %v375
    %3007 = vmatpush1.msra.mxu0 %v374
    %3008 = vmatprep.subr.mxu0 %v371
    %3009 = vmatpush1.msra.mxu0 %v370
    %3010 = vmatprep.subr.mxu0 %v367
    %3011 = vmatpush1.msra.mxu0 %v366
    %3012 = vmatprep.subr.mxu0 %v363
    %3013 = vmatpush1.msra.mxu0 %v362
    %3014 = vmatprep.subr.mxu0 %v359
    %3015 = vmatpush1.msra.mxu0 %v358
    %3016 = vmatprep.subr.mxu0 %v355
    %3017 = vmatpush1.msra.mxu0 %v354
    %3018 = vmatprep.subr.mxu0 %v351
    %3019 = vmatpush1.msra.mxu0 %v350
    %3020 = vmatprep.subr.mxu0 %v347
    %3021 = vmatpush1.msra.mxu0 %v346
    %3022 = vmatprep.subr.mxu0 %v343
    %3023 = vmatpush1.msra.mxu0 %v342
    %3024 = vmatprep.subr.mxu0 0.0
    %3025 = vmatpush2.msra.mxu0 0.0
    %3026 = vmatprep.subr.mxu0 0.0
    %3027 = vmatpush2.msra.mxu0 0.0
    %3028 = vmatprep.subr.mxu0 0.0
    %3029 = vmatpush2.msra.mxu0 0.0
    %3030 = vmatprep.subr.mxu0 0.0
    %3031 = vmatpush2.msra.mxu0 0.0
    %3032 = vmatprep.subr.mxu0 0.0
    %3033 = vmatpush2.msra.mxu0 0.0
    %3034 = vmatprep.subr.mxu0 0.0
    %3035 = vmatpush2.msra.mxu0 0.0
    %3036 = vmatprep.subr.mxu0 0.0
    %3037 = vmatpush2.msra.mxu0 0.0
    %3038 = vmatprep.subr.mxu0 0.0
    %3039 = vmatpush2.msra.mxu0 0.0
    %3040 = vmatprep.subr.mxu0 0.0
    %3041 = vmatpush2.msra.mxu0 0.0
    %3042 = vmatprep.subr.mxu0 0.0
    %3043 = vmatpush2.msra.mxu0 0.0
    %3044 = vmatprep.subr.mxu0 0.0
    %3045 = vmatpush2.msra.mxu0 0.0
    %3046 = vmatprep.subr.mxu0 0.0
    %3047 = vmatpush2.msra.mxu0 0.0
    %3048 = vmatprep.subr.mxu0 0.0
    %3049 = vmatpush2.msra.mxu0 0.0
    %3050 = vmatprep.subr.mxu0 0.0
    %3051 = vmatpush2.msra.mxu0 0.0
    %3052 = vmatprep.subr.mxu0 0.0
    %3053 = vmatpush2.msra.mxu0 0.0
    %3054 = vmatprep.subr.mxu0 0.0
    %3055 = vmatpush2.msra.mxu0 0.0
    %3056 = vmatprep.mubr.f32.mxu0 0.0
    %3057 = vmatmul.mubr.f32.gmra.mxu0 %v2914
    %v3058 = vpop.f32.mrf.mxu0
    %v3059 = vadd.f32 0.0, %v3058
    %v3060 = vpop.f32.mrf.mxu0
    %v3061 = vadd.f32 0.0, %v3060
    %3062 = vdwg.mxu0
    %v3063 = vadd.f32 %v2146, %v2988
    %v3064 = vadd.f32 %v2148, %v2990
    %v3065 = vadd.f32 %v2217, %v3059
    %v3066 = vadd.f32 %v2219, %v3061
    %v3067 = vxor.u32 %v3063, 2147483648
    %v3068 = vxor.u32 %v3064, 2147483648
    %v3069 = vxor.u32 %v3065, 2147483648
    %v3070 = vmul.f32 %v3067, 1.442695
    %v3071 = vpow.pop %v3070
    %v3072 = vmul.f32 %v3068, 1.442695
    %v3073 = vpow.pop %v3072
    %v3074 = vmul.f32 %v3069, 1.442695
    %v3075 = vpow.pop %v3074
    %v3076 = vadd.f32 %v3071, 1.0
    %v3077 = vadd.f32 %v3073, 1.0
    %v3078 = vadd.f32 %v3075, 1.0
    %v3079 = vrcp.pop %v3076
    %v3080 = vmul.f32 1.0, %v3079
    %v3081 = vrcp.pop %v3077
    %v3082 = vmul.f32 1.0, %v3081
    %v3083 = vrcp.pop %v3078
    %v3084 = vmul.f32 1.0, %v3083
    %v3085 = vtanh.pop %v3066
    %v3086 = vmul.f32 %v3082, %v2912
    %v3087 = vmul.f32 %v3080, %v3085
    %v3088 = vadd.f32 %v3086, %v3087
    %v3089 = vtanh.pop %v3088
    %v3090 = vmul.f32 %v3084, %v3089
    %3092 = vrot.lane.b32.xlu0 %v3090, 24
    %v3093 = vpop.permute.xlu0 %3092
    %vm3095 = vcmask 238784
    %3096 = vst.msk [vmem:[%s8] sm:$0x3] %vm3095, %v3093
    %3097 = vmatprep.subr.mxu0 %v401
    %3098 = vmatpush1.msra.mxu0 %v400
    %3099 = vmatprep.subr.mxu0 %v397
    %3100 = vmatpush1.msra.mxu0 %v396
    %3101 = vmatprep.subr.mxu0 %v393
    %3102 = vmatpush1.msra.mxu0 %v392
    %3103 = vmatprep.subr.mxu0 %v389
    %3104 = vmatpush1.msra.mxu0 %v388
    %3105 = vmatprep.subr.mxu0 %v385
    %3106 = vmatpush1.msra.mxu0 %v384
    %3107 = vmatprep.subr.mxu0 %v381
    %3108 = vmatpush1.msra.mxu0 %v380
    %3109 = vmatprep.subr.mxu0 %v377
    %3110 = vmatpush1.msra.mxu0 %v376
    %3111 = vmatprep.subr.mxu0 %v373
    %3112 = vmatpush1.msra.mxu0 %v372
    %3113 = vmatprep.subr.mxu0 %v369
    %3114 = vmatpush1.msra.mxu0 %v368
    %3115 = vmatprep.subr.mxu0 %v365
    %3116 = vmatpush1.msra.mxu0 %v364
    %3117 = vmatprep.subr.mxu0 %v361
    %3118 = vmatpush1.msra.mxu0 %v360
    %3119 = vmatprep.subr.mxu0 %v357
    %3120 = vmatpush1.msra.mxu0 %v356
    %3121 = vmatprep.subr.mxu0 %v353
    %3122 = vmatpush1.msra.mxu0 %v352
    %3123 = vmatprep.subr.mxu0 %v349
    %3124 = vmatpush1.msra.mxu0 %v348
    %3125 = vmatprep.subr.mxu0 %v345
    %3126 = vmatpush1.msra.mxu0 %v344
    %3127 = vmatprep.subr.mxu0 %v341
    %3128 = vmatpush1.msra.mxu0 %v340
    %3129 = vmatprep.subr.mxu0 0.0
    %3130 = vmatpush2.msra.mxu0 0.0
    %3131 = vmatprep.subr.mxu0 0.0
    %3132 = vmatpush2.msra.mxu0 0.0
    %3133 = vmatprep.subr.mxu0 0.0
    %3134 = vmatpush2.msra.mxu0 0.0
    %3135 = vmatprep.subr.mxu0 0.0
    %3136 = vmatpush2.msra.mxu0 0.0
    %3137 = vmatprep.subr.mxu0 0.0
    %3138 = vmatpush2.msra.mxu0 0.0
    %3139 = vmatprep.subr.mxu0 0.0
    %3140 = vmatpush2.msra.mxu0 0.0
    %3141 = vmatprep.subr.mxu0 0.0
    %3142 = vmatpush2.msra.mxu0 0.0
    %3143 = vmatprep.subr.mxu0 0.0
    %3144 = vmatpush2.msra.mxu0 0.0
    %3145 = vmatprep.subr.mxu0 0.0
    %3146 = vmatpush2.msra.mxu0 0.0
    %3147 = vmatprep.subr.mxu0 0.0
    %3148 = vmatpush2.msra.mxu0 0.0
    %3149 = vmatprep.subr.mxu0 0.0
    %3150 = vmatpush2.msra.mxu0 0.0
    %3151 = vmatprep.subr.mxu0 0.0
    %3152 = vmatpush2.msra.mxu0 0.0
    %3153 = vmatprep.subr.mxu0 0.0
    %3154 = vmatpush2.msra.mxu0 0.0
    %3155 = vmatprep.subr.mxu0 0.0
    %3156 = vmatpush2.msra.mxu0 0.0
    %3157 = vmatprep.subr.mxu0 0.0
    %3158 = vmatpush2.msra.mxu0 0.0
    %3159 = vmatprep.subr.mxu0 0.0
    %3160 = vmatpush2.msra.mxu0 0.0
    %3161 = vmatprep.mubr.f32.mxu0 0.0
    %3162 = vmatmul.mubr.f32.gmra.mxu0 %v3090
    %v3163 = vpop.f32.mrf.mxu0
    %v3164 = vadd.f32 0.0, %v3163
    %v3165 = vpop.f32.mrf.mxu0
    %v3166 = vadd.f32 0.0, %v3165
    %3167 = vdwg.mxu0
    %3168 = vmatprep.subr.mxu0 %v403
    %3169 = vmatpush1.msra.mxu0 %v402
    %3170 = vmatprep.subr.mxu0 %v399
    %3171 = vmatpush1.msra.mxu0 %v398
    %3172 = vmatprep.subr.mxu0 %v395
    %3173 = vmatpush1.msra.mxu0 %v394
    %3174 = vmatprep.subr.mxu0 %v391
    %3175 = vmatpush1.msra.mxu0 %v390
    %3176 = vmatprep.subr.mxu0 %v387
    %3177 = vmatpush1.msra.mxu0 %v386
    %3178 = vmatprep.subr.mxu0 %v383
    %3179 = vmatpush1.msra.mxu0 %v382
    %3180 = vmatprep.subr.mxu0 %v379
    %3181 = vmatpush1.msra.mxu0 %v378
    %3182 = vmatprep.subr.mxu0 %v375
    %3183 = vmatpush1.msra.mxu0 %v374
    %3184 = vmatprep.subr.mxu0 %v371
    %3185 = vmatpush1.msra.mxu0 %v370
    %3186 = vmatprep.subr.mxu0 %v367
    %3187 = vmatpush1.msra.mxu0 %v366
    %3188 = vmatprep.subr.mxu0 %v363
    %3189 = vmatpush1.msra.mxu0 %v362
    %3190 = vmatprep.subr.mxu0 %v359
    %3191 = vmatpush1.msra.mxu0 %v358
    %3192 = vmatprep.subr.mxu0 %v355
    %3193 = vmatpush1.msra.mxu0 %v354
    %3194 = vmatprep.subr.mxu0 %v351
    %3195 = vmatpush1.msra.mxu0 %v350
    %3196 = vmatprep.subr.mxu0 %v347
    %3197 = vmatpush1.msra.mxu0 %v346
    %3198 = vmatprep.subr.mxu0 %v343
    %3199 = vmatpush1.msra.mxu0 %v342
    %3200 = vmatprep.subr.mxu0 0.0
    %3201 = vmatpush2.msra.mxu0 0.0
    %3202 = vmatprep.subr.mxu0 0.0
    %3203 = vmatpush2.msra.mxu0 0.0
    %3204 = vmatprep.subr.mxu0 0.0
    %3205 = vmatpush2.msra.mxu0 0.0
    %3206 = vmatprep.subr.mxu0 0.0
    %3207 = vmatpush2.msra.mxu0 0.0
    %3208 = vmatprep.subr.mxu0 0.0
    %3209 = vmatpush2.msra.mxu0 0.0
    %3210 = vmatprep.subr.mxu0 0.0
    %3211 = vmatpush2.msra.mxu0 0.0
    %3212 = vmatprep.subr.mxu0 0.0
    %3213 = vmatpush2.msra.mxu0 0.0
    %3214 = vmatprep.subr.mxu0 0.0
    %3215 = vmatpush2.msra.mxu0 0.0
    %3216 = vmatprep.subr.mxu0 0.0
    %3217 = vmatpush2.msra.mxu0 0.0
    %3218 = vmatprep.subr.mxu0 0.0
    %3219 = vmatpush2.msra.mxu0 0.0
    %3220 = vmatprep.subr.mxu0 0.0
    %3221 = vmatpush2.msra.mxu0 0.0
    %3222 = vmatprep.subr.mxu0 0.0
    %3223 = vmatpush2.msra.mxu0 0.0
    %3224 = vmatprep.subr.mxu0 0.0
    %3225 = vmatpush2.msra.mxu0 0.0
    %3226 = vmatprep.subr.mxu0 0.0
    %3227 = vmatpush2.msra.mxu0 0.0
    %3228 = vmatprep.subr.mxu0 0.0
    %3229 = vmatpush2.msra.mxu0 0.0
    %3230 = vmatprep.subr.mxu0 0.0
    %3231 = vmatpush2.msra.mxu0 0.0
    %3232 = vmatprep.mubr.f32.mxu0 0.0
    %3233 = vmatmul.mubr.f32.gmra.mxu0 %v3090
    %v3234 = vpop.f32.mrf.mxu0
    %v3235 = vadd.f32 0.0, %v3234
    %v3236 = vpop.f32.mrf.mxu0
    %v3237 = vadd.f32 0.0, %v3236
    %3238 = vdwg.mxu0
    %v3239 = vadd.f32 %v2146, %v3164
    %v3240 = vadd.f32 %v2148, %v3166
    %v3241 = vadd.f32 %v2217, %v3235
    %v3242 = vadd.f32 %v2219, %v3237
    %v3243 = vxor.u32 %v3239, 2147483648
    %v3244 = vxor.u32 %v3240, 2147483648
    %v3245 = vxor.u32 %v3241, 2147483648
    %v3246 = vmul.f32 %v3243, 1.442695
    %v3247 = vpow.pop %v3246
    %v3248 = vmul.f32 %v3244, 1.442695
    %v3249 = vpow.pop %v3248
    %v3250 = vmul.f32 %v3245, 1.442695
    %v3251 = vpow.pop %v3250
    %v3252 = vadd.f32 %v3247, 1.0
    %v3253 = vadd.f32 %v3249, 1.0
    %v3254 = vadd.f32 %v3251, 1.0
    %v3255 = vrcp.pop %v3252
    %v3256 = vmul.f32 1.0, %v3255
    %v3257 = vrcp.pop %v3253
    %v3258 = vmul.f32 1.0, %v3257
    %v3259 = vrcp.pop %v3254
    %v3260 = vmul.f32 1.0, %v3259
    %v3261 = vtanh.pop %v3242
    %v3262 = vmul.f32 %v3258, %v3088
    %v3263 = vmul.f32 %v3256, %v3261
    %v3264 = vadd.f32 %v3262, %v3263
    %v3265 = vtanh.pop %v3264
    %v3266 = vmul.f32 %v3260, %v3265
    %3268 = vrot.lane.b32.xlu0 %v3266, 30
    %v3269 = vpop.permute.xlu0 %3268
    %vm3271 = vcmask 287984
    %3272 = vst.msk [vmem:[%s8] sm:$0x3] %vm3271, %v3269
    %3273 = vmatprep.subr.mxu0 %v401
    %3274 = vmatpush1.msra.mxu0 %v400
    %3275 = vmatprep.subr.mxu0 %v397
    %3276 = vmatpush1.msra.mxu0 %v396
    %3277 = vmatprep.subr.mxu0 %v393
    %3278 = vmatpush1.msra.mxu0 %v392
    %3279 = vmatprep.subr.mxu0 %v389
    %3280 = vmatpush1.msra.mxu0 %v388
    %3281 = vmatprep.subr.mxu0 %v385
    %3282 = vmatpush1.msra.mxu0 %v384
    %3283 = vmatprep.subr.mxu0 %v381
    %3284 = vmatpush1.msra.mxu0 %v380
    %3285 = vmatprep.subr.mxu0 %v377
    %3286 = vmatpush1.msra.mxu0 %v376
    %3287 = vmatprep.subr.mxu0 %v373
    %3288 = vmatpush1.msra.mxu0 %v372
    %3289 = vmatprep.subr.mxu0 %v369
    %3290 = vmatpush1.msra.mxu0 %v368
    %3291 = vmatprep.subr.mxu0 %v365
    %3292 = vmatpush1.msra.mxu0 %v364
    %3293 = vmatprep.subr.mxu0 %v361
    %3294 = vmatpush1.msra.mxu0 %v360
    %3295 = vmatprep.subr.mxu0 %v357
    %3296 = vmatpush1.msra.mxu0 %v356
    %3297 = vmatprep.subr.mxu0 %v353
    %3298 = vmatpush1.msra.mxu0 %v352
    %3299 = vmatprep.subr.mxu0 %v349
    %3300 = vmatpush1.msra.mxu0 %v348
    %3301 = vmatprep.subr.mxu0 %v345
    %3302 = vmatpush1.msra.mxu0 %v344
    %3303 = vmatprep.subr.mxu0 %v341
    %3304 = vmatpush1.msra.mxu0 %v340
    %3305 = vmatprep.subr.mxu0 0.0
    %3306 = vmatpush2.msra.mxu0 0.0
    %3307 = vmatprep.subr.mxu0 0.0
    %3308 = vmatpush2.msra.mxu0 0.0
    %3309 = vmatprep.subr.mxu0 0.0
    %3310 = vmatpush2.msra.mxu0 0.0
    %3311 = vmatprep.subr.mxu0 0.0
    %3312 = vmatpush2.msra.mxu0 0.0
    %3313 = vmatprep.subr.mxu0 0.0
    %3314 = vmatpush2.msra.mxu0 0.0
    %3315 = vmatprep.subr.mxu0 0.0
    %3316 = vmatpush2.msra.mxu0 0.0
    %3317 = vmatprep.subr.mxu0 0.0
    %3318 = vmatpush2.msra.mxu0 0.0
    %3319 = vmatprep.subr.mxu0 0.0
    %3320 = vmatpush2.msra.mxu0 0.0
    %3321 = vmatprep.subr.mxu0 0.0
    %3322 = vmatpush2.msra.mxu0 0.0
    %3323 = vmatprep.subr.mxu0 0.0
    %3324 = vmatpush2.msra.mxu0 0.0
    %3325 = vmatprep.subr.mxu0 0.0
    %3326 = vmatpush2.msra.mxu0 0.0
    %3327 = vmatprep.subr.mxu0 0.0
    %3328 = vmatpush2.msra.mxu0 0.0
    %3329 = vmatprep.subr.mxu0 0.0
    %3330 = vmatpush2.msra.mxu0 0.0
    %3331 = vmatprep.subr.mxu0 0.0
    %3332 = vmatpush2.msra.mxu0 0.0
    %3333 = vmatprep.subr.mxu0 0.0
    %3334 = vmatpush2.msra.mxu0 0.0
    %3335 = vmatprep.subr.mxu0 0.0
    %3336 = vmatpush2.msra.mxu0 0.0
    %3337 = vmatprep.mubr.f32.mxu0 0.0
    %3338 = vmatmul.mubr.f32.gmra.mxu0 %v3266
    %v3339 = vpop.f32.mrf.mxu0
    %v3340 = vadd.f32 0.0, %v3339
    %v3341 = vpop.f32.mrf.mxu0
    %v3342 = vadd.f32 0.0, %v3341
    %3343 = vdwg.mxu0
    %3344 = vmatprep.subr.mxu0 %v403
    %3345 = vmatpush1.msra.mxu0 %v402
    %3346 = vmatprep.subr.mxu0 %v399
    %3347 = vmatpush1.msra.mxu0 %v398
    %3348 = vmatprep.subr.mxu0 %v395
    %3349 = vmatpush1.msra.mxu0 %v394
    %3350 = vmatprep.subr.mxu0 %v391
    %3351 = vmatpush1.msra.mxu0 %v390
    %3352 = vmatprep.subr.mxu0 %v387
    %3353 = vmatpush1.msra.mxu0 %v386
    %3354 = vmatprep.subr.mxu0 %v383
    %3355 = vmatpush1.msra.mxu0 %v382
    %3356 = vmatprep.subr.mxu0 %v379
    %3357 = vmatpush1.msra.mxu0 %v378
    %3358 = vmatprep.subr.mxu0 %v375
    %3359 = vmatpush1.msra.mxu0 %v374
    %3360 = vmatprep.subr.mxu0 %v371
    %3361 = vmatpush1.msra.mxu0 %v370
    %3362 = vmatprep.subr.mxu0 %v367
    %3363 = vmatpush1.msra.mxu0 %v366
    %3364 = vmatprep.subr.mxu0 %v363
    %3365 = vmatpush1.msra.mxu0 %v362
    %3366 = vmatprep.subr.mxu0 %v359
    %3367 = vmatpush1.msra.mxu0 %v358
    %3368 = vmatprep.subr.mxu0 %v355
    %3369 = vmatpush1.msra.mxu0 %v354
    %3370 = vmatprep.subr.mxu0 %v351
    %3371 = vmatpush1.msra.mxu0 %v350
    %3372 = vmatprep.subr.mxu0 %v347
    %3373 = vmatpush1.msra.mxu0 %v346
    %3374 = vmatprep.subr.mxu0 %v343
    %3375 = vmatpush1.msra.mxu0 %v342
    %3376 = vmatprep.subr.mxu0 0.0
    %3377 = vmatpush2.msra.mxu0 0.0
    %3378 = vmatprep.subr.mxu0 0.0
    %3379 = vmatpush2.msra.mxu0 0.0
    %3380 = vmatprep.subr.mxu0 0.0
    %3381 = vmatpush2.msra.mxu0 0.0
    %3382 = vmatprep.subr.mxu0 0.0
    %3383 = vmatpush2.msra.mxu0 0.0
    %3384 = vmatprep.subr.mxu0 0.0
    %3385 = vmatpush2.msra.mxu0 0.0
    %3386 = vmatprep.subr.mxu0 0.0
    %3387 = vmatpush2.msra.mxu0 0.0
    %3388 = vmatprep.subr.mxu0 0.0
    %3389 = vmatpush2.msra.mxu0 0.0
    %3390 = vmatprep.subr.mxu0 0.0
    %3391 = vmatpush2.msra.mxu0 0.0
    %3392 = vmatprep.subr.mxu0 0.0
    %3393 = vmatpush2.msra.mxu0 0.0
    %3394 = vmatprep.subr.mxu0 0.0
    %3395 = vmatpush2.msra.mxu0 0.0
    %3396 = vmatprep.subr.mxu0 0.0
    %3397 = vmatpush2.msra.mxu0 0.0
    %3398 = vmatprep.subr.mxu0 0.0
    %3399 = vmatpush2.msra.mxu0 0.0
    %3400 = vmatprep.subr.mxu0 0.0
    %3401 = vmatpush2.msra.mxu0 0.0
    %3402 = vmatprep.subr.mxu0 0.0
    %3403 = vmatpush2.msra.mxu0 0.0
    %3404 = vmatprep.subr.mxu0 0.0
    %3405 = vmatpush2.msra.mxu0 0.0
    %3406 = vmatprep.subr.mxu0 0.0
    %3407 = vmatpush2.msra.mxu0 0.0
    %3408 = vmatprep.mubr.f32.mxu0 0.0
    %3409 = vmatmul.mubr.f32.gmra.mxu0 %v3266
    %v3410 = vpop.f32.mrf.mxu0
    %v3411 = vadd.f32 0.0, %v3410
    %v3412 = vpop.f32.mrf.mxu0
    %v3413 = vadd.f32 0.0, %v3412
    %3414 = vdwg.mxu0
    %v3415 = vadd.f32 %v2146, %v3340
    %v3416 = vadd.f32 %v2148, %v3342
    %v3417 = vadd.f32 %v2217, %v3411
    %v3418 = vadd.f32 %v2219, %v3413
    %v3419 = vxor.u32 %v3415, 2147483648
    %v3420 = vxor.u32 %v3416, 2147483648
    %v3421 = vxor.u32 %v3417, 2147483648
    %v3422 = vmul.f32 %v3419, 1.442695
    %v3423 = vpow.pop %v3422
    %v3424 = vmul.f32 %v3420, 1.442695
    %v3425 = vpow.pop %v3424
    %v3426 = vmul.f32 %v3421, 1.442695
    %v3427 = vpow.pop %v3426
    %v3428 = vadd.f32 %v3423, 1.0
    %v3429 = vadd.f32 %v3425, 1.0
    %v3430 = vadd.f32 %v3427, 1.0
    %v3431 = vrcp.pop %v3428
    %v3432 = vmul.f32 1.0, %v3431
    %v3433 = vrcp.pop %v3429
    %v3434 = vmul.f32 1.0, %v3433
    %v3435 = vrcp.pop %v3430
    %v3436 = vmul.f32 1.0, %v3435
    %v3437 = vtanh.pop %v3418
    %v3438 = vmul.f32 %v3434, %v3264
    %v3439 = vmul.f32 %v3432, %v3437
    %v3440 = vadd.f32 %v3438, %v3439
    %v3441 = vtanh.pop %v3440
    %v3442 = vmul.f32 %v3436, %v3441
    %3444 = vrot.lane.b32.xlu0 %v3442, 36
    %v3445 = vpop.permute.xlu0 %3444
    %vm3447 = vcmask 337184
    %3448 = vst.msk [vmem:[%s8] sm:$0x3] %vm3447, %v3445
    %3449 = vmatprep.subr.mxu0 %v401
    %3450 = vmatpush1.msra.mxu0 %v400
    %3451 = vmatprep.subr.mxu0 %v397
    %3452 = vmatpush1.msra.mxu0 %v396
    %3453 = vmatprep.subr.mxu0 %v393
    %3454 = vmatpush1.msra.mxu0 %v392
    %3455 = vmatprep.subr.mxu0 %v389
    %3456 = vmatpush1.msra.mxu0 %v388
    %3457 = vmatprep.subr.mxu0 %v385
    %3458 = vmatpush1.msra.mxu0 %v384
    %3459 = vmatprep.subr.mxu0 %v381
    %3460 = vmatpush1.msra.mxu0 %v380
    %3461 = vmatprep.subr.mxu0 %v377
    %3462 = vmatpush1.msra.mxu0 %v376
    %3463 = vmatprep.subr.mxu0 %v373
    %3464 = vmatpush1.msra.mxu0 %v372
    %3465 = vmatprep.subr.mxu0 %v369
    %3466 = vmatpush1.msra.mxu0 %v368
    %3467 = vmatprep.subr.mxu0 %v365
    %3468 = vmatpush1.msra.mxu0 %v364
    %3469 = vmatprep.subr.mxu0 %v361
    %3470 = vmatpush1.msra.mxu0 %v360
    %3471 = vmatprep.subr.mxu0 %v357
    %3472 = vmatpush1.msra.mxu0 %v356
    %3473 = vmatprep.subr.mxu0 %v353
    %3474 = vmatpush1.msra.mxu0 %v352
    %3475 = vmatprep.subr.mxu0 %v349
    %3476 = vmatpush1.msra.mxu0 %v348
    %3477 = vmatprep.subr.mxu0 %v345
    %3478 = vmatpush1.msra.mxu0 %v344
    %3479 = vmatprep.subr.mxu0 %v341
    %3480 = vmatpush1.msra.mxu0 %v340
    %3481 = vmatprep.subr.mxu0 0.0
    %3482 = vmatpush2.msra.mxu0 0.0
    %3483 = vmatprep.subr.mxu0 0.0
    %3484 = vmatpush2.msra.mxu0 0.0
    %3485 = vmatprep.subr.mxu0 0.0
    %3486 = vmatpush2.msra.mxu0 0.0
    %3487 = vmatprep.subr.mxu0 0.0
    %3488 = vmatpush2.msra.mxu0 0.0
    %3489 = vmatprep.subr.mxu0 0.0
    %3490 = vmatpush2.msra.mxu0 0.0
    %3491 = vmatprep.subr.mxu0 0.0
    %3492 = vmatpush2.msra.mxu0 0.0
    %3493 = vmatprep.subr.mxu0 0.0
    %3494 = vmatpush2.msra.mxu0 0.0
    %3495 = vmatprep.subr.mxu0 0.0
    %3496 = vmatpush2.msra.mxu0 0.0
    %3497 = vmatprep.subr.mxu0 0.0
    %3498 = vmatpush2.msra.mxu0 0.0
    %3499 = vmatprep.subr.mxu0 0.0
    %3500 = vmatpush2.msra.mxu0 0.0
    %3501 = vmatprep.subr.mxu0 0.0
    %3502 = vmatpush2.msra.mxu0 0.0
    %3503 = vmatprep.subr.mxu0 0.0
    %3504 = vmatpush2.msra.mxu0 0.0
    %3505 = vmatprep.subr.mxu0 0.0
    %3506 = vmatpush2.msra.mxu0 0.0
    %3507 = vmatprep.subr.mxu0 0.0
    %3508 = vmatpush2.msra.mxu0 0.0
    %3509 = vmatprep.subr.mxu0 0.0
    %3510 = vmatpush2.msra.mxu0 0.0
    %3511 = vmatprep.subr.mxu0 0.0
    %3512 = vmatpush2.msra.mxu0 0.0
    %3513 = vmatprep.mubr.f32.mxu0 0.0
    %3514 = vmatmul.mubr.f32.gmra.mxu0 %v3442
    %v3515 = vpop.f32.mrf.mxu0
    %v3516 = vadd.f32 0.0, %v3515
    %v3517 = vpop.f32.mrf.mxu0
    %v3518 = vadd.f32 0.0, %v3517
    %3519 = vdwg.mxu0
    %3520 = vmatprep.subr.mxu0 %v403
    %3521 = vmatpush1.msra.mxu0 %v402
    %3522 = vmatprep.subr.mxu0 %v399
    %3523 = vmatpush1.msra.mxu0 %v398
    %3524 = vmatprep.subr.mxu0 %v395
    %3525 = vmatpush1.msra.mxu0 %v394
    %3526 = vmatprep.subr.mxu0 %v391
    %3527 = vmatpush1.msra.mxu0 %v390
    %3528 = vmatprep.subr.mxu0 %v387
    %3529 = vmatpush1.msra.mxu0 %v386
    %3530 = vmatprep.subr.mxu0 %v383
    %3531 = vmatpush1.msra.mxu0 %v382
    %3532 = vmatprep.subr.mxu0 %v379
    %3533 = vmatpush1.msra.mxu0 %v378
    %3534 = vmatprep.subr.mxu0 %v375
    %3535 = vmatpush1.msra.mxu0 %v374
    %3536 = vmatprep.subr.mxu0 %v371
    %3537 = vmatpush1.msra.mxu0 %v370
    %3538 = vmatprep.subr.mxu0 %v367
    %3539 = vmatpush1.msra.mxu0 %v366
    %3540 = vmatprep.subr.mxu0 %v363
    %3541 = vmatpush1.msra.mxu0 %v362
    %3542 = vmatprep.subr.mxu0 %v359
    %3543 = vmatpush1.msra.mxu0 %v358
    %3544 = vmatprep.subr.mxu0 %v355
    %3545 = vmatpush1.msra.mxu0 %v354
    %3546 = vmatprep.subr.mxu0 %v351
    %3547 = vmatpush1.msra.mxu0 %v350
    %3548 = vmatprep.subr.mxu0 %v347
    %3549 = vmatpush1.msra.mxu0 %v346
    %3550 = vmatprep.subr.mxu0 %v343
    %3551 = vmatpush1.msra.mxu0 %v342
    %3552 = vmatprep.subr.mxu0 0.0
    %3553 = vmatpush2.msra.mxu0 0.0
    %3554 = vmatprep.subr.mxu0 0.0
    %3555 = vmatpush2.msra.mxu0 0.0
    %3556 = vmatprep.subr.mxu0 0.0
    %3557 = vmatpush2.msra.mxu0 0.0
    %3558 = vmatprep.subr.mxu0 0.0
    %3559 = vmatpush2.msra.mxu0 0.0
    %3560 = vmatprep.subr.mxu0 0.0
    %3561 = vmatpush2.msra.mxu0 0.0
    %3562 = vmatprep.subr.mxu0 0.0
    %3563 = vmatpush2.msra.mxu0 0.0
    %3564 = vmatprep.subr.mxu0 0.0
    %3565 = vmatpush2.msra.mxu0 0.0
    %3566 = vmatprep.subr.mxu0 0.0
    %3567 = vmatpush2.msra.mxu0 0.0
    %3568 = vmatprep.subr.mxu0 0.0
    %3569 = vmatpush2.msra.mxu0 0.0
    %3570 = vmatprep.subr.mxu0 0.0
    %3571 = vmatpush2.msra.mxu0 0.0
    %3572 = vmatprep.subr.mxu0 0.0
    %3573 = vmatpush2.msra.mxu0 0.0
    %3574 = vmatprep.subr.mxu0 0.0
    %3575 = vmatpush2.msra.mxu0 0.0
    %3576 = vmatprep.subr.mxu0 0.0
    %3577 = vmatpush2.msra.mxu0 0.0
    %3578 = vmatprep.subr.mxu0 0.0
    %3579 = vmatpush2.msra.mxu0 0.0
    %3580 = vmatprep.subr.mxu0 0.0
    %3581 = vmatpush2.msra.mxu0 0.0
    %3582 = vmatprep.subr.mxu0 0.0
    %3583 = vmatpush2.msra.mxu0 0.0
    %3584 = vmatprep.mubr.f32.mxu0 0.0
    %3585 = vmatmul.mubr.f32.gmra.mxu0 %v3442
    %v3586 = vpop.f32.mrf.mxu0
    %v3587 = vadd.f32 0.0, %v3586
    %v3588 = vpop.f32.mrf.mxu0
    %v3589 = vadd.f32 0.0, %v3588
    %3590 = vdwg.mxu0
    %v3591 = vadd.f32 %v2146, %v3516
    %v3592 = vadd.f32 %v2148, %v3518
    %v3593 = vadd.f32 %v2217, %v3587
    %v3594 = vadd.f32 %v2219, %v3589
    %v3595 = vxor.u32 %v3591, 2147483648
    %v3596 = vxor.u32 %v3592, 2147483648
    %v3597 = vxor.u32 %v3593, 2147483648
    %v3598 = vmul.f32 %v3595, 1.442695
    %v3599 = vpow.pop %v3598
    %v3600 = vmul.f32 %v3596, 1.442695
    %v3601 = vpow.pop %v3600
    %v3602 = vmul.f32 %v3597, 1.442695
    %v3603 = vpow.pop %v3602
    %v3604 = vadd.f32 %v3599, 1.0
    %v3605 = vadd.f32 %v3601, 1.0
    %v3606 = vadd.f32 %v3603, 1.0
    %v3607 = vrcp.pop %v3604
    %v3608 = vmul.f32 1.0, %v3607
    %v3609 = vrcp.pop %v3605
    %v3610 = vmul.f32 1.0, %v3609
    %v3611 = vrcp.pop %v3606
    %v3612 = vmul.f32 1.0, %v3611
    %v3613 = vtanh.pop %v3594
    %v3614 = vmul.f32 %v3610, %v3440
    %v3615 = vmul.f32 %v3608, %v3613
    %v3616 = vadd.f32 %v3614, %v3615
    %v3617 = vtanh.pop %v3616
    %v3618 = vmul.f32 %v3612, %v3617
    %3620 = vrot.lane.b32.xlu0 %v3618, 42
    %v3621 = vpop.permute.xlu0 %3620
    %vm3623 = vcmask 386384
    %3624 = vst.msk [vmem:[%s8] sm:$0x3] %vm3623, %v3621
    // Predicated region
    $region46: #{lstm_autoencoder.2} parent=1 // pred_check
      _
    $region47: #{lstm_autoencoder.2} parent=1 // pred_check_branch
      %3626 = sbr.rel (0) target = $region49
    $region48: #{lstm_autoencoder.2} parent=1 // pred_region
      _
    $region49: #{lstm_autoencoder.2} parent=1 // pred_fallthru
      _
    // Predicated region
    $region50: #{lstm_autoencoder.2} parent=1 // pred_check
      _
    $region51: #{lstm_autoencoder.2} parent=1 // pred_check_branch
      %3628 = sbr.rel (0) target = $region53
    $region52: #{lstm_autoencoder.2} parent=1 // pred_region
      _
    $region53: #{lstm_autoencoder.2} parent=1 // pred_fallthru
      _
    %3629 = vsyncpa [#allocation8], 1
    %3630 = vsyncpa [#allocation10], 1
    %3631 = vsyncpa [#allocation13], 1

</llo_original>
